<compile_context>
chip_gen: v5e
topology: v5e:2x2
jax: 0.10.0
libtpu: 0.0.40
codegen_flags: <defaults>
</compile_context>

<pallas_src>
import math

import jax
import jax.numpy as jnp
from jax import lax
from jax.experimental import pallas as pl
from jax.experimental.pallas import tpu as pltpu


# ---------------------------------------------------------------------------
# Kernel 1: style modulation + per-output-row normalization for EVERY layer,
# in a single pallas_call.  Outputs are written already transposed to
# (in, out) so the fused MLP kernel runs plain row-major MXU matmuls.
#   s_ref   : (1, sdim)         style (lane-dense, broadcast over out rows)
#   w_ref_i : (out_i, in_i)     PyTorch-layout weight  (in_i == sdim)
#   o_ref_i : (in_i, out_i)     normalized, transposed weight
# ---------------------------------------------------------------------------
def _make_modulate_kernel(num_layers):
    def kernel(s_ref, *refs):
        w_refs = refs[:num_layers]
        o_refs = refs[num_layers:]
        style = s_ref[...]                                        # (1, sdim)
        for w_ref, o_ref in zip(w_refs, o_refs):
            wm = w_ref[...] * style                               # (out, in)
            inv = lax.rsqrt(jnp.sum(wm * wm, axis=-1, keepdims=True) + 1e-5)
            # rsqrt -> EUP slot; mul -> VPU; transpose -> XLU (hides under store)
            o_ref[...] = jnp.transpose(wm * inv).astype(o_ref.dtype)
    return kernel


# ---------------------------------------------------------------------------
# Kernel 2: fused MLP over one tile of rows.  All layers' matmuls + ReLUs in
# one body; weights are VMEM-resident (constant index maps); intermediates
# never round-trip HBM.
#   x_ref   : (TB, cin)
#   w_ref_i : (in_i, out_i)   normalized weights from kernel 1
#   o_ref   : (TB, cout)
# ---------------------------------------------------------------------------
def _make_mlp_kernel(num_layers):
    def kernel(x_ref, *refs):
        w_refs = refs[:num_layers]
        o_ref = refs[num_layers]
        h = x_ref[...]
        for li in range(num_layers):
            h = jnp.dot(h, w_refs[li][...], preferred_element_type=jnp.float32)
            if li < num_layers - 1:
                h = jnp.maximum(h, 0.0)
        o_ref[...] = h.astype(o_ref.dtype)
    return kernel


def _choose_row_tile(rows, max_tile=1024):
    """Largest sublane-aligned row tile <= max_tile, but >=2 grid steps when
    possible so both v7x TensorCores receive 'parallel' work."""
    tile = min(max_tile, max(1, -(-rows // 2)))
    return max(8, -(-tile // 8) * 8)


def mlp_mod_forward(weights, x, style, *, max_row_tile=1024):
    """MLP_Mod forward.

    weights: list of (out_features, in_features) arrays (PyTorch layout),
             layer 0 first.  bias=False (as in MLP_Mod).
    x:       (..., cin) float32
    style:   (style_dim,) or (..., style_dim); only the first row is used,
             exactly as in Linear_Mod.forward.
    """
    if style.ndim > 1:
        style = style.reshape(-1, style.shape[-1])[0]
    sdim = style.shape[0]
    num_layers = len(weights)
    for w in weights:
        # Required by the PyTorch broadcast `weight * style.unsqueeze(0)`.
        assert w.shape[1] == sdim, "style dim must equal every layer's in_features"

    s2 = style.reshape(1, sdim).astype(jnp.float32)
    w32 = [w.astype(jnp.float32) for w in weights]

    # --- Kernel 1: one dispatch modulates/normalizes/transposes all layers ---
    w_norm_t = pl.pallas_call(
        _make_modulate_kernel(num_layers),
        out_shape=tuple(
            jax.ShapeDtypeStruct((w.shape[1], w.shape[0]), jnp.float32)
            for w in weights),
        grid=(1,),
        in_specs=[pl.BlockSpec((1, sdim), lambda i: (0, 0))]
                 + [pl.BlockSpec(w.shape, lambda i: (0, 0)) for w in weights],
        out_specs=tuple(
            pl.BlockSpec((w.shape[1], w.shape[0]), lambda i: (0, 0))
            for w in weights),
        compiler_params=pltpu.CompilerParams(
            dimension_semantics=("arbitrary",),
            vmem_limit_bytes=32 * 1024 * 1024),
    )(s2, *w32)

    # --- Kernel 2: fused matmul chain over row tiles ---
    lead = x.shape[:-1]
    cin = x.shape[-1]
    cout = weights[-1].shape[0]
    rows = int(math.prod(lead)) if lead else 1
    x2 = x.reshape(rows, cin).astype(jnp.float32)

    row_tile = _choose_row_tile(rows, max_row_tile)
    grid = pl.cdiv(rows, row_tile)

    # Weight specs have constant index maps -> blocks stay resident in VMEM.
    in_specs = [pl.BlockSpec((row_tile, cin), lambda i: (i, 0))]
    in_specs += [pl.BlockSpec(wt.shape, lambda i: (0, 0)) for wt in w_norm_t]

    out2 = pl.pallas_call(
        _make_mlp_kernel(num_layers),
        out_shape=jax.ShapeDtypeStruct((rows, cout), x.dtype),
        grid=(grid,),
        in_specs=in_specs,
        out_specs=pl.BlockSpec((row_tile, cout), lambda i: (i, 0)),
        compiler_params=pltpu.CompilerParams(
            dimension_semantics=("parallel",),
            vmem_limit_bytes=32 * 1024 * 1024),
    )(x2, *w_norm_t)

    return out2.reshape(lead + (cout,))


# ---------------------------------------------------------------------------
# Parameter init (MLP_Mod topology: cin -> nf -> ... -> nf -> cout, no bias)
# ---------------------------------------------------------------------------
def init_params(key, cin, cout, num_layers, nf=256):
    if num_layers == 1:
        dims = [(cout, cin)]
    else:
        dims = [(nf, cin)] + [(nf, nf)] * (num_layers - 2) + [(cout, nf)]
    weights = []
    for (o, i) in dims:
        key, kw = jax.random.split(key)
        bound = 1.0 / math.sqrt(i)
        weights.append(jax.random.uniform(kw, (o, i), jnp.float32, -bound, bound))
    return weights


# ---------------------------------------------------------------------------
# Pure-JAX reference (mirrors the PyTorch math exactly)
# ---------------------------------------------------------------------------
def _linear_mod_ref(x, w, style):
    if style.ndim > 1:
        style = style.reshape(-1, style.shape[-1])[0]
    wm = w * style[None, :]
    dec = jnp.sqrt(jnp.sum(wm * wm, axis=-1, keepdims=True) + 1e-5)
    wn = wm / dec
    return x @ wn.T


def mlp_mod_ref(weights, x, style):
    h = x
    n = len(weights)
    for i, w in enumerate(weights):
        h = _linear_mod_ref(h, w, style)
        if i < n - 1:
            h = jnp.maximum(h, 0.0)
    return h


if __name__ == "__main__":
    # Module-consistent small config: cin = nf = 256 (style dim must match
    # every layer's in_features, as the PyTorch broadcast requires),
    # cout = 128, num_layers = 3, x = (batch=2, seq=64, cin).
    cin, cout, num_layers, nf = 256, 128, 3, 256
    B, S = 2, 64

    key = jax.random.PRNGKey(0)
    key, kx, ks = jax.random.split(key, 3)
    x = jax.random.normal(kx, (B, S, cin), jnp.float32)
    style = jax.random.normal(ks, (B, nf), jnp.float32)  # 2-D: first row is used

    weights = init_params(key, cin, cout, num_layers, nf=nf)

    fwd = jax.jit(lambda ws, xx, ss: mlp_mod_forward(ws, xx, ss))
    out = jax.block_until_ready(fwd(weights, x, style))

    assert out.shape == (B, S, cout), out.shape

    ref = jax.block_until_ready(mlp_mod_ref(weights, x, style))
    max_err = float(jnp.max(jnp.abs(out - ref)))
    assert jnp.allclose(out, ref, atol=1e-3, rtol=1e-3), max_err

    print("KERNEL_OK")
</pallas_src>

<mosaic_0001>
module attributes {stable_mosaic.version = 11 : i64} {
  func.func @kernel(%arg0: i32, %arg1: memref<64x256xf32, #tpu.memory_space<vmem>>, %arg2: memref<256x256xf32, #tpu.memory_space<vmem>>, %arg3: memref<256x256xf32, #tpu.memory_space<vmem>>, %arg4: memref<256x128xf32, #tpu.memory_space<vmem>>, %arg5: memref<64x128xf32, #tpu.memory_space<vmem>>) attributes {dimension_semantics = [#tpu.dimension_semantics<parallel>], iteration_bounds = array<i64: 2>, scalar_prefetch = 0 : i64, scratch_operands = 0 : i64, tpu.core_type = #tpu.core_type<tc>, window_params = [{transform_indices = @transform_0, window_bounds = array<i64: 64, 256>}, {pipeline_mode = #tpu.pipeline_mode<synchronous>, transform_indices = @transform_1, window_bounds = array<i64: 256, 256>}, {pipeline_mode = #tpu.pipeline_mode<synchronous>, transform_indices = @transform_2, window_bounds = array<i64: 256, 256>}, {pipeline_mode = #tpu.pipeline_mode<synchronous>, transform_indices = @transform_3, window_bounds = array<i64: 256, 128>}, {transform_indices = @transform_4, window_bounds = array<i64: 64, 128>}]} {
    %c0 = arith.constant 0 : index
    %c0_0 = arith.constant 0 : index
    %0 = vector.load %arg1[%c0, %c0_0] : memref<64x256xf32, #tpu.memory_space<vmem>>, vector<64x256xf32>
    %c0_1 = arith.constant 0 : index
    %c0_2 = arith.constant 0 : index
    %1 = vector.load %arg2[%c0_1, %c0_2] : memref<256x256xf32, #tpu.memory_space<vmem>>, vector<256x256xf32>
    %cst = arith.constant dense<0.000000e+00> : vector<64x256xf32>
    %2 = tpu.matmul %0, %1, %cst {dimension_numbers = #tpu.dot_dimension_numbers<[1], [0], [0], [1], [0, 0, 1, 1], [], []>} : vector<64x256xf32>, vector<256x256xf32>, vector<64x256xf32> -> vector<64x256xf32>
    %cst_3 = arith.constant 0.000000e+00 : f32
    %3 = vector.broadcast %cst_3 : f32 to vector<64x256xf32>
    %4 = arith.maximumf %2, %3 : vector<64x256xf32>
    %c0_4 = arith.constant 0 : index
    %c0_5 = arith.constant 0 : index
    %5 = vector.load %arg3[%c0_4, %c0_5] : memref<256x256xf32, #tpu.memory_space<vmem>>, vector<256x256xf32>
    %cst_6 = arith.constant dense<0.000000e+00> : vector<64x256xf32>
    %6 = tpu.matmul %4, %5, %cst_6 {dimension_numbers = #tpu.dot_dimension_numbers<[1], [0], [0], [1], [0, 0, 1, 1], [], []>} : vector<64x256xf32>, vector<256x256xf32>, vector<64x256xf32> -> vector<64x256xf32>
    %cst_7 = arith.constant 0.000000e+00 : f32
    %7 = vector.broadcast %cst_7 : f32 to vector<64x256xf32>
    %8 = arith.maximumf %6, %7 : vector<64x256xf32>
    %c0_8 = arith.constant 0 : index
    %c0_9 = arith.constant 0 : index
    %9 = vector.load %arg4[%c0_8, %c0_9] : memref<256x128xf32, #tpu.memory_space<vmem>>, vector<256x128xf32>
    %cst_10 = arith.constant dense<0.000000e+00> : vector<64x128xf32>
    %10 = tpu.matmul %8, %9, %cst_10 {dimension_numbers = #tpu.dot_dimension_numbers<[1], [0], [0], [1], [0, 0, 1, 1], [], []>} : vector<64x256xf32>, vector<256x128xf32>, vector<64x128xf32> -> vector<64x128xf32>
    %c0_11 = arith.constant 0 : index
    %c0_12 = arith.constant 0 : index
    %11 = vector.load %arg5[%c0_11, %c0_12] : memref<64x128xf32, #tpu.memory_space<vmem>>, vector<64x128xf32>
    tpu.vector_store %arg5[%c0_11, %c0_12], %10 {strides = array<i32>} : memref<64x128xf32, #tpu.memory_space<vmem>>, vector<64x128xf32>,
    return
  }
  func.func @transform_0(%arg0: i32) -> (i32, i32) {
    %c0_i32 = arith.constant 0 : i32
    %c0_i32_0 = arith.constant 0 : i32
    return %arg0, %c0_i32 : i32, i32
  }
  func.func @transform_1(%arg0: i32) -> (i32, i32) {
    %c0_i32 = arith.constant 0 : i32
    %c0_i32_0 = arith.constant 0 : i32
    %c0_i32_1 = arith.constant 0 : i32
    return %c0_i32, %c0_i32_0 : i32, i32
  }
  func.func @transform_2(%arg0: i32) -> (i32, i32) {
    %c0_i32 = arith.constant 0 : i32
    %c0_i32_0 = arith.constant 0 : i32
    %c0_i32_1 = arith.constant 0 : i32
    return %c0_i32, %c0_i32_0 : i32, i32
  }
  func.func @transform_3(%arg0: i32) -> (i32, i32) {
    %c0_i32 = arith.constant 0 : i32
    %c0_i32_0 = arith.constant 0 : i32
    %c0_i32_1 = arith.constant 0 : i32
    return %c0_i32, %c0_i32_0 : i32, i32
  }
  func.func @transform_4(%arg0: i32) -> (i32, i32) {
    %c0_i32 = arith.constant 0 : i32
    %c0_i32_0 = arith.constant 0 : i32
    return %arg0, %c0_i32 : i32, i32
  }
}

module attributes {stable_mosaic.version = 11 : i64} {
  func.func @kernel(%arg0: i32, %arg1: memref<1x256xf32, #tpu.memory_space<vmem>>, %arg2: memref<256x256xf32, #tpu.memory_space<vmem>>, %arg3: memref<256x256xf32, #tpu.memory_space<vmem>>, %arg4: memref<128x256xf32, #tpu.memory_space<vmem>>, %arg5: memref<256x256xf32, #tpu.memory_space<vmem>>, %arg6: memref<256x256xf32, #tpu.memory_space<vmem>>, %arg7: memref<256x128xf32, #tpu.memory_space<vmem>>) attributes {dimension_semantics = [#tpu.dimension_semantics<arbitrary>], iteration_bounds = array<i64: 1>, scalar_prefetch = 0 : i64, scratch_operands = 0 : i64, tpu.core_type = #tpu.core_type<tc>, window_params = [{pipeline_mode = #tpu.pipeline_mode<synchronous>, transform_indices = @transform_0, window_bounds = array<i64: 1, 256>}, {pipeline_mode = #tpu.pipeline_mode<synchronous>, transform_indices = @transform_1, window_bounds = array<i64: 256, 256>}, {pipeline_mode = #tpu.pipeline_mode<synchronous>, transform_indices = @transform_2, window_bounds = array<i64: 256, 256>}, {pipeline_mode = #tpu.pipeline_mode<synchronous>, transform_indices = @transform_3, window_bounds = array<i64: 128, 256>}, {pipeline_mode = #tpu.pipeline_mode<synchronous>, transform_indices = @transform_4, window_bounds = array<i64: 256, 256>}, {pipeline_mode = #tpu.pipeline_mode<synchronous>, transform_indices = @transform_5, window_bounds = array<i64: 256, 256>}, {pipeline_mode = #tpu.pipeline_mode<synchronous>, transform_indices = @transform_6, window_bounds = array<i64: 256, 128>}]} {
    %c0 = arith.constant 0 : index
    %c0_0 = arith.constant 0 : index
    %0 = vector.load %arg1[%c0, %c0_0] : memref<1x256xf32, #tpu.memory_space<vmem>>, vector<1x256xf32>
    %c0_1 = arith.constant 0 : index
    %c0_2 = arith.constant 0 : index
    %1 = vector.load %arg2[%c0_1, %c0_2] : memref<256x256xf32, #tpu.memory_space<vmem>>, vector<256x256xf32>
    %2 = vector.broadcast %0 : vector<1x256xf32> to vector<256x256xf32>
    %3 = arith.mulf %1, %2 : vector<256x256xf32>
    %4 = arith.mulf %3, %3 : vector<256x256xf32>
    %cst = arith.constant dense<0.000000e+00> : vector<256xf32>
    %5 = vector.multi_reduction <add>, %4, %cst [1] : vector<256x256xf32> to vector<256xf32>
    %6 = vector.shape_cast %5 : vector<256xf32> to vector<256x1xf32>
    %cst_3 = arith.constant 9.99999974E-6 : f32
    %7 = vector.broadcast %cst_3 : f32 to vector<256x1xf32>
    %8 = arith.addf %6, %7 : vector<256x1xf32>
    %9 = math.rsqrt %8 : vector<256x1xf32>
    %10 = vector.broadcast %9 : vector<256x1xf32> to vector<256x256xf32>
    %11 = arith.mulf %3, %10 : vector<256x256xf32>
    %12 = tpu.transpose %11, [1, 0] : vector<256x256xf32> -> vector<256x256xf32>
    %c0_4 = arith.constant 0 : index
    %c0_5 = arith.constant 0 : index
    %13 = vector.load %arg5[%c0_4, %c0_5] : memref<256x256xf32, #tpu.memory_space<vmem>>, vector<256x256xf32>
    tpu.vector_store %arg5[%c0_4, %c0_5], %12 {strides = array<i32>} : memref<256x256xf32, #tpu.memory_space<vmem>>, vector<256x256xf32>,
    %c0_6 = arith.constant 0 : index
    %c0_7 = arith.constant 0 : index
    %14 = vector.load %arg3[%c0_6, %c0_7] : memref<256x256xf32, #tpu.memory_space<vmem>>, vector<256x256xf32>
    %15 = vector.broadcast %0 : vector<1x256xf32> to vector<256x256xf32>
    %16 = arith.mulf %14, %15 : vector<256x256xf32>
    %17 = arith.mulf %16, %16 : vector<256x256xf32>
    %cst_8 = arith.constant dense<0.000000e+00> : vector<256xf32>
    %18 = vector.multi_reduction <add>, %17, %cst_8 [1] : vector<256x256xf32> to vector<256xf32>
    %19 = vector.shape_cast %18 : vector<256xf32> to vector<256x1xf32>
    %cst_9 = arith.constant 9.99999974E-6 : f32
    %20 = vector.broadcast %cst_9 : f32 to vector<256x1xf32>
    %21 = arith.addf %19, %20 : vector<256x1xf32>
    %22 = math.rsqrt %21 : vector<256x1xf32>
    %23 = vector.broadcast %22 : vector<256x1xf32> to vector<256x256xf32>
    %24 = arith.mulf %16, %23 : vector<256x256xf32>
    %25 = tpu.transpose %24, [1, 0] : vector<256x256xf32> -> vector<256x256xf32>
    %c0_10 = arith.constant 0 : index
    %c0_11 = arith.constant 0 : index
    %26 = vector.load %arg6[%c0_10, %c0_11] : memref<256x256xf32, #tpu.memory_space<vmem>>, vector<256x256xf32>
    tpu.vector_store %arg6[%c0_10, %c0_11], %25 {strides = array<i32>} : memref<256x256xf32, #tpu.memory_space<vmem>>, vector<256x256xf32>,
    %c0_12 = arith.constant 0 : index
    %c0_13 = arith.constant 0 : index
    %27 = vector.load %arg4[%c0_12, %c0_13] : memref<128x256xf32, #tpu.memory_space<vmem>>, vector<128x256xf32>
    %28 = vector.broadcast %0 : vector<1x256xf32> to vector<128x256xf32>
    %29 = arith.mulf %27, %28 : vector<128x256xf32>
    %30 = arith.mulf %29, %29 : vector<128x256xf32>
    %cst_14 = arith.constant dense<0.000000e+00> : vector<128xf32>
    %31 = vector.multi_reduction <add>, %30, %cst_14 [1] : vector<128x256xf32> to vector<128xf32>
    %32 = vector.shape_cast %31 : vector<128xf32> to vector<128x1xf32>
    %cst_15 = arith.constant 9.99999974E-6 : f32
    %33 = vector.broadcast %cst_15 : f32 to vector<128x1xf32>
    %34 = arith.addf %32, %33 : vector<128x1xf32>
    %35 = math.rsqrt %34 : vector<128x1xf32>
    %36 = vector.broadcast %35 : vector<128x1xf32> to vector<128x256xf32>
    %37 = arith.mulf %29, %36 : vector<128x256xf32>
    %38 = tpu.transpose %37, [1, 0] : vector<128x256xf32> -> vector<256x128xf32>
    %c0_16 = arith.constant 0 : index
    %c0_17 = arith.constant 0 : index
    %39 = vector.load %arg7[%c0_16, %c0_17] : memref<256x128xf32, #tpu.memory_space<vmem>>, vector<256x128xf32>
    tpu.vector_store %arg7[%c0_16, %c0_17], %38 {strides = array<i32>} : memref<256x128xf32, #tpu.memory_space<vmem>>, vector<256x128xf32>,
    return
  }
  func.func @transform_0(%arg0: i32) -> (i32, i32) {
    %c0_i32 = arith.constant 0 : i32
    %c0_i32_0 = arith.constant 0 : i32
    %c0_i32_1 = arith.constant 0 : i32
    return %c0_i32, %c0_i32_0 : i32, i32
  }
  func.func @transform_1(%arg0: i32) -> (i32, i32) {
    %c0_i32 = arith.constant 0 : i32
    %c0_i32_0 = arith.constant 0 : i32
    %c0_i32_1 = arith.constant 0 : i32
    return %c0_i32, %c0_i32_0 : i32, i32
  }
  func.func @transform_2(%arg0: i32) -> (i32, i32) {
    %c0_i32 = arith.constant 0 : i32
    %c0_i32_0 = arith.constant 0 : i32
    %c0_i32_1 = arith.constant 0 : i32
    return %c0_i32, %c0_i32_0 : i32, i32
  }
  func.func @transform_3(%arg0: i32) -> (i32, i32) {
    %c0_i32 = arith.constant 0 : i32
    %c0_i32_0 = arith.constant 0 : i32
    %c0_i32_1 = arith.constant 0 : i32
    return %c0_i32, %c0_i32_0 : i32, i32
  }
  func.func @transform_4(%arg0: i32) -> (i32, i32) {
    %c0_i32 = arith.constant 0 : i32
    %c0_i32_0 = arith.constant 0 : i32
    %c0_i32_1 = arith.constant 0 : i32
    return %c0_i32, %c0_i32_0 : i32, i32
  }
  func.func @transform_5(%arg0: i32) -> (i32, i32) {
    %c0_i32 = arith.constant 0 : i32
    %c0_i32_0 = arith.constant 0 : i32
    %c0_i32_1 = arith.constant 0 : i32
    return %c0_i32, %c0_i32_0 : i32, i32
  }
  func.func @transform_6(%arg0: i32) -> (i32, i32) {
    %c0_i32 = arith.constant 0 : i32
    %c0_i32_0 = arith.constant 0 : i32
    %c0_i32_1 = arith.constant 0 : i32
    return %c0_i32, %c0_i32_0 : i32, i32
  }
}

</mosaic_0001>

<llo_original>
// kernel: _lambda_.3
$region0: #{_lambda_.3}
  #allocation0 [shape = 'u32[]', space=smem, size = 0x4, offset = 0x4, fixed_abs, tag = 'smem constant byte address 0x4 - core index']
  #allocation1 [shape = 'u32[72,128]{1,0:T(1,128)}', space=vmem, size = 0x9000, scoped, tag = 'internal scratch']
  %s0 = inlined_call_operand.hbm [shape: f32[128,256], index: 0, kind: input, shape index: {}]
  %s1 = inlined_call_operand.vmem [shape: f32[256,256], index: 1, kind: input, shape index: {}]
  %s2 = inlined_call_operand.vmem [shape: f32[256,256], index: 2, kind: input, shape index: {}]
  %s3 = inlined_call_operand.vmem [shape: f32[256,128], index: 3, kind: input, shape index: {}]
  %s4 = inlined_call_operand.hbm [shape: f32[128,128], index: 4, kind: output, shape index: {}]
  %s5 = sld [smem:[#allocation0]]
  $region53: #{_lambda_.3} parent=0
    _
  %s7 = ssub.s32 1, %s5
  %s8 = scalar_select 0, %s7, %s5
  $region1: #{_lambda_.3} parent=0
    #allocation2 [shape = 'u8[131072]{0}', space=vmem, size = 0x20000, scoped, tag = 'input window, operand 0']
    #allocation3 [shape = 's32[2]{0}', space=sflag, size = 0x8, scoped, tag = 'scoped memory for _lambda_.3']
    #allocation4 [shape = 's32[2]{0}', space=sflag, size = 0x8, scoped, tag = 'scoped memory for _lambda_.3']
    #allocation5 [shape = 'u8[65536]{0}', space=vmem, size = 0x10000, scoped, tag = 'output window, operand 0']
    %9 = vsyncpa [#allocation3], 0
    %s10 = scalar_lea.sflag [#allocation3], 1
    %11 = vsyncpa %s10, 0
    %12 = vsyncpa [#allocation4], 0
    %s13 = scalar_lea.sflag [#allocation4], 1
    %14 = vsyncpa %s13, 0
    loop: start=0, step=1, limit=4
    $region2: #{_lambda_.3} parent=1 // loop_pre_header
      _
    $region3: #{_lambda_.3} parent=1 // loop_header
      %s16 = sphi 0, %s20
      %p17 = scmp.ge.s32.totalorder %s16, 4
      %s26 = sphi 0, %s28
      %s29 = sphi 0, %s26
      %s30 = sphi 0, %s29
      %s46 = sphi 0, %s30
      %s50 = sphi 0, %s50
      %s52 = sphi 0, %s50
      %s53 = sphi 0, %s52
      %s67 = sphi 0, %s53
      %s71 = sphi 0, %s71
      %s73 = sphi 0, %s71
      %s74 = sphi 0, %s73
      %s88 = sphi 0, %s74
      %s92 = sphi 0, %s92
      %s94 = sphi 0, %s92
      %s95 = sphi 0, %s94
      %s109 = sphi 0, %s95
      %s115 = sphi 0, %s117
      %s118 = sphi 0, %s115
      %s119 = sphi 0, %s118
      %s135 = sphi 0, %s119
    $region4: #{_lambda_.3} parent=1 // loop_header_branch
      %19 = sbr.rel (%p17) target = $region8
    $region5: #{_lambda_.3} parent=1 // loop_body
      %s21 = ssub.s32 %s16, 1
      %s22 = ssub.s32 %s16, 2
      %s23 = sadd.s32 %s16, 1
      %s24 = ssub.s32 %s16, %s23
      %p25 = scmp.eq.s32.totalorder %s24, 0
      %s27 = sadd.s32 %s26, 1
      %s28 = scalar_select %p25, %s26, %s27
      %p31 = pneg %p25
      %p32 = scmp.eq.s32.totalorder %s16, 1
      %p33 = por %p31, %p32
      %p34 = scmp.ne.s32.totalorder %s26, %s29
      %p35 = scmp.eq.s32.totalorder %s16, 0
      %p36 = por %p34, %p35
      %p37 = scmp.ne.s32.totalorder %s26, %s29
      %p38 = scmp.eq.s32.totalorder %s21, 1
      %p39 = por %p37, %p38
      %p40 = scmp.ne.s32.totalorder %s29, %s30
      %p41 = scmp.eq.s32.totalorder %s21, 0
      %p42 = por %p40, %p41
      %p43 = scmp.ne.s32.totalorder %s29, %s30
      %p44 = scmp.eq.s32.totalorder %s22, 1
      %p45 = por %p43, %p44
      %p47 = scmp.ne.s32.totalorder %s30, %s46
      %p48 = scmp.eq.s32.totalorder %s22, 0
      %p49 = por %p47, %p48
      %s51 = sadd.s32 %s50, 1
      %p54 = scmp.eq.s32.totalorder %s16, 1
      %p55 = scmp.ne.s32.totalorder %s50, %s52
      %p56 = scmp.eq.s32.totalorder %s16, 0
      %p57 = por %p55, %p56
      %p58 = scmp.ne.s32.totalorder %s50, %s52
      %p59 = scmp.eq.s32.totalorder %s21, 1
      %p60 = por %p58, %p59
      %p61 = scmp.ne.s32.totalorder %s52, %s53
      %p62 = scmp.eq.s32.totalorder %s21, 0
      %p63 = por %p61, %p62
      %p64 = scmp.ne.s32.totalorder %s52, %s53
      %p65 = scmp.eq.s32.totalorder %s22, 1
      %p66 = por %p64, %p65
      %p68 = scmp.ne.s32.totalorder %s53, %s67
      %p69 = scmp.eq.s32.totalorder %s22, 0
      %p70 = por %p68, %p69
      %s72 = sadd.s32 %s71, 1
      %p75 = scmp.eq.s32.totalorder %s16, 1
      %p76 = scmp.ne.s32.totalorder %s71, %s73
      %p77 = scmp.eq.s32.totalorder %s16, 0
      %p78 = por %p76, %p77
      %p79 = scmp.ne.s32.totalorder %s71, %s73
      %p80 = scmp.eq.s32.totalorder %s21, 1
      %p81 = por %p79, %p80
      %p82 = scmp.ne.s32.totalorder %s73, %s74
      %p83 = scmp.eq.s32.totalorder %s21, 0
      %p84 = por %p82, %p83
      %p85 = scmp.ne.s32.totalorder %s73, %s74
      %p86 = scmp.eq.s32.totalorder %s22, 1
      %p87 = por %p85, %p86
      %p89 = scmp.ne.s32.totalorder %s74, %s88
      %p90 = scmp.eq.s32.totalorder %s22, 0
      %p91 = por %p89, %p90
      %s93 = sadd.s32 %s92, 1
      %p96 = scmp.eq.s32.totalorder %s16, 1
      %p97 = scmp.ne.s32.totalorder %s92, %s94
      %p98 = scmp.eq.s32.totalorder %s16, 0
      %p99 = por %p97, %p98
      %p100 = scmp.ne.s32.totalorder %s92, %s94
      %p101 = scmp.eq.s32.totalorder %s21, 1
      %p102 = por %p100, %p101
      %p103 = scmp.ne.s32.totalorder %s94, %s95
      %p104 = scmp.eq.s32.totalorder %s21, 0
      %p105 = por %p103, %p104
      %p106 = scmp.ne.s32.totalorder %s94, %s95
      %p107 = scmp.eq.s32.totalorder %s22, 1
      %p108 = por %p106, %p107
      %p110 = scmp.ne.s32.totalorder %s95, %s109
      %p111 = scmp.eq.s32.totalorder %s22, 0
      %p112 = por %p110, %p111
      %s113 = ssub.s32 %s16, %s23
      %p114 = scmp.eq.s32.totalorder %s113, 0
      %s116 = sadd.s32 %s115, 1
      %s117 = scalar_select %p114, %s115, %s116
      %p120 = pneg %p114
      %p121 = scmp.eq.s32.totalorder %s16, 1
      %p122 = por %p120, %p121
      %p123 = scmp.ne.s32.totalorder %s115, %s118
      %p124 = scmp.eq.s32.totalorder %s16, 0
      %p125 = por %p123, %p124
      %p126 = scmp.ne.s32.totalorder %s115, %s118
      %p127 = scmp.eq.s32.totalorder %s21, 1
      %p128 = por %p126, %p127
      %p129 = scmp.ne.s32.totalorder %s118, %s119
      %p130 = scmp.eq.s32.totalorder %s21, 0
      %p131 = por %p129, %p130
      %p132 = scmp.ne.s32.totalorder %s118, %s119
      %p133 = scmp.eq.s32.totalorder %s22, 1
      %p134 = por %p132, %p133
      %p136 = scmp.ne.s32.totalorder %s119, %s135
      %p137 = scmp.eq.s32.totalorder %s22, 0
      %p138 = por %p136, %p137
      %p139 = scmp.le.s32.totalorder 1, %s16
      %p140 = scmp.lt.s32.totalorder %s16, 3
      %p141 = pnand %p139, %p140
      %p142 = pneg %p141
      // Predicated region
      $region9: #{_lambda_.3} parent=5 // pred_check
        _
      $region10: #{_lambda_.3} parent=5 // pred_check_branch
        %144 = sbr.rel (%p141) target = $region12
      $region11: #{_lambda_.3} parent=5 // pred_region
        %s145 = ssub.s32 %s16, 1
        // Predicated region
        $region13: #{_lambda_.3} parent=11 // pred_check
          %p146 = pneg %p63
        $region14: #{_lambda_.3} parent=11 // pred_check_branch
          %148 = sbr.rel (%p146) target = $region16
        $region15: #{_lambda_.3} parent=11 // pred_region
          _
        $region16: #{_lambda_.3} parent=11 // pred_fallthru
          _
        // Predicated region
        $region17: #{_lambda_.3} parent=11 // pred_check
          %p149 = pneg %p84
        $region18: #{_lambda_.3} parent=11 // pred_check_branch
          %151 = sbr.rel (%p149) target = $region20
        $region19: #{_lambda_.3} parent=11 // pred_region
          _
        $region20: #{_lambda_.3} parent=11 // pred_fallthru
          _
        // Predicated region
        $region21: #{_lambda_.3} parent=11 // pred_check
          %p152 = pneg %p105
        $region22: #{_lambda_.3} parent=11 // pred_check_branch
          %154 = sbr.rel (%p152) target = $region24
        $region23: #{_lambda_.3} parent=11 // pred_region
          _
        $region24: #{_lambda_.3} parent=11 // pred_fallthru
          _
      $region12: #{_lambda_.3} parent=5 // pred_fallthru
        _
      %p155 = scmp.lt.s32.totalorder %s16, 2
      // Predicated region
      $region25: #{_lambda_.3} parent=5 // pred_check
        %p156 = pneg %p155
      $region26: #{_lambda_.3} parent=5 // pred_check_branch
        %158 = sbr.rel (%p156) target = $region28
      $region27: #{_lambda_.3} parent=5 // pred_region
        // Predicated region
        $region29: #{_lambda_.3} parent=27 // pred_check
          %p159 = pneg %p36
        $region30: #{_lambda_.3} parent=27 // pred_check_branch
          %161 = sbr.rel (%p159) target = $region32
        $region31: #{_lambda_.3} parent=27 // pred_region
          %s162 = sand.u32 %s26, 1
          %s163 = scalar_lea.sflag [#allocation3], %s162
          %s164 = sand.u32 %s26, 1
          %s165 = smul.addr %s164, 128
          %s166 = scalar_lea.vmem [#allocation2], %s165
          %s167 = smul.u32 8, %s16
          %169 = vsyncadd %s163, 0
          %s170 = smul.addr %s167, 2
          %s171 = smul.addr %s170, 8
          %s172 = scalar_lea.hbm %s0, %s171
          %s173 = sshll.u32 %s172, 4
          %s174 = int_to_ptr.hbm [resolvable:$true] %s173
          %s175 = sshll.u32 %s166, 4
          %s176 = int_to_ptr.vmem [resolvable:$true] %s175
          %181 = dma.hbm_to_vmem [thread:$0]  %s174, 2048, %s176, %s163, 256, 256, 16
        $region32: #{_lambda_.3} parent=27 // pred_fallthru
          _
      $region28: #{_lambda_.3} parent=5 // pred_fallthru
        _
      %p182 = scmp.le.s32.totalorder 1, %s16
      %p183 = scmp.lt.s32.totalorder %s16, 3
      %p184 = pnand %p182, %p183
      %p185 = pneg %p184
      // Predicated region
      $region33: #{_lambda_.3} parent=5 // pred_check
        _
      $region34: #{_lambda_.3} parent=5 // pred_check_branch
        %187 = sbr.rel (%p184) target = $region36
      $region35: #{_lambda_.3} parent=5 // pred_region
        %s188 = ssub.s32 %s16, 1
        %s189 = sand.u32 %s29, 1
        %s190 = scalar_lea.sflag [#allocation3], %s189
        %s191 = sand.u32 %s29, 1
        %s192 = smul.addr %s191, 128
        %s193 = scalar_lea.vmem [#allocation2], %s192
        // Predicated region
        $region37: #{_lambda_.3} parent=35 // pred_check
          %p194 = pneg %p42
        $region38: #{_lambda_.3} parent=35 // pred_check_branch
          %196 = sbr.rel (%p194) target = $region40
        $region39: #{_lambda_.3} parent=35 // pred_region
          %198 = dma.done %s190, 2048
        $region40: #{_lambda_.3} parent=35 // pred_fallthru
          _
        %s199 = sand.u32 %s29, 1
        %s200 = scalar_lea.sflag [#allocation3], %s199
        %s201 = sand.u32 %s29, 1
        %s202 = smul.addr %s201, 128
        %s203 = scalar_lea.vmem [#allocation2], %s202
        %p204 = pneg %p42
        %p205 = pneg %p39
        %p206 = pneg %p63
        %p207 = pneg %p60
        %p208 = pneg %p84
        %p209 = pneg %p81
        %p210 = pneg %p105
        %p211 = pneg %p102
        %p212 = pneg %p131
        %p213 = pneg %p128
        %s214 = sand.u32 %s118, 1
        %s215 = scalar_lea.sflag [#allocation4], %s214
        %s216 = sand.u32 %s118, 1
        %s217 = smul.addr %s216, 64
        %s218 = scalar_lea.vmem [#allocation5], %s217
        %s219 = smul.u32 8, %s21
        %s220 = smul.u32 8, %s21
        %v221 = vld [vmem:[%s193] sm:$0xff]
        %v222 = vld [vmem:[%s193 + $0x8] sm:$0xff]
        %v223 = vld [vmem:[%s193 + $0x10] sm:$0xff]
        %v224 = vld [vmem:[%s193 + $0x18] sm:$0xff]
        %v225 = vld [vmem:[%s193 + $0x20] sm:$0xff]
        %v226 = vld [vmem:[%s193 + $0x28] sm:$0xff]
        %v227 = vld [vmem:[%s193 + $0x30] sm:$0xff]
        %v228 = vld [vmem:[%s193 + $0x38] sm:$0xff]
        %v229 = vld [vmem:[%s193 + $0x40] sm:$0xff]
        %v230 = vld [vmem:[%s193 + $0x48] sm:$0xff]
        %v231 = vld [vmem:[%s193 + $0x50] sm:$0xff]
        %v232 = vld [vmem:[%s193 + $0x58] sm:$0xff]
        %v233 = vld [vmem:[%s193 + $0x60] sm:$0xff]
        %v234 = vld [vmem:[%s193 + $0x68] sm:$0xff]
        %v235 = vld [vmem:[%s193 + $0x70] sm:$0xff]
        %v236 = vld [vmem:[%s193 + $0x78] sm:$0xff]
        %v237 = vld [vmem:[%s1] sm:$0xff]
        %v238 = vld [vmem:[%s1 + $0x8] sm:$0xff]
        %v239 = vld [vmem:[%s1 + $0x10] sm:$0xff]
        %v240 = vld [vmem:[%s1 + $0x18] sm:$0xff]
        %v241 = vld [vmem:[%s1 + $0x20] sm:$0xff]
        %v242 = vld [vmem:[%s1 + $0x28] sm:$0xff]
        %v243 = vld [vmem:[%s1 + $0x30] sm:$0xff]
        %v244 = vld [vmem:[%s1 + $0x38] sm:$0xff]
        %v245 = vld [vmem:[%s1 + $0x40] sm:$0xff]
        %v246 = vld [vmem:[%s1 + $0x48] sm:$0xff]
        %v247 = vld [vmem:[%s1 + $0x50] sm:$0xff]
        %v248 = vld [vmem:[%s1 + $0x58] sm:$0xff]
        %v249 = vld [vmem:[%s1 + $0x60] sm:$0xff]
        %v250 = vld [vmem:[%s1 + $0x68] sm:$0xff]
        %v251 = vld [vmem:[%s1 + $0x70] sm:$0xff]
        %v252 = vld [vmem:[%s1 + $0x78] sm:$0xff]
        %v253 = vld [vmem:[%s1 + $0x80] sm:$0xff]
        %v254 = vld [vmem:[%s1 + $0x88] sm:$0xff]
        %v255 = vld [vmem:[%s1 + $0x90] sm:$0xff]
        %v256 = vld [vmem:[%s1 + $0x98] sm:$0xff]
        %v257 = vld [vmem:[%s1 + $0xa0] sm:$0xff]
        %v258 = vld [vmem:[%s1 + $0xa8] sm:$0xff]
        %v259 = vld [vmem:[%s1 + $0xb0] sm:$0xff]
        %v260 = vld [vmem:[%s1 + $0xb8] sm:$0xff]
        %v261 = vld [vmem:[%s1 + $0xc0] sm:$0xff]
        %v262 = vld [vmem:[%s1 + $0xc8] sm:$0xff]
        %v263 = vld [vmem:[%s1 + $0xd0] sm:$0xff]
        %v264 = vld [vmem:[%s1 + $0xd8] sm:$0xff]
        %v265 = vld [vmem:[%s1 + $0xe0] sm:$0xff]
        %v266 = vld [vmem:[%s1 + $0xe8] sm:$0xff]
        %v267 = vld [vmem:[%s1 + $0xf0] sm:$0xff]
        %v268 = vld [vmem:[%s1 + $0xf8] sm:$0xff]
        %v269 = vld [vmem:[%s1 + $0x100] sm:$0xff]
        %v270 = vld [vmem:[%s1 + $0x108] sm:$0xff]
        %v271 = vld [vmem:[%s1 + $0x110] sm:$0xff]
        %v272 = vld [vmem:[%s1 + $0x118] sm:$0xff]
        %v273 = vld [vmem:[%s1 + $0x120] sm:$0xff]
        %v274 = vld [vmem:[%s1 + $0x128] sm:$0xff]
        %v275 = vld [vmem:[%s1 + $0x130] sm:$0xff]
        %v276 = vld [vmem:[%s1 + $0x138] sm:$0xff]
        %v277 = vld [vmem:[%s1 + $0x140] sm:$0xff]
        %v278 = vld [vmem:[%s1 + $0x148] sm:$0xff]
        %v279 = vld [vmem:[%s1 + $0x150] sm:$0xff]
        %v280 = vld [vmem:[%s1 + $0x158] sm:$0xff]
        %v281 = vld [vmem:[%s1 + $0x160] sm:$0xff]
        %v282 = vld [vmem:[%s1 + $0x168] sm:$0xff]
        %v283 = vld [vmem:[%s1 + $0x170] sm:$0xff]
        %v284 = vld [vmem:[%s1 + $0x178] sm:$0xff]
        %v285 = vld [vmem:[%s1 + $0x180] sm:$0xff]
        %v286 = vld [vmem:[%s1 + $0x188] sm:$0xff]
        %v287 = vld [vmem:[%s1 + $0x190] sm:$0xff]
        %v288 = vld [vmem:[%s1 + $0x198] sm:$0xff]
        %v289 = vld [vmem:[%s1 + $0x1a0] sm:$0xff]
        %v290 = vld [vmem:[%s1 + $0x1a8] sm:$0xff]
        %v291 = vld [vmem:[%s1 + $0x1b0] sm:$0xff]
        %v292 = vld [vmem:[%s1 + $0x1b8] sm:$0xff]
        %v293 = vld [vmem:[%s1 + $0x1c0] sm:$0xff]
        %v294 = vld [vmem:[%s1 + $0x1c8] sm:$0xff]
        %v295 = vld [vmem:[%s1 + $0x1d0] sm:$0xff]
        %v296 = vld [vmem:[%s1 + $0x1d8] sm:$0xff]
        %v297 = vld [vmem:[%s1 + $0x1e0] sm:$0xff]
        %v298 = vld [vmem:[%s1 + $0x1e8] sm:$0xff]
        %v299 = vld [vmem:[%s1 + $0x1f0] sm:$0xff]
        %v300 = vld [vmem:[%s1 + $0x1f8] sm:$0xff]
        %301 = vmatpush.msra.mxu0 %v267
        %302 = vmatpush.msra.mxu0 %v265
        %303 = vmatpush.msra.mxu0 %v263
        %304 = vmatpush.msra.mxu0 %v261
        %305 = vmatpush.msra.mxu0 %v259
        %306 = vmatpush.msra.mxu0 %v257
        %307 = vmatpush.msra.mxu0 %v255
        %308 = vmatpush.msra.mxu0 %v253
        %309 = vmatpush.msra.mxu0 %v251
        %310 = vmatpush.msra.mxu0 %v249
        %311 = vmatpush.msra.mxu0 %v247
        %312 = vmatpush.msra.mxu0 %v245
        %313 = vmatpush.msra.mxu0 %v243
        %314 = vmatpush.msra.mxu0 %v241
        %315 = vmatpush.msra.mxu0 %v239
        %316 = vmatpush.msra.mxu0 %v237
        %317 = vmatmul.f32.gmra.mxu0 %v221
        %v318 = vpop.f32.mrf.mxu0
        %v319 = vadd.f32 0.0, %v318
        %320 = vmatmul.f32.gmra.mxu0 %v223
        %v321 = vpop.f32.mrf.mxu0
        %v322 = vadd.f32 0.0, %v321
        %323 = vmatmul.f32.gmra.mxu0 %v225
        %v324 = vpop.f32.mrf.mxu0
        %v325 = vadd.f32 0.0, %v324
        %326 = vmatmul.f32.gmra.mxu0 %v227
        %v327 = vpop.f32.mrf.mxu0
        %v328 = vadd.f32 0.0, %v327
        %329 = vmatmul.f32.gmra.mxu0 %v229
        %v330 = vpop.f32.mrf.mxu0
        %v331 = vadd.f32 0.0, %v330
        %332 = vmatmul.f32.gmra.mxu0 %v231
        %v333 = vpop.f32.mrf.mxu0
        %v334 = vadd.f32 0.0, %v333
        %335 = vmatmul.f32.gmra.mxu0 %v233
        %v336 = vpop.f32.mrf.mxu0
        %v337 = vadd.f32 0.0, %v336
        %338 = vmatmul.f32.gmra.mxu0 %v235
        %v339 = vpop.f32.mrf.mxu0
        %v340 = vadd.f32 0.0, %v339
        %341 = vdwg.mxu0
        %342 = vmatpush.msra.mxu0 %v299
        %343 = vmatpush.msra.mxu0 %v297
        %344 = vmatpush.msra.mxu0 %v295
        %345 = vmatpush.msra.mxu0 %v293
        %346 = vmatpush.msra.mxu0 %v291
        %347 = vmatpush.msra.mxu0 %v289
        %348 = vmatpush.msra.mxu0 %v287
        %349 = vmatpush.msra.mxu0 %v285
        %350 = vmatpush.msra.mxu0 %v283
        %351 = vmatpush.msra.mxu0 %v281
        %352 = vmatpush.msra.mxu0 %v279
        %353 = vmatpush.msra.mxu0 %v277
        %354 = vmatpush.msra.mxu0 %v275
        %355 = vmatpush.msra.mxu0 %v273
        %356 = vmatpush.msra.mxu0 %v271
        %357 = vmatpush.msra.mxu0 %v269
        %358 = vmatmul.f32.gmra.mxu0 %v222
        %v359 = vpop.f32.mrf.mxu0
        %v360 = vadd.f32 %v319, %v359
        %361 = vmatmul.f32.gmra.mxu0 %v224
        %v362 = vpop.f32.mrf.mxu0
        %v363 = vadd.f32 %v322, %v362
        %364 = vmatmul.f32.gmra.mxu0 %v226
        %v365 = vpop.f32.mrf.mxu0
        %v366 = vadd.f32 %v325, %v365
        %367 = vmatmul.f32.gmra.mxu0 %v228
        %v368 = vpop.f32.mrf.mxu0
        %v369 = vadd.f32 %v328, %v368
        %370 = vmatmul.f32.gmra.mxu0 %v230
        %v371 = vpop.f32.mrf.mxu0
        %v372 = vadd.f32 %v331, %v371
        %373 = vmatmul.f32.gmra.mxu0 %v232
        %v374 = vpop.f32.mrf.mxu0
        %v375 = vadd.f32 %v334, %v374
        %376 = vmatmul.f32.gmra.mxu0 %v234
        %v377 = vpop.f32.mrf.mxu0
        %v378 = vadd.f32 %v337, %v377
        %379 = vmatmul.f32.gmra.mxu0 %v236
        %v380 = vpop.f32.mrf.mxu0
        %v381 = vadd.f32 %v340, %v380
        %382 = vdwg.mxu0
        %383 = vmatpush.msra.mxu0 %v268
        %384 = vmatpush.msra.mxu0 %v266
        %385 = vmatpush.msra.mxu0 %v264
        %386 = vmatpush.msra.mxu0 %v262
        %387 = vmatpush.msra.mxu0 %v260
        %388 = vmatpush.msra.mxu0 %v258
        %389 = vmatpush.msra.mxu0 %v256
        %390 = vmatpush.msra.mxu0 %v254
        %391 = vmatpush.msra.mxu0 %v252
        %392 = vmatpush.msra.mxu0 %v250
        %393 = vmatpush.msra.mxu0 %v248
        %394 = vmatpush.msra.mxu0 %v246
        %395 = vmatpush.msra.mxu0 %v244
        %396 = vmatpush.msra.mxu0 %v242
        %397 = vmatpush.msra.mxu0 %v240
        %398 = vmatpush.msra.mxu0 %v238
        %399 = vmatmul.f32.gmra.mxu0 %v221
        %v400 = vpop.f32.mrf.mxu0
        %v401 = vadd.f32 0.0, %v400
        %402 = vmatmul.f32.gmra.mxu0 %v223
        %v403 = vpop.f32.mrf.mxu0
        %v404 = vadd.f32 0.0, %v403
        %405 = vmatmul.f32.gmra.mxu0 %v225
        %v406 = vpop.f32.mrf.mxu0
        %v407 = vadd.f32 0.0, %v406
        %408 = vmatmul.f32.gmra.mxu0 %v227
        %v409 = vpop.f32.mrf.mxu0
        %v410 = vadd.f32 0.0, %v409
        %411 = vmatmul.f32.gmra.mxu0 %v229
        %v412 = vpop.f32.mrf.mxu0
        %v413 = vadd.f32 0.0, %v412
        %414 = vmatmul.f32.gmra.mxu0 %v231
        %v415 = vpop.f32.mrf.mxu0
        %v416 = vadd.f32 0.0, %v415
        %417 = vmatmul.f32.gmra.mxu0 %v233
        %v418 = vpop.f32.mrf.mxu0
        %v419 = vadd.f32 0.0, %v418
        %420 = vmatmul.f32.gmra.mxu0 %v235
        %v421 = vpop.f32.mrf.mxu0
        %v422 = vadd.f32 0.0, %v421
        %423 = vdwg.mxu0
        %424 = vmatpush.msra.mxu0 %v300
        %425 = vmatpush.msra.mxu0 %v298
        %426 = vmatpush.msra.mxu0 %v296
        %427 = vmatpush.msra.mxu0 %v294
        %428 = vmatpush.msra.mxu0 %v292
        %429 = vmatpush.msra.mxu0 %v290
        %430 = vmatpush.msra.mxu0 %v288
        %431 = vmatpush.msra.mxu0 %v286
        %432 = vmatpush.msra.mxu0 %v284
        %433 = vmatpush.msra.mxu0 %v282
        %434 = vmatpush.msra.mxu0 %v280
        %435 = vmatpush.msra.mxu0 %v278
        %436 = vmatpush.msra.mxu0 %v276
        %437 = vmatpush.msra.mxu0 %v274
        %438 = vmatpush.msra.mxu0 %v272
        %439 = vmatpush.msra.mxu0 %v270
        %440 = vmatmul.f32.gmra.mxu0 %v222
        %v441 = vpop.f32.mrf.mxu0
        %v442 = vadd.f32 %v401, %v441
        %443 = vmatmul.f32.gmra.mxu0 %v224
        %v444 = vpop.f32.mrf.mxu0
        %v445 = vadd.f32 %v404, %v444
        %446 = vmatmul.f32.gmra.mxu0 %v226
        %v447 = vpop.f32.mrf.mxu0
        %v448 = vadd.f32 %v407, %v447
        %449 = vmatmul.f32.gmra.mxu0 %v228
        %v450 = vpop.f32.mrf.mxu0
        %v451 = vadd.f32 %v410, %v450
        %452 = vmatmul.f32.gmra.mxu0 %v230
        %v453 = vpop.f32.mrf.mxu0
        %v454 = vadd.f32 %v413, %v453
        %455 = vmatmul.f32.gmra.mxu0 %v232
        %v456 = vpop.f32.mrf.mxu0
        %v457 = vadd.f32 %v416, %v456
        %458 = vmatmul.f32.gmra.mxu0 %v234
        %v459 = vpop.f32.mrf.mxu0
        %v460 = vadd.f32 %v419, %v459
        %461 = vmatmul.f32.gmra.mxu0 %v236
        %v462 = vpop.f32.mrf.mxu0
        %v463 = vadd.f32 %v422, %v462
        %464 = vdwg.mxu0
        %v465 = vmax.f32 %v360, 0.0
        %v466 = vmax.f32 %v442, 0.0
        %v467 = vmax.f32 %v363, 0.0
        %v468 = vmax.f32 %v445, 0.0
        %v469 = vmax.f32 %v366, 0.0
        %v470 = vmax.f32 %v448, 0.0
        %v471 = vmax.f32 %v369, 0.0
        %v472 = vmax.f32 %v451, 0.0
        %v473 = vmax.f32 %v372, 0.0
        %v474 = vmax.f32 %v454, 0.0
        %v475 = vmax.f32 %v375, 0.0
        %v476 = vmax.f32 %v457, 0.0
        %v477 = vmax.f32 %v378, 0.0
        %v478 = vmax.f32 %v460, 0.0
        %v479 = vmax.f32 %v381, 0.0
        %v480 = vmax.f32 %v463, 0.0
        %v481 = vld [vmem:[%s2] sm:$0xff]
        %v482 = vld [vmem:[%s2 + $0x8] sm:$0xff]
        %v483 = vld [vmem:[%s2 + $0x10] sm:$0xff]
        %v484 = vld [vmem:[%s2 + $0x18] sm:$0xff]
        %v485 = vld [vmem:[%s2 + $0x20] sm:$0xff]
        %v486 = vld [vmem:[%s2 + $0x28] sm:$0xff]
        %v487 = vld [vmem:[%s2 + $0x30] sm:$0xff]
        %v488 = vld [vmem:[%s2 + $0x38] sm:$0xff]
        %v489 = vld [vmem:[%s2 + $0x40] sm:$0xff]
        %v490 = vld [vmem:[%s2 + $0x48] sm:$0xff]
        %v491 = vld [vmem:[%s2 + $0x50] sm:$0xff]
        %v492 = vld [vmem:[%s2 + $0x58] sm:$0xff]
        %v493 = vld [vmem:[%s2 + $0x60] sm:$0xff]
        %v494 = vld [vmem:[%s2 + $0x68] sm:$0xff]
        %v495 = vld [vmem:[%s2 + $0x70] sm:$0xff]
        %v496 = vld [vmem:[%s2 + $0x78] sm:$0xff]
        %v497 = vld [vmem:[%s2 + $0x80] sm:$0xff]
        %v498 = vld [vmem:[%s2 + $0x88] sm:$0xff]
        %v499 = vld [vmem:[%s2 + $0x90] sm:$0xff]
        %v500 = vld [vmem:[%s2 + $0x98] sm:$0xff]
        %v501 = vld [vmem:[%s2 + $0xa0] sm:$0xff]
        %v502 = vld [vmem:[%s2 + $0xa8] sm:$0xff]
        %v503 = vld [vmem:[%s2 + $0xb0] sm:$0xff]
        %v504 = vld [vmem:[%s2 + $0xb8] sm:$0xff]
        %v505 = vld [vmem:[%s2 + $0xc0] sm:$0xff]
        %v506 = vld [vmem:[%s2 + $0xc8] sm:$0xff]
        %v507 = vld [vmem:[%s2 + $0xd0] sm:$0xff]
        %v508 = vld [vmem:[%s2 + $0xd8] sm:$0xff]
        %v509 = vld [vmem:[%s2 + $0xe0] sm:$0xff]
        %v510 = vld [vmem:[%s2 + $0xe8] sm:$0xff]
        %v511 = vld [vmem:[%s2 + $0xf0] sm:$0xff]
        %v512 = vld [vmem:[%s2 + $0xf8] sm:$0xff]
        %v513 = vld [vmem:[%s2 + $0x100] sm:$0xff]
        %v514 = vld [vmem:[%s2 + $0x108] sm:$0xff]
        %v515 = vld [vmem:[%s2 + $0x110] sm:$0xff]
        %v516 = vld [vmem:[%s2 + $0x118] sm:$0xff]
        %v517 = vld [vmem:[%s2 + $0x120] sm:$0xff]
        %v518 = vld [vmem:[%s2 + $0x128] sm:$0xff]
        %v519 = vld [vmem:[%s2 + $0x130] sm:$0xff]
        %v520 = vld [vmem:[%s2 + $0x138] sm:$0xff]
        %v521 = vld [vmem:[%s2 + $0x140] sm:$0xff]
        %v522 = vld [vmem:[%s2 + $0x148] sm:$0xff]
        %v523 = vld [vmem:[%s2 + $0x150] sm:$0xff]
        %v524 = vld [vmem:[%s2 + $0x158] sm:$0xff]
        %v525 = vld [vmem:[%s2 + $0x160] sm:$0xff]
        %v526 = vld [vmem:[%s2 + $0x168] sm:$0xff]
        %v527 = vld [vmem:[%s2 + $0x170] sm:$0xff]
        %v528 = vld [vmem:[%s2 + $0x178] sm:$0xff]
        %v529 = vld [vmem:[%s2 + $0x180] sm:$0xff]
        %v530 = vld [vmem:[%s2 + $0x188] sm:$0xff]
        %v531 = vld [vmem:[%s2 + $0x190] sm:$0xff]
        %v532 = vld [vmem:[%s2 + $0x198] sm:$0xff]
        %v533 = vld [vmem:[%s2 + $0x1a0] sm:$0xff]
        %v534 = vld [vmem:[%s2 + $0x1a8] sm:$0xff]
        %v535 = vld [vmem:[%s2 + $0x1b0] sm:$0xff]
        %v536 = vld [vmem:[%s2 + $0x1b8] sm:$0xff]
        %v537 = vld [vmem:[%s2 + $0x1c0] sm:$0xff]
        %v538 = vld [vmem:[%s2 + $0x1c8] sm:$0xff]
        %v539 = vld [vmem:[%s2 + $0x1d0] sm:$0xff]
        %v540 = vld [vmem:[%s2 + $0x1d8] sm:$0xff]
        %v541 = vld [vmem:[%s2 + $0x1e0] sm:$0xff]
        %v542 = vld [vmem:[%s2 + $0x1e8] sm:$0xff]
        %v543 = vld [vmem:[%s2 + $0x1f0] sm:$0xff]
        %v544 = vld [vmem:[%s2 + $0x1f8] sm:$0xff]
        %545 = vmatpush.msra.mxu0 %v511
        %546 = vmatpush.msra.mxu0 %v509
        %547 = vmatpush.msra.mxu0 %v507
        %548 = vmatpush.msra.mxu0 %v505
        %549 = vmatpush.msra.mxu0 %v503
        %550 = vmatpush.msra.mxu0 %v501
        %551 = vmatpush.msra.mxu0 %v499
        %552 = vmatpush.msra.mxu0 %v497
        %553 = vmatpush.msra.mxu0 %v495
        %554 = vmatpush.msra.mxu0 %v493
        %555 = vmatpush.msra.mxu0 %v491
        %556 = vmatpush.msra.mxu0 %v489
        %557 = vmatpush.msra.mxu0 %v487
        %558 = vmatpush.msra.mxu0 %v485
        %559 = vmatpush.msra.mxu0 %v483
        %560 = vmatpush.msra.mxu0 %v481
        %561 = vmatmul.f32.gmra.mxu0 %v465
        %v562 = vpop.f32.mrf.mxu0
        %v563 = vadd.f32 0.0, %v562
        %564 = vmatmul.f32.gmra.mxu0 %v467
        %v565 = vpop.f32.mrf.mxu0
        %v566 = vadd.f32 0.0, %v565
        %567 = vmatmul.f32.gmra.mxu0 %v469
        %v568 = vpop.f32.mrf.mxu0
        %v569 = vadd.f32 0.0, %v568
        %570 = vmatmul.f32.gmra.mxu0 %v471
        %v571 = vpop.f32.mrf.mxu0
        %v572 = vadd.f32 0.0, %v571
        %573 = vmatmul.f32.gmra.mxu0 %v473
        %v574 = vpop.f32.mrf.mxu0
        %v575 = vadd.f32 0.0, %v574
        %576 = vmatmul.f32.gmra.mxu0 %v475
        %v577 = vpop.f32.mrf.mxu0
        %v578 = vadd.f32 0.0, %v577
        %579 = vmatmul.f32.gmra.mxu0 %v477
        %v580 = vpop.f32.mrf.mxu0
        %v581 = vadd.f32 0.0, %v580
        %582 = vmatmul.f32.gmra.mxu0 %v479
        %v583 = vpop.f32.mrf.mxu0
        %v584 = vadd.f32 0.0, %v583
        %585 = vdwg.mxu0
        %586 = vmatpush.msra.mxu0 %v543
        %587 = vmatpush.msra.mxu0 %v541
        %588 = vmatpush.msra.mxu0 %v539
        %589 = vmatpush.msra.mxu0 %v537
        %590 = vmatpush.msra.mxu0 %v535
        %591 = vmatpush.msra.mxu0 %v533
        %592 = vmatpush.msra.mxu0 %v531
        %593 = vmatpush.msra.mxu0 %v529
        %594 = vmatpush.msra.mxu0 %v527
        %595 = vmatpush.msra.mxu0 %v525
        %596 = vmatpush.msra.mxu0 %v523
        %597 = vmatpush.msra.mxu0 %v521
        %598 = vmatpush.msra.mxu0 %v519
        %599 = vmatpush.msra.mxu0 %v517
        %600 = vmatpush.msra.mxu0 %v515
        %601 = vmatpush.msra.mxu0 %v513
        %602 = vmatmul.f32.gmra.mxu0 %v466
        %v603 = vpop.f32.mrf.mxu0
        %v604 = vadd.f32 %v563, %v603
        %605 = vmatmul.f32.gmra.mxu0 %v468
        %v606 = vpop.f32.mrf.mxu0
        %v607 = vadd.f32 %v566, %v606
        %608 = vmatmul.f32.gmra.mxu0 %v470
        %v609 = vpop.f32.mrf.mxu0
        %v610 = vadd.f32 %v569, %v609
        %611 = vmatmul.f32.gmra.mxu0 %v472
        %v612 = vpop.f32.mrf.mxu0
        %v613 = vadd.f32 %v572, %v612
        %614 = vmatmul.f32.gmra.mxu0 %v474
        %v615 = vpop.f32.mrf.mxu0
        %v616 = vadd.f32 %v575, %v615
        %617 = vmatmul.f32.gmra.mxu0 %v476
        %v618 = vpop.f32.mrf.mxu0
        %v619 = vadd.f32 %v578, %v618
        %620 = vmatmul.f32.gmra.mxu0 %v478
        %v621 = vpop.f32.mrf.mxu0
        %v622 = vadd.f32 %v581, %v621
        %623 = vmatmul.f32.gmra.mxu0 %v480
        %v624 = vpop.f32.mrf.mxu0
        %v625 = vadd.f32 %v584, %v624
        %626 = vdwg.mxu0
        %627 = vmatpush.msra.mxu0 %v512
        %628 = vmatpush.msra.mxu0 %v510
        %629 = vmatpush.msra.mxu0 %v508
        %630 = vmatpush.msra.mxu0 %v506
        %631 = vmatpush.msra.mxu0 %v504
        %632 = vmatpush.msra.mxu0 %v502
        %633 = vmatpush.msra.mxu0 %v500
        %634 = vmatpush.msra.mxu0 %v498
        %635 = vmatpush.msra.mxu0 %v496
        %636 = vmatpush.msra.mxu0 %v494
        %637 = vmatpush.msra.mxu0 %v492
        %638 = vmatpush.msra.mxu0 %v490
        %639 = vmatpush.msra.mxu0 %v488
        %640 = vmatpush.msra.mxu0 %v486
        %641 = vmatpush.msra.mxu0 %v484
        %642 = vmatpush.msra.mxu0 %v482
        %643 = vmatmul.f32.gmra.mxu0 %v465
        %v644 = vpop.f32.mrf.mxu0
        %v645 = vadd.f32 0.0, %v644
        %646 = vmatmul.f32.gmra.mxu0 %v467
        %v647 = vpop.f32.mrf.mxu0
        %v648 = vadd.f32 0.0, %v647
        %649 = vmatmul.f32.gmra.mxu0 %v469
        %v650 = vpop.f32.mrf.mxu0
        %v651 = vadd.f32 0.0, %v650
        %652 = vmatmul.f32.gmra.mxu0 %v471
        %v653 = vpop.f32.mrf.mxu0
        %v654 = vadd.f32 0.0, %v653
        %655 = vmatmul.f32.gmra.mxu0 %v473
        %v656 = vpop.f32.mrf.mxu0
        %v657 = vadd.f32 0.0, %v656
        %658 = vmatmul.f32.gmra.mxu0 %v475
        %v659 = vpop.f32.mrf.mxu0
        %v660 = vadd.f32 0.0, %v659
        %661 = vmatmul.f32.gmra.mxu0 %v477
        %v662 = vpop.f32.mrf.mxu0
        %v663 = vadd.f32 0.0, %v662
        %664 = vmatmul.f32.gmra.mxu0 %v479
        %v665 = vpop.f32.mrf.mxu0
        %v666 = vadd.f32 0.0, %v665
        %667 = vdwg.mxu0
        %668 = vmatpush.msra.mxu0 %v544
        %669 = vmatpush.msra.mxu0 %v542
        %670 = vmatpush.msra.mxu0 %v540
        %671 = vmatpush.msra.mxu0 %v538
        %672 = vmatpush.msra.mxu0 %v536
        %673 = vmatpush.msra.mxu0 %v534
        %674 = vmatpush.msra.mxu0 %v532
        %675 = vmatpush.msra.mxu0 %v530
        %676 = vmatpush.msra.mxu0 %v528
        %677 = vmatpush.msra.mxu0 %v526
        %678 = vmatpush.msra.mxu0 %v524
        %679 = vmatpush.msra.mxu0 %v522
        %680 = vmatpush.msra.mxu0 %v520
        %681 = vmatpush.msra.mxu0 %v518
        %682 = vmatpush.msra.mxu0 %v516
        %683 = vmatpush.msra.mxu0 %v514
        %684 = vmatmul.f32.gmra.mxu0 %v466
        %v685 = vpop.f32.mrf.mxu0
        %v686 = vadd.f32 %v645, %v685
        %687 = vmatmul.f32.gmra.mxu0 %v468
        %v688 = vpop.f32.mrf.mxu0
        %v689 = vadd.f32 %v648, %v688
        %690 = vmatmul.f32.gmra.mxu0 %v470
        %v691 = vpop.f32.mrf.mxu0
        %v692 = vadd.f32 %v651, %v691
        %693 = vmatmul.f32.gmra.mxu0 %v472
        %v694 = vpop.f32.mrf.mxu0
        %v695 = vadd.f32 %v654, %v694
        %696 = vmatmul.f32.gmra.mxu0 %v474
        %v697 = vpop.f32.mrf.mxu0
        %v698 = vadd.f32 %v657, %v697
        %699 = vmatmul.f32.gmra.mxu0 %v476
        %v700 = vpop.f32.mrf.mxu0
        %v701 = vadd.f32 %v660, %v700
        %702 = vmatmul.f32.gmra.mxu0 %v478
        %v703 = vpop.f32.mrf.mxu0
        %v704 = vadd.f32 %v663, %v703
        %705 = vmatmul.f32.gmra.mxu0 %v480
        %v706 = vpop.f32.mrf.mxu0
        %v707 = vadd.f32 %v666, %v706
        %708 = vdwg.mxu0
        %v709 = vmax.f32 %v604, 0.0
        %v710 = vmax.f32 %v686, 0.0
        %v711 = vmax.f32 %v607, 0.0
        %v712 = vmax.f32 %v689, 0.0
        %v713 = vmax.f32 %v610, 0.0
        %v714 = vmax.f32 %v692, 0.0
        %v715 = vmax.f32 %v613, 0.0
        %v716 = vmax.f32 %v695, 0.0
        %v717 = vmax.f32 %v616, 0.0
        %v718 = vmax.f32 %v698, 0.0
        %v719 = vmax.f32 %v619, 0.0
        %v720 = vmax.f32 %v701, 0.0
        %v721 = vmax.f32 %v622, 0.0
        %v722 = vmax.f32 %v704, 0.0
        %v723 = vmax.f32 %v625, 0.0
        %v724 = vmax.f32 %v707, 0.0
        %v725 = vld [vmem:[%s3] sm:$0xff]
        %v726 = vld [vmem:[%s3 + $0x8] sm:$0xff]
        %v727 = vld [vmem:[%s3 + $0x10] sm:$0xff]
        %v728 = vld [vmem:[%s3 + $0x18] sm:$0xff]
        %v729 = vld [vmem:[%s3 + $0x20] sm:$0xff]
        %v730 = vld [vmem:[%s3 + $0x28] sm:$0xff]
        %v731 = vld [vmem:[%s3 + $0x30] sm:$0xff]
        %v732 = vld [vmem:[%s3 + $0x38] sm:$0xff]
        %v733 = vld [vmem:[%s3 + $0x40] sm:$0xff]
        %v734 = vld [vmem:[%s3 + $0x48] sm:$0xff]
        %v735 = vld [vmem:[%s3 + $0x50] sm:$0xff]
        %v736 = vld [vmem:[%s3 + $0x58] sm:$0xff]
        %v737 = vld [vmem:[%s3 + $0x60] sm:$0xff]
        %v738 = vld [vmem:[%s3 + $0x68] sm:$0xff]
        %v739 = vld [vmem:[%s3 + $0x70] sm:$0xff]
        %v740 = vld [vmem:[%s3 + $0x78] sm:$0xff]
        %v741 = vld [vmem:[%s3 + $0x80] sm:$0xff]
        %v742 = vld [vmem:[%s3 + $0x88] sm:$0xff]
        %v743 = vld [vmem:[%s3 + $0x90] sm:$0xff]
        %v744 = vld [vmem:[%s3 + $0x98] sm:$0xff]
        %v745 = vld [vmem:[%s3 + $0xa0] sm:$0xff]
        %v746 = vld [vmem:[%s3 + $0xa8] sm:$0xff]
        %v747 = vld [vmem:[%s3 + $0xb0] sm:$0xff]
        %v748 = vld [vmem:[%s3 + $0xb8] sm:$0xff]
        %v749 = vld [vmem:[%s3 + $0xc0] sm:$0xff]
        %v750 = vld [vmem:[%s3 + $0xc8] sm:$0xff]
        %v751 = vld [vmem:[%s3 + $0xd0] sm:$0xff]
        %v752 = vld [vmem:[%s3 + $0xd8] sm:$0xff]
        %v753 = vld [vmem:[%s3 + $0xe0] sm:$0xff]
        %v754 = vld [vmem:[%s3 + $0xe8] sm:$0xff]
        %v755 = vld [vmem:[%s3 + $0xf0] sm:$0xff]
        %v756 = vld [vmem:[%s3 + $0xf8] sm:$0xff]
        %757 = vmatpush.msra.mxu0 %v740
        %758 = vmatpush.msra.mxu0 %v739
        %759 = vmatpush.msra.mxu0 %v738
        %760 = vmatpush.msra.mxu0 %v737
        %761 = vmatpush.msra.mxu0 %v736
        %762 = vmatpush.msra.mxu0 %v735
        %763 = vmatpush.msra.mxu0 %v734
        %764 = vmatpush.msra.mxu0 %v733
        %765 = vmatpush.msra.mxu0 %v732
        %766 = vmatpush.msra.mxu0 %v731
        %767 = vmatpush.msra.mxu0 %v730
        %768 = vmatpush.msra.mxu0 %v729
        %769 = vmatpush.msra.mxu0 %v728
        %770 = vmatpush.msra.mxu0 %v727
        %771 = vmatpush.msra.mxu0 %v726
        %772 = vmatpush.msra.mxu0 %v725
        %773 = vmatmul.f32.gmra.mxu0 %v709
        %v774 = vpop.f32.mrf.mxu0
        %v775 = vadd.f32 0.0, %v774
        %776 = vmatmul.f32.gmra.mxu0 %v711
        %v777 = vpop.f32.mrf.mxu0
        %v778 = vadd.f32 0.0, %v777
        %779 = vmatmul.f32.gmra.mxu0 %v713
        %v780 = vpop.f32.mrf.mxu0
        %v781 = vadd.f32 0.0, %v780
        %782 = vmatmul.f32.gmra.mxu0 %v715
        %v783 = vpop.f32.mrf.mxu0
        %v784 = vadd.f32 0.0, %v783
        %785 = vmatmul.f32.gmra.mxu0 %v717
        %v786 = vpop.f32.mrf.mxu0
        %v787 = vadd.f32 0.0, %v786
        %788 = vmatmul.f32.gmra.mxu0 %v719
        %v789 = vpop.f32.mrf.mxu0
        %v790 = vadd.f32 0.0, %v789
        %791 = vmatmul.f32.gmra.mxu0 %v721
        %v792 = vpop.f32.mrf.mxu0
        %v793 = vadd.f32 0.0, %v792
        %794 = vmatmul.f32.gmra.mxu0 %v723
        %v795 = vpop.f32.mrf.mxu0
        %v796 = vadd.f32 0.0, %v795
        %797 = vdwg.mxu0
        %798 = vmatpush.msra.mxu0 %v756
        %799 = vmatpush.msra.mxu0 %v755
        %800 = vmatpush.msra.mxu0 %v754
        %801 = vmatpush.msra.mxu0 %v753
        %802 = vmatpush.msra.mxu0 %v752
        %803 = vmatpush.msra.mxu0 %v751
        %804 = vmatpush.msra.mxu0 %v750
        %805 = vmatpush.msra.mxu0 %v749
        %806 = vmatpush.msra.mxu0 %v748
        %807 = vmatpush.msra.mxu0 %v747
        %808 = vmatpush.msra.mxu0 %v746
        %809 = vmatpush.msra.mxu0 %v745
        %810 = vmatpush.msra.mxu0 %v744
        %811 = vmatpush.msra.mxu0 %v743
        %812 = vmatpush.msra.mxu0 %v742
        %813 = vmatpush.msra.mxu0 %v741
        %814 = vmatmul.f32.gmra.mxu0 %v710
        %v815 = vpop.f32.mrf.mxu0
        %v816 = vadd.f32 %v775, %v815
        %817 = vmatmul.f32.gmra.mxu0 %v712
        %v818 = vpop.f32.mrf.mxu0
        %v819 = vadd.f32 %v778, %v818
        %820 = vmatmul.f32.gmra.mxu0 %v714
        %v821 = vpop.f32.mrf.mxu0
        %v822 = vadd.f32 %v781, %v821
        %823 = vmatmul.f32.gmra.mxu0 %v716
        %v824 = vpop.f32.mrf.mxu0
        %v825 = vadd.f32 %v784, %v824
        %826 = vmatmul.f32.gmra.mxu0 %v718
        %v827 = vpop.f32.mrf.mxu0
        %v828 = vadd.f32 %v787, %v827
        %829 = vmatmul.f32.gmra.mxu0 %v720
        %v830 = vpop.f32.mrf.mxu0
        %v831 = vadd.f32 %v790, %v830
        %832 = vmatmul.f32.gmra.mxu0 %v722
        %v833 = vpop.f32.mrf.mxu0
        %v834 = vadd.f32 %v793, %v833
        %835 = vmatmul.f32.gmra.mxu0 %v724
        %v836 = vpop.f32.mrf.mxu0
        %v837 = vadd.f32 %v796, %v836
        %838 = vdwg.mxu0
        %839 = vst [vmem:[%s218] sm:$0xff] %v816
        %840 = vst [vmem:[%s218 + $0x8] sm:$0xff] %v819
        %841 = vst [vmem:[%s218 + $0x10] sm:$0xff] %v822
        %842 = vst [vmem:[%s218 + $0x18] sm:$0xff] %v825
        %843 = vst [vmem:[%s218 + $0x20] sm:$0xff] %v828
        %844 = vst [vmem:[%s218 + $0x28] sm:$0xff] %v831
        %845 = vst [vmem:[%s218 + $0x30] sm:$0xff] %v834
        %846 = vst [vmem:[%s218 + $0x38] sm:$0xff] %v837
        %s847 = sand.u32 %s118, 1
        %s848 = scalar_lea.sflag [#allocation4], %s847
        %s849 = sand.u32 %s118, 1
        %s850 = smul.addr %s849, 64
        %s851 = scalar_lea.vmem [#allocation5], %s850
        // Predicated region
        $region41: #{_lambda_.3} parent=35 // pred_check
          %p852 = pneg %p128
        $region42: #{_lambda_.3} parent=35 // pred_check_branch
          %854 = sbr.rel (%p852) target = $region44
        $region43: #{_lambda_.3} parent=35 // pred_region
          %s855 = smul.u32 8, %s21
          %857 = vsyncadd %s848, 0
          %s858 = smul.addr %s855, 8
          %s859 = scalar_lea.hbm %s4, %s858
          %s860 = sshll.u32 %s851, 4
          %s861 = int_to_ptr.vmem [resolvable:$true] %s860
          %s862 = sshll.u32 %s859, 4
          %s863 = int_to_ptr.hbm [resolvable:$true] %s862
          %868 = dma.vmem_to_hbm [thread:$0]  %s861, 1024, %s863, %s848, 128, 128, 8
        $region44: #{_lambda_.3} parent=35 // pred_fallthru
          _
      $region36: #{_lambda_.3} parent=5 // pred_fallthru
        _
      %p869 = scmp.le.s32.totalorder 2, %s16
      // Predicated region
      $region45: #{_lambda_.3} parent=5 // pred_check
        %p870 = pneg %p869
      $region46: #{_lambda_.3} parent=5 // pred_check_branch
        %872 = sbr.rel (%p870) target = $region48
      $region47: #{_lambda_.3} parent=5 // pred_region
        %s873 = ssub.s32 %s16, 2
        // Predicated region
        $region49: #{_lambda_.3} parent=47 // pred_check
          %p874 = pneg %p134
        $region50: #{_lambda_.3} parent=47 // pred_check_branch
          %876 = sbr.rel (%p874) target = $region52
        $region51: #{_lambda_.3} parent=47 // pred_region
          %s877 = sand.u32 %s119, 1
          %s878 = scalar_lea.sflag [#allocation4], %s877
          %s879 = sand.u32 %s119, 1
          %s880 = smul.addr %s879, 64
          %s881 = scalar_lea.vmem [#allocation5], %s880
          %883 = dma.done %s878, 1024
        $region52: #{_lambda_.3} parent=47 // pred_fallthru
          _
      $region48: #{_lambda_.3} parent=5 // pred_fallthru
        _
    $region6: #{_lambda_.3} parent=1 // loop_footer
      %s20 = sadd.s32 1, %s16
    $region7: #{_lambda_.3} parent=1 // loop_footer_branch
      %15 = sbr.rel target = $region3
    $region8: #{_lambda_.3} parent=1 // loop_exit
      _
    %884 = vsyncpa [#allocation3], 1
    %s885 = scalar_lea.sflag [#allocation3], 1
    %886 = vsyncpa %s885, 1
    %887 = vsyncpa [#allocation4], 1
    %s888 = scalar_lea.sflag [#allocation4], 1
    %889 = vsyncpa %s888, 1

// kernel: _lambda_.2
$region0: #{_lambda_.2}
  #allocation0 [shape = 'u32[]', space=smem, size = 0x4, offset = 0x4, fixed_abs, tag = 'smem constant byte address 0x4 - core index']
  #allocation1 [shape = 'u32[72,128]{1,0:T(1,128)}', space=vmem, size = 0x9000, scoped, tag = 'internal scratch']
  %s0 = inlined_call_operand.vmem [shape: f32[1,256], index: 0, kind: input, shape index: {}]
  %s1 = inlined_call_operand.hbm [shape: f32[256,256], index: 1, kind: input, shape index: {}]
  %s2 = inlined_call_operand.hbm [shape: f32[256,256], index: 2, kind: input, shape index: {}]
  %s3 = inlined_call_operand.hbm [shape: f32[128,256], index: 3, kind: input, shape index: {}]
  %s4 = inlined_call_operand.vmem [shape: f32[256,256], index: 4, kind: output, shape index: {0}]
  %s5 = inlined_call_operand.vmem [shape: f32[256,256], index: 5, kind: output, shape index: {1}]
  %s6 = inlined_call_operand.vmem [shape: f32[256,128], index: 6, kind: output, shape index: {2}]
  %7 = xla_tuple %s4, %s5, %s6
  %s8 = sld [smem:[#allocation0]]
  $region54: #{_lambda_.2} parent=0
    _
  %s10 = ssub.s32 1, %s8
  %s11 = scalar_select 0, %s10, %s8
  $region1: #{_lambda_.2} parent=0
    #allocation2 [shape = 'u8[262144]{0}', space=vmem, size = 0x40000, scoped, tag = 'input window, operand 1, single buffered']
    #allocation3 [shape = 's32[1]{0}', space=sflag, size = 0x4, scoped, tag = 'scoped memory for _lambda_.2']
    #allocation4 [shape = 'u8[262144]{0}', space=vmem, size = 0x40000, scoped, tag = 'input window, operand 2, single buffered']
    #allocation5 [shape = 's32[1]{0}', space=sflag, size = 0x4, scoped, tag = 'scoped memory for _lambda_.2']
    #allocation6 [shape = 'u8[131072]{0}', space=vmem, size = 0x20000, scoped, tag = 'input window, operand 3, single buffered']
    %12 = vsyncpa [#allocation3], 0
    %13 = vsyncpa [#allocation5], 0
    // Predicated region
    $region2: #{_lambda_.2} parent=1 // pred_check
      _
    $region3: #{_lambda_.2} parent=1 // pred_check_branch
      %15 = sbr.rel (0) target = $region5
    $region4: #{_lambda_.2} parent=1 // pred_region
      _
    $region5: #{_lambda_.2} parent=1 // pred_fallthru
      _
    // Predicated region
    $region6: #{_lambda_.2} parent=1 // pred_check
      _
    $region7: #{_lambda_.2} parent=1 // pred_check_branch
      %17 = sbr.rel (0) target = $region9
    $region8: #{_lambda_.2} parent=1 // pred_region
      %19 = vsyncadd [#allocation3], 0
      %s20 = sshll.u32 %s1, 4
      %s21 = int_to_ptr.hbm [resolvable:$true] %s20
      %s22 = sshll.u32 [#allocation2], 4
      %s23 = int_to_ptr.vmem [resolvable:$true] %s22
      %28 = dma.hbm_to_vmem [thread:$0]  %s21, 8192, %s23, [#allocation3], 256, 256, 16
    $region9: #{_lambda_.2} parent=1 // pred_fallthru
      _
    // Predicated region
    $region10: #{_lambda_.2} parent=1 // pred_check
      _
    $region11: #{_lambda_.2} parent=1 // pred_check_branch
      %30 = sbr.rel (0) target = $region13
    $region12: #{_lambda_.2} parent=1 // pred_region
      %32 = vsyncadd [#allocation5], 0
      %s33 = sshll.u32 %s2, 4
      %s34 = int_to_ptr.hbm [resolvable:$true] %s33
      %s35 = sshll.u32 [#allocation4], 4
      %s36 = int_to_ptr.vmem [resolvable:$true] %s35
      %41 = dma.hbm_to_vmem [thread:$0]  %s34, 8192, %s36, [#allocation5], 256, 256, 16
    $region13: #{_lambda_.2} parent=1 // pred_fallthru
      _
    // Predicated region
    $region14: #{_lambda_.2} parent=1 // pred_check
      _
    $region15: #{_lambda_.2} parent=1 // pred_check_branch
      %43 = sbr.rel (0) target = $region17
    $region16: #{_lambda_.2} parent=1 // pred_region
      %45 = vsyncadd [#allocation5], 0
      %s46 = sshll.u32 %s3, 4
      %s47 = int_to_ptr.hbm [resolvable:$true] %s46
      %s48 = sshll.u32 [#allocation6], 4
      %s49 = int_to_ptr.vmem [resolvable:$true] %s48
      %54 = dma.hbm_to_vmem [thread:$0]  %s47, 4096, %s49, [#allocation5], 256, 256, 16
    $region17: #{_lambda_.2} parent=1 // pred_fallthru
      _
    // Predicated region
    $region18: #{_lambda_.2} parent=1 // pred_check
      _
    $region19: #{_lambda_.2} parent=1 // pred_check_branch
      %56 = sbr.rel (0) target = $region21
    $region20: #{_lambda_.2} parent=1 // pred_region
      %58 = dma.done [#allocation3], 8192
    $region21: #{_lambda_.2} parent=1 // pred_fallthru
      _
    // Predicated region
    $region22: #{_lambda_.2} parent=1 // pred_check
      _
    $region23: #{_lambda_.2} parent=1 // pred_check_branch
      %60 = sbr.rel (0) target = $region25
    $region24: #{_lambda_.2} parent=1 // pred_region
      %62 = dma.done [#allocation5], 8192
    $region25: #{_lambda_.2} parent=1 // pred_fallthru
      _
    // Predicated region
    $region26: #{_lambda_.2} parent=1 // pred_check
      _
    $region27: #{_lambda_.2} parent=1 // pred_check_branch
      %64 = sbr.rel (0) target = $region29
    $region28: #{_lambda_.2} parent=1 // pred_region
      %66 = dma.done [#allocation5], 4096
    $region29: #{_lambda_.2} parent=1 // pred_fallthru
      _
    %v67 = vld [vmem:[%s0] sm:$0x3]
    %v68 = vld [vmem:[#allocation2] sm:$0xff]
    %v69 = vld [vmem:[#allocation2 + $0x8] sm:$0xff]
    %v70 = vld [vmem:[#allocation2 + $0x10] sm:$0xff]
    %v71 = vld [vmem:[#allocation2 + $0x18] sm:$0xff]
    %v72 = vld [vmem:[#allocation2 + $0x20] sm:$0xff]
    %v73 = vld [vmem:[#allocation2 + $0x28] sm:$0xff]
    %v74 = vld [vmem:[#allocation2 + $0x30] sm:$0xff]
    %v75 = vld [vmem:[#allocation2 + $0x38] sm:$0xff]
    %v76 = vld [vmem:[#allocation2 + $0x40] sm:$0xff]
    %v77 = vld [vmem:[#allocation2 + $0x48] sm:$0xff]
    %v78 = vld [vmem:[#allocation2 + $0x50] sm:$0xff]
    %v79 = vld [vmem:[#allocation2 + $0x58] sm:$0xff]
    %v80 = vld [vmem:[#allocation2 + $0x60] sm:$0xff]
    %v81 = vld [vmem:[#allocation2 + $0x68] sm:$0xff]
    %v82 = vld [vmem:[#allocation2 + $0x70] sm:$0xff]
    %v83 = vld [vmem:[#allocation2 + $0x78] sm:$0xff]
    %v84 = vld [vmem:[#allocation2 + $0x80] sm:$0xff]
    %v85 = vld [vmem:[#allocation2 + $0x88] sm:$0xff]
    %v86 = vld [vmem:[#allocation2 + $0x90] sm:$0xff]
    %v87 = vld [vmem:[#allocation2 + $0x98] sm:$0xff]
    %v88 = vld [vmem:[#allocation2 + $0xa0] sm:$0xff]
    %v89 = vld [vmem:[#allocation2 + $0xa8] sm:$0xff]
    %v90 = vld [vmem:[#allocation2 + $0xb0] sm:$0xff]
    %v91 = vld [vmem:[#allocation2 + $0xb8] sm:$0xff]
    %v92 = vld [vmem:[#allocation2 + $0xc0] sm:$0xff]
    %v93 = vld [vmem:[#allocation2 + $0xc8] sm:$0xff]
    %v94 = vld [vmem:[#allocation2 + $0xd0] sm:$0xff]
    %v95 = vld [vmem:[#allocation2 + $0xd8] sm:$0xff]
    %v96 = vld [vmem:[#allocation2 + $0xe0] sm:$0xff]
    %v97 = vld [vmem:[#allocation2 + $0xe8] sm:$0xff]
    %v98 = vld [vmem:[#allocation2 + $0xf0] sm:$0xff]
    %v99 = vld [vmem:[#allocation2 + $0xf8] sm:$0xff]
    %v100 = vld [vmem:[#allocation2 + $0x100] sm:$0xff]
    %v101 = vld [vmem:[#allocation2 + $0x108] sm:$0xff]
    %v102 = vld [vmem:[#allocation2 + $0x110] sm:$0xff]
    %v103 = vld [vmem:[#allocation2 + $0x118] sm:$0xff]
    %v104 = vld [vmem:[#allocation2 + $0x120] sm:$0xff]
    %v105 = vld [vmem:[#allocation2 + $0x128] sm:$0xff]
    %v106 = vld [vmem:[#allocation2 + $0x130] sm:$0xff]
    %v107 = vld [vmem:[#allocation2 + $0x138] sm:$0xff]
    %v108 = vld [vmem:[#allocation2 + $0x140] sm:$0xff]
    %v109 = vld [vmem:[#allocation2 + $0x148] sm:$0xff]
    %v110 = vld [vmem:[#allocation2 + $0x150] sm:$0xff]
    %v111 = vld [vmem:[#allocation2 + $0x158] sm:$0xff]
    %v112 = vld [vmem:[#allocation2 + $0x160] sm:$0xff]
    %v113 = vld [vmem:[#allocation2 + $0x168] sm:$0xff]
    %v114 = vld [vmem:[#allocation2 + $0x170] sm:$0xff]
    %v115 = vld [vmem:[#allocation2 + $0x178] sm:$0xff]
    %v116 = vld [vmem:[#allocation2 + $0x180] sm:$0xff]
    %v117 = vld [vmem:[#allocation2 + $0x188] sm:$0xff]
    %v118 = vld [vmem:[#allocation2 + $0x190] sm:$0xff]
    %v119 = vld [vmem:[#allocation2 + $0x198] sm:$0xff]
    %v120 = vld [vmem:[#allocation2 + $0x1a0] sm:$0xff]
    %v121 = vld [vmem:[#allocation2 + $0x1a8] sm:$0xff]
    %v122 = vld [vmem:[#allocation2 + $0x1b0] sm:$0xff]
    %v123 = vld [vmem:[#allocation2 + $0x1b8] sm:$0xff]
    %v124 = vld [vmem:[#allocation2 + $0x1c0] sm:$0xff]
    %v125 = vld [vmem:[#allocation2 + $0x1c8] sm:$0xff]
    %v126 = vld [vmem:[#allocation2 + $0x1d0] sm:$0xff]
    %v127 = vld [vmem:[#allocation2 + $0x1d8] sm:$0xff]
    %v128 = vld [vmem:[#allocation2 + $0x1e0] sm:$0xff]
    %v129 = vld [vmem:[#allocation2 + $0x1e8] sm:$0xff]
    %v130 = vld [vmem:[#allocation2 + $0x1f0] sm:$0xff]
    %v131 = vld [vmem:[#allocation2 + $0x1f8] sm:$0xff]
    %v133 = vperm.slane %v67, 0
    %v134 = vperm.slane %v67, 1
    %v137 = vmul.f32 %v68, %v133
    %v138 = vmul.f32 %v69, %v134
    %v139 = vmul.f32 %v70, %v133
    %v140 = vmul.f32 %v71, %v134
    %v141 = vmul.f32 %v72, %v133
    %v142 = vmul.f32 %v73, %v134
    %v143 = vmul.f32 %v74, %v133
    %v144 = vmul.f32 %v75, %v134
    %v145 = vmul.f32 %v76, %v133
    %v146 = vmul.f32 %v77, %v134
    %v147 = vmul.f32 %v78, %v133
    %v148 = vmul.f32 %v79, %v134
    %v149 = vmul.f32 %v80, %v133
    %v150 = vmul.f32 %v81, %v134
    %v151 = vmul.f32 %v82, %v133
    %v152 = vmul.f32 %v83, %v134
    %v153 = vmul.f32 %v84, %v133
    %v154 = vmul.f32 %v85, %v134
    %v155 = vmul.f32 %v86, %v133
    %v156 = vmul.f32 %v87, %v134
    %v157 = vmul.f32 %v88, %v133
    %v158 = vmul.f32 %v89, %v134
    %v159 = vmul.f32 %v90, %v133
    %v160 = vmul.f32 %v91, %v134
    %v161 = vmul.f32 %v92, %v133
    %v162 = vmul.f32 %v93, %v134
    %v163 = vmul.f32 %v94, %v133
    %v164 = vmul.f32 %v95, %v134
    %v165 = vmul.f32 %v96, %v133
    %v166 = vmul.f32 %v97, %v134
    %v167 = vmul.f32 %v98, %v133
    %v168 = vmul.f32 %v99, %v134
    %v169 = vmul.f32 %v100, %v133
    %v170 = vmul.f32 %v101, %v134
    %v171 = vmul.f32 %v102, %v133
    %v172 = vmul.f32 %v103, %v134
    %v173 = vmul.f32 %v104, %v133
    %v174 = vmul.f32 %v105, %v134
    %v175 = vmul.f32 %v106, %v133
    %v176 = vmul.f32 %v107, %v134
    %v177 = vmul.f32 %v108, %v133
    %v178 = vmul.f32 %v109, %v134
    %v179 = vmul.f32 %v110, %v133
    %v180 = vmul.f32 %v111, %v134
    %v181 = vmul.f32 %v112, %v133
    %v182 = vmul.f32 %v113, %v134
    %v183 = vmul.f32 %v114, %v133
    %v184 = vmul.f32 %v115, %v134
    %v185 = vmul.f32 %v116, %v133
    %v186 = vmul.f32 %v117, %v134
    %v187 = vmul.f32 %v118, %v133
    %v188 = vmul.f32 %v119, %v134
    %v189 = vmul.f32 %v120, %v133
    %v190 = vmul.f32 %v121, %v134
    %v191 = vmul.f32 %v122, %v133
    %v192 = vmul.f32 %v123, %v134
    %v193 = vmul.f32 %v124, %v133
    %v194 = vmul.f32 %v125, %v134
    %v195 = vmul.f32 %v126, %v133
    %v196 = vmul.f32 %v127, %v134
    %v197 = vmul.f32 %v128, %v133
    %v198 = vmul.f32 %v129, %v134
    %v199 = vmul.f32 %v130, %v133
    %v200 = vmul.f32 %v131, %v134
    %v201 = vmul.f32 %v137, %v137
    %v202 = vmul.f32 %v138, %v138
    %v203 = vmul.f32 %v139, %v139
    %v204 = vmul.f32 %v140, %v140
    %v205 = vmul.f32 %v141, %v141
    %v206 = vmul.f32 %v142, %v142
    %v207 = vmul.f32 %v143, %v143
    %v208 = vmul.f32 %v144, %v144
    %v209 = vmul.f32 %v145, %v145
    %v210 = vmul.f32 %v146, %v146
    %v211 = vmul.f32 %v147, %v147
    %v212 = vmul.f32 %v148, %v148
    %v213 = vmul.f32 %v149, %v149
    %v214 = vmul.f32 %v150, %v150
    %v215 = vmul.f32 %v151, %v151
    %v216 = vmul.f32 %v152, %v152
    %v217 = vmul.f32 %v153, %v153
    %v218 = vmul.f32 %v154, %v154
    %v219 = vmul.f32 %v155, %v155
    %v220 = vmul.f32 %v156, %v156
    %v221 = vmul.f32 %v157, %v157
    %v222 = vmul.f32 %v158, %v158
    %v223 = vmul.f32 %v159, %v159
    %v224 = vmul.f32 %v160, %v160
    %v225 = vmul.f32 %v161, %v161
    %v226 = vmul.f32 %v162, %v162
    %v227 = vmul.f32 %v163, %v163
    %v228 = vmul.f32 %v164, %v164
    %v229 = vmul.f32 %v165, %v165
    %v230 = vmul.f32 %v166, %v166
    %v231 = vmul.f32 %v167, %v167
    %v232 = vmul.f32 %v168, %v168
    %v233 = vmul.f32 %v169, %v169
    %v234 = vmul.f32 %v170, %v170
    %v235 = vmul.f32 %v171, %v171
    %v236 = vmul.f32 %v172, %v172
    %v237 = vmul.f32 %v173, %v173
    %v238 = vmul.f32 %v174, %v174
    %v239 = vmul.f32 %v175, %v175
    %v240 = vmul.f32 %v176, %v176
    %v241 = vmul.f32 %v177, %v177
    %v242 = vmul.f32 %v178, %v178
    %v243 = vmul.f32 %v179, %v179
    %v244 = vmul.f32 %v180, %v180
    %v245 = vmul.f32 %v181, %v181
    %v246 = vmul.f32 %v182, %v182
    %v247 = vmul.f32 %v183, %v183
    %v248 = vmul.f32 %v184, %v184
    %v249 = vmul.f32 %v185, %v185
    %v250 = vmul.f32 %v186, %v186
    %v251 = vmul.f32 %v187, %v187
    %v252 = vmul.f32 %v188, %v188
    %v253 = vmul.f32 %v189, %v189
    %v254 = vmul.f32 %v190, %v190
    %v255 = vmul.f32 %v191, %v191
    %v256 = vmul.f32 %v192, %v192
    %v257 = vmul.f32 %v193, %v193
    %v258 = vmul.f32 %v194, %v194
    %v259 = vmul.f32 %v195, %v195
    %v260 = vmul.f32 %v196, %v196
    %v261 = vmul.f32 %v197, %v197
    %v262 = vmul.f32 %v198, %v198
    %v263 = vmul.f32 %v199, %v199
    %v264 = vmul.f32 %v200, %v200
    %v265 = vadd.f32 %v201, %v202
    %266 = vadd.xlane.f32.xlu0 %v265
    %v267 = vpop.xlane.xlu0 %266
    %v268 = vadd.f32 %v203, %v204
    %269 = vadd.xlane.f32.xlu0 %v268
    %v270 = vpop.xlane.xlu0 %269
    %v271 = vadd.f32 %v205, %v206
    %272 = vadd.xlane.f32.xlu0 %v271
    %v273 = vpop.xlane.xlu0 %272
    %v274 = vadd.f32 %v207, %v208
    %275 = vadd.xlane.f32.xlu0 %v274
    %v276 = vpop.xlane.xlu0 %275
    %v277 = vadd.f32 %v209, %v210
    %278 = vadd.xlane.f32.xlu0 %v277
    %v279 = vpop.xlane.xlu0 %278
    %v280 = vadd.f32 %v211, %v212
    %281 = vadd.xlane.f32.xlu0 %v280
    %v282 = vpop.xlane.xlu0 %281
    %v283 = vadd.f32 %v213, %v214
    %284 = vadd.xlane.f32.xlu0 %v283
    %v285 = vpop.xlane.xlu0 %284
    %v286 = vadd.f32 %v215, %v216
    %287 = vadd.xlane.f32.xlu0 %v286
    %v288 = vpop.xlane.xlu0 %287
    %v289 = vadd.f32 %v217, %v218
    %290 = vadd.xlane.f32.xlu0 %v289
    %v291 = vpop.xlane.xlu0 %290
    %v292 = vadd.f32 %v219, %v220
    %293 = vadd.xlane.f32.xlu0 %v292
    %v294 = vpop.xlane.xlu0 %293
    %v295 = vadd.f32 %v221, %v222
    %296 = vadd.xlane.f32.xlu0 %v295
    %v297 = vpop.xlane.xlu0 %296
    %v298 = vadd.f32 %v223, %v224
    %299 = vadd.xlane.f32.xlu0 %v298
    %v300 = vpop.xlane.xlu0 %299
    %v301 = vadd.f32 %v225, %v226
    %302 = vadd.xlane.f32.xlu0 %v301
    %v303 = vpop.xlane.xlu0 %302
    %v304 = vadd.f32 %v227, %v228
    %305 = vadd.xlane.f32.xlu0 %v304
    %v306 = vpop.xlane.xlu0 %305
    %v307 = vadd.f32 %v229, %v230
    %308 = vadd.xlane.f32.xlu0 %v307
    %v309 = vpop.xlane.xlu0 %308
    %v310 = vadd.f32 %v231, %v232
    %311 = vadd.xlane.f32.xlu0 %v310
    %v312 = vpop.xlane.xlu0 %311
    %v313 = vadd.f32 %v233, %v234
    %314 = vadd.xlane.f32.xlu0 %v313
    %v315 = vpop.xlane.xlu0 %314
    %v316 = vadd.f32 %v235, %v236
    %317 = vadd.xlane.f32.xlu0 %v316
    %v318 = vpop.xlane.xlu0 %317
    %v319 = vadd.f32 %v237, %v238
    %320 = vadd.xlane.f32.xlu0 %v319
    %v321 = vpop.xlane.xlu0 %320
    %v322 = vadd.f32 %v239, %v240
    %323 = vadd.xlane.f32.xlu0 %v322
    %v324 = vpop.xlane.xlu0 %323
    %v325 = vadd.f32 %v241, %v242
    %326 = vadd.xlane.f32.xlu0 %v325
    %v327 = vpop.xlane.xlu0 %326
    %v328 = vadd.f32 %v243, %v244
    %329 = vadd.xlane.f32.xlu0 %v328
    %v330 = vpop.xlane.xlu0 %329
    %v331 = vadd.f32 %v245, %v246
    %332 = vadd.xlane.f32.xlu0 %v331
    %v333 = vpop.xlane.xlu0 %332
    %v334 = vadd.f32 %v247, %v248
    %335 = vadd.xlane.f32.xlu0 %v334
    %v336 = vpop.xlane.xlu0 %335
    %v337 = vadd.f32 %v249, %v250
    %338 = vadd.xlane.f32.xlu0 %v337
    %v339 = vpop.xlane.xlu0 %338
    %v340 = vadd.f32 %v251, %v252
    %341 = vadd.xlane.f32.xlu0 %v340
    %v342 = vpop.xlane.xlu0 %341
    %v343 = vadd.f32 %v253, %v254
    %344 = vadd.xlane.f32.xlu0 %v343
    %v345 = vpop.xlane.xlu0 %344
    %v346 = vadd.f32 %v255, %v256
    %347 = vadd.xlane.f32.xlu0 %v346
    %v348 = vpop.xlane.xlu0 %347
    %v349 = vadd.f32 %v257, %v258
    %350 = vadd.xlane.f32.xlu0 %v349
    %v351 = vpop.xlane.xlu0 %350
    %v352 = vadd.f32 %v259, %v260
    %353 = vadd.xlane.f32.xlu0 %v352
    %v354 = vpop.xlane.xlu0 %353
    %v355 = vadd.f32 %v261, %v262
    %356 = vadd.xlane.f32.xlu0 %v355
    %v357 = vpop.xlane.xlu0 %356
    %v358 = vadd.f32 %v263, %v264
    %359 = vadd.xlane.f32.xlu0 %v358
    %v360 = vpop.xlane.xlu0 %359
    %v361 = vadd.f32 %v267, 1e-05
    %v362 = vadd.f32 %v270, 1e-05
    %v363 = vadd.f32 %v273, 1e-05
    %v364 = vadd.f32 %v276, 1e-05
    %v365 = vadd.f32 %v279, 1e-05
    %v366 = vadd.f32 %v282, 1e-05
    %v367 = vadd.f32 %v285, 1e-05
    %v368 = vadd.f32 %v288, 1e-05
    %v369 = vadd.f32 %v291, 1e-05
    %v370 = vadd.f32 %v294, 1e-05
    %v371 = vadd.f32 %v297, 1e-05
    %v372 = vadd.f32 %v300, 1e-05
    %v373 = vadd.f32 %v303, 1e-05
    %v374 = vadd.f32 %v306, 1e-05
    %v375 = vadd.f32 %v309, 1e-05
    %v376 = vadd.f32 %v312, 1e-05
    %v377 = vadd.f32 %v315, 1e-05
    %v378 = vadd.f32 %v318, 1e-05
    %v379 = vadd.f32 %v321, 1e-05
    %v380 = vadd.f32 %v324, 1e-05
    %v381 = vadd.f32 %v327, 1e-05
    %v382 = vadd.f32 %v330, 1e-05
    %v383 = vadd.f32 %v333, 1e-05
    %v384 = vadd.f32 %v336, 1e-05
    %v385 = vadd.f32 %v339, 1e-05
    %v386 = vadd.f32 %v342, 1e-05
    %v387 = vadd.f32 %v345, 1e-05
    %v388 = vadd.f32 %v348, 1e-05
    %v389 = vadd.f32 %v351, 1e-05
    %v390 = vadd.f32 %v354, 1e-05
    %v391 = vadd.f32 %v357, 1e-05
    %v392 = vadd.f32 %v360, 1e-05
    %v393 = vrsqrt.pop %v361
    %v394 = vmul.f32 %v393, %v361
    %v395 = vmul.f32 %v394, %v393
    %v396 = vmul.f32 0.5, %v395
    %v397 = vsub.f32 1.5, %v396
    %v398 = vmul.f32 %v393, %v397
    %vm399 = vweird.f32 %v361
    %vm400 = vweird.f32 %v393
    %vm401 = vmor %vm399, %vm400
    %v402 = vsel %vm401, %v393, %v398
    %v403 = vrsqrt.pop %v362
    %v404 = vmul.f32 %v403, %v362
    %v405 = vmul.f32 %v404, %v403
    %v406 = vmul.f32 0.5, %v405
    %v407 = vsub.f32 1.5, %v406
    %v408 = vmul.f32 %v403, %v407
    %vm409 = vweird.f32 %v362
    %vm410 = vweird.f32 %v403
    %vm411 = vmor %vm409, %vm410
    %v412 = vsel %vm411, %v403, %v408
    %v413 = vrsqrt.pop %v363
    %v414 = vmul.f32 %v413, %v363
    %v415 = vmul.f32 %v414, %v413
    %v416 = vmul.f32 0.5, %v415
    %v417 = vsub.f32 1.5, %v416
    %v418 = vmul.f32 %v413, %v417
    %vm419 = vweird.f32 %v363
    %vm420 = vweird.f32 %v413
    %vm421 = vmor %vm419, %vm420
    %v422 = vsel %vm421, %v413, %v418
    %v423 = vrsqrt.pop %v364
    %v424 = vmul.f32 %v423, %v364
    %v425 = vmul.f32 %v424, %v423
    %v426 = vmul.f32 0.5, %v425
    %v427 = vsub.f32 1.5, %v426
    %v428 = vmul.f32 %v423, %v427
    %vm429 = vweird.f32 %v364
    %vm430 = vweird.f32 %v423
    %vm431 = vmor %vm429, %vm430
    %v432 = vsel %vm431, %v423, %v428
    %v433 = vrsqrt.pop %v365
    %v434 = vmul.f32 %v433, %v365
    %v435 = vmul.f32 %v434, %v433
    %v436 = vmul.f32 0.5, %v435
    %v437 = vsub.f32 1.5, %v436
    %v438 = vmul.f32 %v433, %v437
    %vm439 = vweird.f32 %v365
    %vm440 = vweird.f32 %v433
    %vm441 = vmor %vm439, %vm440
    %v442 = vsel %vm441, %v433, %v438
    %v443 = vrsqrt.pop %v366
    %v444 = vmul.f32 %v443, %v366
    %v445 = vmul.f32 %v444, %v443
    %v446 = vmul.f32 0.5, %v445
    %v447 = vsub.f32 1.5, %v446
    %v448 = vmul.f32 %v443, %v447
    %vm449 = vweird.f32 %v366
    %vm450 = vweird.f32 %v443
    %vm451 = vmor %vm449, %vm450
    %v452 = vsel %vm451, %v443, %v448
    %v453 = vrsqrt.pop %v367
    %v454 = vmul.f32 %v453, %v367
    %v455 = vmul.f32 %v454, %v453
    %v456 = vmul.f32 0.5, %v455
    %v457 = vsub.f32 1.5, %v456
    %v458 = vmul.f32 %v453, %v457
    %vm459 = vweird.f32 %v367
    %vm460 = vweird.f32 %v453
    %vm461 = vmor %vm459, %vm460
    %v462 = vsel %vm461, %v453, %v458
    %v463 = vrsqrt.pop %v368
    %v464 = vmul.f32 %v463, %v368
    %v465 = vmul.f32 %v464, %v463
    %v466 = vmul.f32 0.5, %v465
    %v467 = vsub.f32 1.5, %v466
    %v468 = vmul.f32 %v463, %v467
    %vm469 = vweird.f32 %v368
    %vm470 = vweird.f32 %v463
    %vm471 = vmor %vm469, %vm470
    %v472 = vsel %vm471, %v463, %v468
    %v473 = vrsqrt.pop %v369
    %v474 = vmul.f32 %v473, %v369
    %v475 = vmul.f32 %v474, %v473
    %v476 = vmul.f32 0.5, %v475
    %v477 = vsub.f32 1.5, %v476
    %v478 = vmul.f32 %v473, %v477
    %vm479 = vweird.f32 %v369
    %vm480 = vweird.f32 %v473
    %vm481 = vmor %vm479, %vm480
    %v482 = vsel %vm481, %v473, %v478
    %v483 = vrsqrt.pop %v370
    %v484 = vmul.f32 %v483, %v370
    %v485 = vmul.f32 %v484, %v483
    %v486 = vmul.f32 0.5, %v485
    %v487 = vsub.f32 1.5, %v486
    %v488 = vmul.f32 %v483, %v487
    %vm489 = vweird.f32 %v370
    %vm490 = vweird.f32 %v483
    %vm491 = vmor %vm489, %vm490
    %v492 = vsel %vm491, %v483, %v488
    %v493 = vrsqrt.pop %v371
    %v494 = vmul.f32 %v493, %v371
    %v495 = vmul.f32 %v494, %v493
    %v496 = vmul.f32 0.5, %v495
    %v497 = vsub.f32 1.5, %v496
    %v498 = vmul.f32 %v493, %v497
    %vm499 = vweird.f32 %v371
    %vm500 = vweird.f32 %v493
    %vm501 = vmor %vm499, %vm500
    %v502 = vsel %vm501, %v493, %v498
    %v503 = vrsqrt.pop %v372
    %v504 = vmul.f32 %v503, %v372
    %v505 = vmul.f32 %v504, %v503
    %v506 = vmul.f32 0.5, %v505
    %v507 = vsub.f32 1.5, %v506
    %v508 = vmul.f32 %v503, %v507
    %vm509 = vweird.f32 %v372
    %vm510 = vweird.f32 %v503
    %vm511 = vmor %vm509, %vm510
    %v512 = vsel %vm511, %v503, %v508
    %v513 = vrsqrt.pop %v373
    %v514 = vmul.f32 %v513, %v373
    %v515 = vmul.f32 %v514, %v513
    %v516 = vmul.f32 0.5, %v515
    %v517 = vsub.f32 1.5, %v516
    %v518 = vmul.f32 %v513, %v517
    %vm519 = vweird.f32 %v373
    %vm520 = vweird.f32 %v513
    %vm521 = vmor %vm519, %vm520
    %v522 = vsel %vm521, %v513, %v518
    %v523 = vrsqrt.pop %v374
    %v524 = vmul.f32 %v523, %v374
    %v525 = vmul.f32 %v524, %v523
    %v526 = vmul.f32 0.5, %v525
    %v527 = vsub.f32 1.5, %v526
    %v528 = vmul.f32 %v523, %v527
    %vm529 = vweird.f32 %v374
    %vm530 = vweird.f32 %v523
    %vm531 = vmor %vm529, %vm530
    %v532 = vsel %vm531, %v523, %v528
    %v533 = vrsqrt.pop %v375
    %v534 = vmul.f32 %v533, %v375
    %v535 = vmul.f32 %v534, %v533
    %v536 = vmul.f32 0.5, %v535
    %v537 = vsub.f32 1.5, %v536
    %v538 = vmul.f32 %v533, %v537
    %vm539 = vweird.f32 %v375
    %vm540 = vweird.f32 %v533
    %vm541 = vmor %vm539, %vm540
    %v542 = vsel %vm541, %v533, %v538
    %v543 = vrsqrt.pop %v376
    %v544 = vmul.f32 %v543, %v376
    %v545 = vmul.f32 %v544, %v543
    %v546 = vmul.f32 0.5, %v545
    %v547 = vsub.f32 1.5, %v546
    %v548 = vmul.f32 %v543, %v547
    %vm549 = vweird.f32 %v376
    %vm550 = vweird.f32 %v543
    %vm551 = vmor %vm549, %vm550
    %v552 = vsel %vm551, %v543, %v548
    %v553 = vrsqrt.pop %v377
    %v554 = vmul.f32 %v553, %v377
    %v555 = vmul.f32 %v554, %v553
    %v556 = vmul.f32 0.5, %v555
    %v557 = vsub.f32 1.5, %v556
    %v558 = vmul.f32 %v553, %v557
    %vm559 = vweird.f32 %v377
    %vm560 = vweird.f32 %v553
    %vm561 = vmor %vm559, %vm560
    %v562 = vsel %vm561, %v553, %v558
    %v563 = vrsqrt.pop %v378
    %v564 = vmul.f32 %v563, %v378
    %v565 = vmul.f32 %v564, %v563
    %v566 = vmul.f32 0.5, %v565
    %v567 = vsub.f32 1.5, %v566
    %v568 = vmul.f32 %v563, %v567
    %vm569 = vweird.f32 %v378
    %vm570 = vweird.f32 %v563
    %vm571 = vmor %vm569, %vm570
    %v572 = vsel %vm571, %v563, %v568
    %v573 = vrsqrt.pop %v379
    %v574 = vmul.f32 %v573, %v379
    %v575 = vmul.f32 %v574, %v573
    %v576 = vmul.f32 0.5, %v575
    %v577 = vsub.f32 1.5, %v576
    %v578 = vmul.f32 %v573, %v577
    %vm579 = vweird.f32 %v379
    %vm580 = vweird.f32 %v573
    %vm581 = vmor %vm579, %vm580
    %v582 = vsel %vm581, %v573, %v578
    %v583 = vrsqrt.pop %v380
    %v584 = vmul.f32 %v583, %v380
    %v585 = vmul.f32 %v584, %v583
    %v586 = vmul.f32 0.5, %v585
    %v587 = vsub.f32 1.5, %v586
    %v588 = vmul.f32 %v583, %v587
    %vm589 = vweird.f32 %v380
    %vm590 = vweird.f32 %v583
    %vm591 = vmor %vm589, %vm590
    %v592 = vsel %vm591, %v583, %v588
    %v593 = vrsqrt.pop %v381
    %v594 = vmul.f32 %v593, %v381
    %v595 = vmul.f32 %v594, %v593
    %v596 = vmul.f32 0.5, %v595
    %v597 = vsub.f32 1.5, %v596
    %v598 = vmul.f32 %v593, %v597
    %vm599 = vweird.f32 %v381
    %vm600 = vweird.f32 %v593
    %vm601 = vmor %vm599, %vm600
    %v602 = vsel %vm601, %v593, %v598
    %v603 = vrsqrt.pop %v382
    %v604 = vmul.f32 %v603, %v382
    %v605 = vmul.f32 %v604, %v603
    %v606 = vmul.f32 0.5, %v605
    %v607 = vsub.f32 1.5, %v606
    %v608 = vmul.f32 %v603, %v607
    %vm609 = vweird.f32 %v382
    %vm610 = vweird.f32 %v603
    %vm611 = vmor %vm609, %vm610
    %v612 = vsel %vm611, %v603, %v608
    %v613 = vrsqrt.pop %v383
    %v614 = vmul.f32 %v613, %v383
    %v615 = vmul.f32 %v614, %v613
    %v616 = vmul.f32 0.5, %v615
    %v617 = vsub.f32 1.5, %v616
    %v618 = vmul.f32 %v613, %v617
    %vm619 = vweird.f32 %v383
    %vm620 = vweird.f32 %v613
    %vm621 = vmor %vm619, %vm620
    %v622 = vsel %vm621, %v613, %v618
    %v623 = vrsqrt.pop %v384
    %v624 = vmul.f32 %v623, %v384
    %v625 = vmul.f32 %v624, %v623
    %v626 = vmul.f32 0.5, %v625
    %v627 = vsub.f32 1.5, %v626
    %v628 = vmul.f32 %v623, %v627
    %vm629 = vweird.f32 %v384
    %vm630 = vweird.f32 %v623
    %vm631 = vmor %vm629, %vm630
    %v632 = vsel %vm631, %v623, %v628
    %v633 = vrsqrt.pop %v385
    %v634 = vmul.f32 %v633, %v385
    %v635 = vmul.f32 %v634, %v633
    %v636 = vmul.f32 0.5, %v635
    %v637 = vsub.f32 1.5, %v636
    %v638 = vmul.f32 %v633, %v637
    %vm639 = vweird.f32 %v385
    %vm640 = vweird.f32 %v633
    %vm641 = vmor %vm639, %vm640
    %v642 = vsel %vm641, %v633, %v638
    %v643 = vrsqrt.pop %v386
    %v644 = vmul.f32 %v643, %v386
    %v645 = vmul.f32 %v644, %v643
    %v646 = vmul.f32 0.5, %v645
    %v647 = vsub.f32 1.5, %v646
    %v648 = vmul.f32 %v643, %v647
    %vm649 = vweird.f32 %v386
    %vm650 = vweird.f32 %v643
    %vm651 = vmor %vm649, %vm650
    %v652 = vsel %vm651, %v643, %v648
    %v653 = vrsqrt.pop %v387
    %v654 = vmul.f32 %v653, %v387
    %v655 = vmul.f32 %v654, %v653
    %v656 = vmul.f32 0.5, %v655
    %v657 = vsub.f32 1.5, %v656
    %v658 = vmul.f32 %v653, %v657
    %vm659 = vweird.f32 %v387
    %vm660 = vweird.f32 %v653
    %vm661 = vmor %vm659, %vm660
    %v662 = vsel %vm661, %v653, %v658
    %v663 = vrsqrt.pop %v388
    %v664 = vmul.f32 %v663, %v388
    %v665 = vmul.f32 %v664, %v663
    %v666 = vmul.f32 0.5, %v665
    %v667 = vsub.f32 1.5, %v666
    %v668 = vmul.f32 %v663, %v667
    %vm669 = vweird.f32 %v388
    %vm670 = vweird.f32 %v663
    %vm671 = vmor %vm669, %vm670
    %v672 = vsel %vm671, %v663, %v668
    %v673 = vrsqrt.pop %v389
    %v674 = vmul.f32 %v673, %v389
    %v675 = vmul.f32 %v674, %v673
    %v676 = vmul.f32 0.5, %v675
    %v677 = vsub.f32 1.5, %v676
    %v678 = vmul.f32 %v673, %v677
    %vm679 = vweird.f32 %v389
    %vm680 = vweird.f32 %v673
    %vm681 = vmor %vm679, %vm680
    %v682 = vsel %vm681, %v673, %v678
    %v683 = vrsqrt.pop %v390
    %v684 = vmul.f32 %v683, %v390
    %v685 = vmul.f32 %v684, %v683
    %v686 = vmul.f32 0.5, %v685
    %v687 = vsub.f32 1.5, %v686
    %v688 = vmul.f32 %v683, %v687
    %vm689 = vweird.f32 %v390
    %vm690 = vweird.f32 %v683
    %vm691 = vmor %vm689, %vm690
    %v692 = vsel %vm691, %v683, %v688
    %v693 = vrsqrt.pop %v391
    %v694 = vmul.f32 %v693, %v391
    %v695 = vmul.f32 %v694, %v693
    %v696 = vmul.f32 0.5, %v695
    %v697 = vsub.f32 1.5, %v696
    %v698 = vmul.f32 %v693, %v697
    %vm699 = vweird.f32 %v391
    %vm700 = vweird.f32 %v693
    %vm701 = vmor %vm699, %vm700
    %v702 = vsel %vm701, %v693, %v698
    %v703 = vrsqrt.pop %v392
    %v704 = vmul.f32 %v703, %v392
    %v705 = vmul.f32 %v704, %v703
    %v706 = vmul.f32 0.5, %v705
    %v707 = vsub.f32 1.5, %v706
    %v708 = vmul.f32 %v703, %v707
    %vm709 = vweird.f32 %v392
    %vm710 = vweird.f32 %v703
    %vm711 = vmor %vm709, %vm710
    %v712 = vsel %vm711, %v703, %v708
    %v713 = vmul.f32 %v137, %v402
    %v714 = vmul.f32 %v138, %v402
    %v715 = vmul.f32 %v139, %v412
    %v716 = vmul.f32 %v140, %v412
    %v717 = vmul.f32 %v141, %v422
    %v718 = vmul.f32 %v142, %v422
    %v719 = vmul.f32 %v143, %v432
    %v720 = vmul.f32 %v144, %v432
    %v721 = vmul.f32 %v145, %v442
    %v722 = vmul.f32 %v146, %v442
    %v723 = vmul.f32 %v147, %v452
    %v724 = vmul.f32 %v148, %v452
    %v725 = vmul.f32 %v149, %v462
    %v726 = vmul.f32 %v150, %v462
    %v727 = vmul.f32 %v151, %v472
    %v728 = vmul.f32 %v152, %v472
    %v729 = vmul.f32 %v153, %v482
    %v730 = vmul.f32 %v154, %v482
    %v731 = vmul.f32 %v155, %v492
    %v732 = vmul.f32 %v156, %v492
    %v733 = vmul.f32 %v157, %v502
    %v734 = vmul.f32 %v158, %v502
    %v735 = vmul.f32 %v159, %v512
    %v736 = vmul.f32 %v160, %v512
    %v737 = vmul.f32 %v161, %v522
    %v738 = vmul.f32 %v162, %v522
    %v739 = vmul.f32 %v163, %v532
    %v740 = vmul.f32 %v164, %v532
    %v741 = vmul.f32 %v165, %v542
    %v742 = vmul.f32 %v166, %v542
    %v743 = vmul.f32 %v167, %v552
    %v744 = vmul.f32 %v168, %v552
    %v745 = vmul.f32 %v169, %v562
    %v746 = vmul.f32 %v170, %v562
    %v747 = vmul.f32 %v171, %v572
    %v748 = vmul.f32 %v172, %v572
    %v749 = vmul.f32 %v173, %v582
    %v750 = vmul.f32 %v174, %v582
    %v751 = vmul.f32 %v175, %v592
    %v752 = vmul.f32 %v176, %v592
    %v753 = vmul.f32 %v177, %v602
    %v754 = vmul.f32 %v178, %v602
    %v755 = vmul.f32 %v179, %v612
    %v756 = vmul.f32 %v180, %v612
    %v757 = vmul.f32 %v181, %v622
    %v758 = vmul.f32 %v182, %v622
    %v759 = vmul.f32 %v183, %v632
    %v760 = vmul.f32 %v184, %v632
    %v761 = vmul.f32 %v185, %v642
    %v762 = vmul.f32 %v186, %v642
    %v763 = vmul.f32 %v187, %v652
    %v764 = vmul.f32 %v188, %v652
    %v765 = vmul.f32 %v189, %v662
    %v766 = vmul.f32 %v190, %v662
    %v767 = vmul.f32 %v191, %v672
    %v768 = vmul.f32 %v192, %v672
    %v769 = vmul.f32 %v193, %v682
    %v770 = vmul.f32 %v194, %v682
    %v771 = vmul.f32 %v195, %v692
    %v772 = vmul.f32 %v196, %v692
    %v773 = vmul.f32 %v197, %v702
    %v774 = vmul.f32 %v198, %v702
    %v775 = vmul.f32 %v199, %v712
    %v776 = vmul.f32 %v200, %v712
    %777 = vxpose.xlu0.b32.start [1/16] %v713, 128
    %778 = vxpose.xlu0.b32.cont [2/16] %v715, 128
    %779 = vxpose.xlu0.b32.cont [3/16] %v717, 128
    %780 = vxpose.xlu0.b32.cont [4/16] %v719, 128
    %781 = vxpose.xlu0.b32.cont [5/16] %v721, 128
    %782 = vxpose.xlu0.b32.cont [6/16] %v723, 128
    %783 = vxpose.xlu0.b32.cont [7/16] %v725, 128
    %784 = vxpose.xlu0.b32.cont [8/16] %v727, 128
    %785 = vxpose.xlu0.b32.cont [9/16] %v729, 128
    %786 = vxpose.xlu0.b32.cont [10/16] %v731, 128
    %787 = vxpose.xlu0.b32.cont [11/16] %v733, 128
    %788 = vxpose.xlu0.b32.cont [12/16] %v735, 128
    %789 = vxpose.xlu0.b32.cont [13/16] %v737, 128
    %790 = vxpose.xlu0.b32.cont [14/16] %v739, 128
    %791 = vxpose.xlu0.b32.cont [15/16] %v741, 128
    %792 = vxpose.xlu0.b32.end [16/16] %v743, 128
    %v793 = vpop.trf.xlu0
    %v794 = vpop.trf.xlu0
    %v795 = vpop.trf.xlu0
    %v796 = vpop.trf.xlu0
    %v797 = vpop.trf.xlu0
    %v798 = vpop.trf.xlu0
    %v799 = vpop.trf.xlu0
    %v800 = vpop.trf.xlu0
    %v801 = vpop.trf.xlu0
    %v802 = vpop.trf.xlu0
    %v803 = vpop.trf.xlu0
    %v804 = vpop.trf.xlu0
    %v805 = vpop.trf.xlu0
    %v806 = vpop.trf.xlu0
    %v807 = vpop.trf.xlu0
    %v808 = vpop.trf.xlu0
    %809 = vxpose.xlu0.b32.start [1/16] %v714, 128
    %810 = vxpose.xlu0.b32.cont [2/16] %v716, 128
    %811 = vxpose.xlu0.b32.cont [3/16] %v718, 128
    %812 = vxpose.xlu0.b32.cont [4/16] %v720, 128
    %813 = vxpose.xlu0.b32.cont [5/16] %v722, 128
    %814 = vxpose.xlu0.b32.cont [6/16] %v724, 128
    %815 = vxpose.xlu0.b32.cont [7/16] %v726, 128
    %816 = vxpose.xlu0.b32.cont [8/16] %v728, 128
    %817 = vxpose.xlu0.b32.cont [9/16] %v730, 128
    %818 = vxpose.xlu0.b32.cont [10/16] %v732, 128
    %819 = vxpose.xlu0.b32.cont [11/16] %v734, 128
    %820 = vxpose.xlu0.b32.cont [12/16] %v736, 128
    %821 = vxpose.xlu0.b32.cont [13/16] %v738, 128
    %822 = vxpose.xlu0.b32.cont [14/16] %v740, 128
    %823 = vxpose.xlu0.b32.cont [15/16] %v742, 128
    %824 = vxpose.xlu0.b32.end [16/16] %v744, 128
    %v825 = vpop.trf.xlu0
    %v826 = vpop.trf.xlu0
    %v827 = vpop.trf.xlu0
    %v828 = vpop.trf.xlu0
    %v829 = vpop.trf.xlu0
    %v830 = vpop.trf.xlu0
    %v831 = vpop.trf.xlu0
    %v832 = vpop.trf.xlu0
    %v833 = vpop.trf.xlu0
    %v834 = vpop.trf.xlu0
    %v835 = vpop.trf.xlu0
    %v836 = vpop.trf.xlu0
    %v837 = vpop.trf.xlu0
    %v838 = vpop.trf.xlu0
    %v839 = vpop.trf.xlu0
    %v840 = vpop.trf.xlu0
    %841 = vxpose.xlu0.b32.start [1/16] %v745, 128
    %842 = vxpose.xlu0.b32.cont [2/16] %v747, 128
    %843 = vxpose.xlu0.b32.cont [3/16] %v749, 128
    %844 = vxpose.xlu0.b32.cont [4/16] %v751, 128
    %845 = vxpose.xlu0.b32.cont [5/16] %v753, 128
    %846 = vxpose.xlu0.b32.cont [6/16] %v755, 128
    %847 = vxpose.xlu0.b32.cont [7/16] %v757, 128
    %848 = vxpose.xlu0.b32.cont [8/16] %v759, 128
    %849 = vxpose.xlu0.b32.cont [9/16] %v761, 128
    %850 = vxpose.xlu0.b32.cont [10/16] %v763, 128
    %851 = vxpose.xlu0.b32.cont [11/16] %v765, 128
    %852 = vxpose.xlu0.b32.cont [12/16] %v767, 128
    %853 = vxpose.xlu0.b32.cont [13/16] %v769, 128
    %854 = vxpose.xlu0.b32.cont [14/16] %v771, 128
    %855 = vxpose.xlu0.b32.cont [15/16] %v773, 128
    %856 = vxpose.xlu0.b32.end [16/16] %v775, 128
    %v857 = vpop.trf.xlu0
    %v858 = vpop.trf.xlu0
    %v859 = vpop.trf.xlu0
    %v860 = vpop.trf.xlu0
    %v861 = vpop.trf.xlu0
    %v862 = vpop.trf.xlu0
    %v863 = vpop.trf.xlu0
    %v864 = vpop.trf.xlu0
    %v865 = vpop.trf.xlu0
    %v866 = vpop.trf.xlu0
    %v867 = vpop.trf.xlu0
    %v868 = vpop.trf.xlu0
    %v869 = vpop.trf.xlu0
    %v870 = vpop.trf.xlu0
    %v871 = vpop.trf.xlu0
    %v872 = vpop.trf.xlu0
    %873 = vxpose.xlu0.b32.start [1/16] %v746, 128
    %874 = vxpose.xlu0.b32.cont [2/16] %v748, 128
    %875 = vxpose.xlu0.b32.cont [3/16] %v750, 128
    %876 = vxpose.xlu0.b32.cont [4/16] %v752, 128
    %877 = vxpose.xlu0.b32.cont [5/16] %v754, 128
    %878 = vxpose.xlu0.b32.cont [6/16] %v756, 128
    %879 = vxpose.xlu0.b32.cont [7/16] %v758, 128
    %880 = vxpose.xlu0.b32.cont [8/16] %v760, 128
    %881 = vxpose.xlu0.b32.cont [9/16] %v762, 128
    %882 = vxpose.xlu0.b32.cont [10/16] %v764, 128
    %883 = vxpose.xlu0.b32.cont [11/16] %v766, 128
    %884 = vxpose.xlu0.b32.cont [12/16] %v768, 128
    %885 = vxpose.xlu0.b32.cont [13/16] %v770, 128
    %886 = vxpose.xlu0.b32.cont [14/16] %v772, 128
    %887 = vxpose.xlu0.b32.cont [15/16] %v774, 128
    %888 = vxpose.xlu0.b32.end [16/16] %v776, 128
    %v889 = vpop.trf.xlu0
    %v890 = vpop.trf.xlu0
    %v891 = vpop.trf.xlu0
    %v892 = vpop.trf.xlu0
    %v893 = vpop.trf.xlu0
    %v894 = vpop.trf.xlu0
    %v895 = vpop.trf.xlu0
    %v896 = vpop.trf.xlu0
    %v897 = vpop.trf.xlu0
    %v898 = vpop.trf.xlu0
    %v899 = vpop.trf.xlu0
    %v900 = vpop.trf.xlu0
    %v901 = vpop.trf.xlu0
    %v902 = vpop.trf.xlu0
    %v903 = vpop.trf.xlu0
    %v904 = vpop.trf.xlu0
    %905 = vst [vmem:[%s4] sm:$0xff] %v793
    %906 = vst [vmem:[%s4 + $0x8] sm:$0xff] %v857
    %907 = vst [vmem:[%s4 + $0x10] sm:$0xff] %v794
    %908 = vst [vmem:[%s4 + $0x18] sm:$0xff] %v858
    %909 = vst [vmem:[%s4 + $0x20] sm:$0xff] %v795
    %910 = vst [vmem:[%s4 + $0x28] sm:$0xff] %v859
    %911 = vst [vmem:[%s4 + $0x30] sm:$0xff] %v796
    %912 = vst [vmem:[%s4 + $0x38] sm:$0xff] %v860
    %913 = vst [vmem:[%s4 + $0x40] sm:$0xff] %v797
    %914 = vst [vmem:[%s4 + $0x48] sm:$0xff] %v861
    %915 = vst [vmem:[%s4 + $0x50] sm:$0xff] %v798
    %916 = vst [vmem:[%s4 + $0x58] sm:$0xff] %v862
    %917 = vst [vmem:[%s4 + $0x60] sm:$0xff] %v799
    %918 = vst [vmem:[%s4 + $0x68] sm:$0xff] %v863
    %919 = vst [vmem:[%s4 + $0x70] sm:$0xff] %v800
    %920 = vst [vmem:[%s4 + $0x78] sm:$0xff] %v864
    %921 = vst [vmem:[%s4 + $0x80] sm:$0xff] %v801
    %922 = vst [vmem:[%s4 + $0x88] sm:$0xff] %v865
    %923 = vst [vmem:[%s4 + $0x90] sm:$0xff] %v802
    %924 = vst [vmem:[%s4 + $0x98] sm:$0xff] %v866
    %925 = vst [vmem:[%s4 + $0xa0] sm:$0xff] %v803
    %926 = vst [vmem:[%s4 + $0xa8] sm:$0xff] %v867
    %927 = vst [vmem:[%s4 + $0xb0] sm:$0xff] %v804
    %928 = vst [vmem:[%s4 + $0xb8] sm:$0xff] %v868
    %929 = vst [vmem:[%s4 + $0xc0] sm:$0xff] %v805
    %930 = vst [vmem:[%s4 + $0xc8] sm:$0xff] %v869
    %931 = vst [vmem:[%s4 + $0xd0] sm:$0xff] %v806
    %932 = vst [vmem:[%s4 + $0xd8] sm:$0xff] %v870
    %933 = vst [vmem:[%s4 + $0xe0] sm:$0xff] %v807
    %934 = vst [vmem:[%s4 + $0xe8] sm:$0xff] %v871
    %935 = vst [vmem:[%s4 + $0xf0] sm:$0xff] %v808
    %936 = vst [vmem:[%s4 + $0xf8] sm:$0xff] %v872
    %937 = vst [vmem:[%s4 + $0x100] sm:$0xff] %v825
    %938 = vst [vmem:[%s4 + $0x108] sm:$0xff] %v889
    %939 = vst [vmem:[%s4 + $0x110] sm:$0xff] %v826
    %940 = vst [vmem:[%s4 + $0x118] sm:$0xff] %v890
    %941 = vst [vmem:[%s4 + $0x120] sm:$0xff] %v827
    %942 = vst [vmem:[%s4 + $0x128] sm:$0xff] %v891
    %943 = vst [vmem:[%s4 + $0x130] sm:$0xff] %v828
    %944 = vst [vmem:[%s4 + $0x138] sm:$0xff] %v892
    %945 = vst [vmem:[%s4 + $0x140] sm:$0xff] %v829
    %946 = vst [vmem:[%s4 + $0x148] sm:$0xff] %v893
    %947 = vst [vmem:[%s4 + $0x150] sm:$0xff] %v830
    %948 = vst [vmem:[%s4 + $0x158] sm:$0xff] %v894
    %949 = vst [vmem:[%s4 + $0x160] sm:$0xff] %v831
    %950 = vst [vmem:[%s4 + $0x168] sm:$0xff] %v895
    %951 = vst [vmem:[%s4 + $0x170] sm:$0xff] %v832
    %952 = vst [vmem:[%s4 + $0x178] sm:$0xff] %v896
    %953 = vst [vmem:[%s4 + $0x180] sm:$0xff] %v833
    %954 = vst [vmem:[%s4 + $0x188] sm:$0xff] %v897
    %955 = vst [vmem:[%s4 + $0x190] sm:$0xff] %v834
    %956 = vst [vmem:[%s4 + $0x198] sm:$0xff] %v898
    %957 = vst [vmem:[%s4 + $0x1a0] sm:$0xff] %v835
    %958 = vst [vmem:[%s4 + $0x1a8] sm:$0xff] %v899
    %959 = vst [vmem:[%s4 + $0x1b0] sm:$0xff] %v836
    %960 = vst [vmem:[%s4 + $0x1b8] sm:$0xff] %v900
    %961 = vst [vmem:[%s4 + $0x1c0] sm:$0xff] %v837
    %962 = vst [vmem:[%s4 + $0x1c8] sm:$0xff] %v901
    %963 = vst [vmem:[%s4 + $0x1d0] sm:$0xff] %v838
    %964 = vst [vmem:[%s4 + $0x1d8] sm:$0xff] %v902
    %965 = vst [vmem:[%s4 + $0x1e0] sm:$0xff] %v839
    %966 = vst [vmem:[%s4 + $0x1e8] sm:$0xff] %v903
    %967 = vst [vmem:[%s4 + $0x1f0] sm:$0xff] %v840
    %968 = vst [vmem:[%s4 + $0x1f8] sm:$0xff] %v904
    %v969 = vld [vmem:[#allocation4] sm:$0xff]
    %v970 = vld [vmem:[#allocation4 + $0x8] sm:$0xff]
    %v971 = vld [vmem:[#allocation4 + $0x10] sm:$0xff]
    %v972 = vld [vmem:[#allocation4 + $0x18] sm:$0xff]
    %v973 = vld [vmem:[#allocation4 + $0x20] sm:$0xff]
    %v974 = vld [vmem:[#allocation4 + $0x28] sm:$0xff]
    %v975 = vld [vmem:[#allocation4 + $0x30] sm:$0xff]
    %v976 = vld [vmem:[#allocation4 + $0x38] sm:$0xff]
    %v977 = vld [vmem:[#allocation4 + $0x40] sm:$0xff]
    %v978 = vld [vmem:[#allocation4 + $0x48] sm:$0xff]
    %v979 = vld [vmem:[#allocation4 + $0x50] sm:$0xff]
    %v980 = vld [vmem:[#allocation4 + $0x58] sm:$0xff]
    %v981 = vld [vmem:[#allocation4 + $0x60] sm:$0xff]
    %v982 = vld [vmem:[#allocation4 + $0x68] sm:$0xff]
    %v983 = vld [vmem:[#allocation4 + $0x70] sm:$0xff]
    %v984 = vld [vmem:[#allocation4 + $0x78] sm:$0xff]
    %v985 = vld [vmem:[#allocation4 + $0x80] sm:$0xff]
    %v986 = vld [vmem:[#allocation4 + $0x88] sm:$0xff]
    %v987 = vld [vmem:[#allocation4 + $0x90] sm:$0xff]
    %v988 = vld [vmem:[#allocation4 + $0x98] sm:$0xff]
    %v989 = vld [vmem:[#allocation4 + $0xa0] sm:$0xff]
    %v990 = vld [vmem:[#allocation4 + $0xa8] sm:$0xff]
    %v991 = vld [vmem:[#allocation4 + $0xb0] sm:$0xff]
    %v992 = vld [vmem:[#allocation4 + $0xb8] sm:$0xff]
    %v993 = vld [vmem:[#allocation4 + $0xc0] sm:$0xff]
    %v994 = vld [vmem:[#allocation4 + $0xc8] sm:$0xff]
    %v995 = vld [vmem:[#allocation4 + $0xd0] sm:$0xff]
    %v996 = vld [vmem:[#allocation4 + $0xd8] sm:$0xff]
    %v997 = vld [vmem:[#allocation4 + $0xe0] sm:$0xff]
    %v998 = vld [vmem:[#allocation4 + $0xe8] sm:$0xff]
    %v999 = vld [vmem:[#allocation4 + $0xf0] sm:$0xff]
    %v1000 = vld [vmem:[#allocation4 + $0xf8] sm:$0xff]
    %v1001 = vld [vmem:[#allocation4 + $0x100] sm:$0xff]
    %v1002 = vld [vmem:[#allocation4 + $0x108] sm:$0xff]
    %v1003 = vld [vmem:[#allocation4 + $0x110] sm:$0xff]
    %v1004 = vld [vmem:[#allocation4 + $0x118] sm:$0xff]
    %v1005 = vld [vmem:[#allocation4 + $0x120] sm:$0xff]
    %v1006 = vld [vmem:[#allocation4 + $0x128] sm:$0xff]
    %v1007 = vld [vmem:[#allocation4 + $0x130] sm:$0xff]
    %v1008 = vld [vmem:[#allocation4 + $0x138] sm:$0xff]
    %v1009 = vld [vmem:[#allocation4 + $0x140] sm:$0xff]
    %v1010 = vld [vmem:[#allocation4 + $0x148] sm:$0xff]
    %v1011 = vld [vmem:[#allocation4 + $0x150] sm:$0xff]
    %v1012 = vld [vmem:[#allocation4 + $0x158] sm:$0xff]
    %v1013 = vld [vmem:[#allocation4 + $0x160] sm:$0xff]
    %v1014 = vld [vmem:[#allocation4 + $0x168] sm:$0xff]
    %v1015 = vld [vmem:[#allocation4 + $0x170] sm:$0xff]
    %v1016 = vld [vmem:[#allocation4 + $0x178] sm:$0xff]
    %v1017 = vld [vmem:[#allocation4 + $0x180] sm:$0xff]
    %v1018 = vld [vmem:[#allocation4 + $0x188] sm:$0xff]
    %v1019 = vld [vmem:[#allocation4 + $0x190] sm:$0xff]
    %v1020 = vld [vmem:[#allocation4 + $0x198] sm:$0xff]
    %v1021 = vld [vmem:[#allocation4 + $0x1a0] sm:$0xff]
    %v1022 = vld [vmem:[#allocation4 + $0x1a8] sm:$0xff]
    %v1023 = vld [vmem:[#allocation4 + $0x1b0] sm:$0xff]
    %v1024 = vld [vmem:[#allocation4 + $0x1b8] sm:$0xff]
    %v1025 = vld [vmem:[#allocation4 + $0x1c0] sm:$0xff]
    %v1026 = vld [vmem:[#allocation4 + $0x1c8] sm:$0xff]
    %v1027 = vld [vmem:[#allocation4 + $0x1d0] sm:$0xff]
    %v1028 = vld [vmem:[#allocation4 + $0x1d8] sm:$0xff]
    %v1029 = vld [vmem:[#allocation4 + $0x1e0] sm:$0xff]
    %v1030 = vld [vmem:[#allocation4 + $0x1e8] sm:$0xff]
    %v1031 = vld [vmem:[#allocation4 + $0x1f0] sm:$0xff]
    %v1032 = vld [vmem:[#allocation4 + $0x1f8] sm:$0xff]
    %v1033 = vmul.f32 %v969, %v133
    %v1034 = vmul.f32 %v970, %v134
    %v1035 = vmul.f32 %v971, %v133
    %v1036 = vmul.f32 %v972, %v134
    %v1037 = vmul.f32 %v973, %v133
    %v1038 = vmul.f32 %v974, %v134
    %v1039 = vmul.f32 %v975, %v133
    %v1040 = vmul.f32 %v976, %v134
    %v1041 = vmul.f32 %v977, %v133
    %v1042 = vmul.f32 %v978, %v134
    %v1043 = vmul.f32 %v979, %v133
    %v1044 = vmul.f32 %v980, %v134
    %v1045 = vmul.f32 %v981, %v133
    %v1046 = vmul.f32 %v982, %v134
    %v1047 = vmul.f32 %v983, %v133
    %v1048 = vmul.f32 %v984, %v134
    %v1049 = vmul.f32 %v985, %v133
    %v1050 = vmul.f32 %v986, %v134
    %v1051 = vmul.f32 %v987, %v133
    %v1052 = vmul.f32 %v988, %v134
    %v1053 = vmul.f32 %v989, %v133
    %v1054 = vmul.f32 %v990, %v134
    %v1055 = vmul.f32 %v991, %v133
    %v1056 = vmul.f32 %v992, %v134
    %v1057 = vmul.f32 %v993, %v133
    %v1058 = vmul.f32 %v994, %v134
    %v1059 = vmul.f32 %v995, %v133
    %v1060 = vmul.f32 %v996, %v134
    %v1061 = vmul.f32 %v997, %v133
    %v1062 = vmul.f32 %v998, %v134
    %v1063 = vmul.f32 %v999, %v133
    %v1064 = vmul.f32 %v1000, %v134
    %v1065 = vmul.f32 %v1001, %v133
    %v1066 = vmul.f32 %v1002, %v134
    %v1067 = vmul.f32 %v1003, %v133
    %v1068 = vmul.f32 %v1004, %v134
    %v1069 = vmul.f32 %v1005, %v133
    %v1070 = vmul.f32 %v1006, %v134
    %v1071 = vmul.f32 %v1007, %v133
    %v1072 = vmul.f32 %v1008, %v134
    %v1073 = vmul.f32 %v1009, %v133
    %v1074 = vmul.f32 %v1010, %v134
    %v1075 = vmul.f32 %v1011, %v133
    %v1076 = vmul.f32 %v1012, %v134
    %v1077 = vmul.f32 %v1013, %v133
    %v1078 = vmul.f32 %v1014, %v134
    %v1079 = vmul.f32 %v1015, %v133
    %v1080 = vmul.f32 %v1016, %v134
    %v1081 = vmul.f32 %v1017, %v133
    %v1082 = vmul.f32 %v1018, %v134
    %v1083 = vmul.f32 %v1019, %v133
    %v1084 = vmul.f32 %v1020, %v134
    %v1085 = vmul.f32 %v1021, %v133
    %v1086 = vmul.f32 %v1022, %v134
    %v1087 = vmul.f32 %v1023, %v133
    %v1088 = vmul.f32 %v1024, %v134
    %v1089 = vmul.f32 %v1025, %v133
    %v1090 = vmul.f32 %v1026, %v134
    %v1091 = vmul.f32 %v1027, %v133
    %v1092 = vmul.f32 %v1028, %v134
    %v1093 = vmul.f32 %v1029, %v133
    %v1094 = vmul.f32 %v1030, %v134
    %v1095 = vmul.f32 %v1031, %v133
    %v1096 = vmul.f32 %v1032, %v134
    %v1097 = vmul.f32 %v1033, %v1033
    %v1098 = vmul.f32 %v1034, %v1034
    %v1099 = vmul.f32 %v1035, %v1035
    %v1100 = vmul.f32 %v1036, %v1036
    %v1101 = vmul.f32 %v1037, %v1037
    %v1102 = vmul.f32 %v1038, %v1038
    %v1103 = vmul.f32 %v1039, %v1039
    %v1104 = vmul.f32 %v1040, %v1040
    %v1105 = vmul.f32 %v1041, %v1041
    %v1106 = vmul.f32 %v1042, %v1042
    %v1107 = vmul.f32 %v1043, %v1043
    %v1108 = vmul.f32 %v1044, %v1044
    %v1109 = vmul.f32 %v1045, %v1045
    %v1110 = vmul.f32 %v1046, %v1046
    %v1111 = vmul.f32 %v1047, %v1047
    %v1112 = vmul.f32 %v1048, %v1048
    %v1113 = vmul.f32 %v1049, %v1049
    %v1114 = vmul.f32 %v1050, %v1050
    %v1115 = vmul.f32 %v1051, %v1051
    %v1116 = vmul.f32 %v1052, %v1052
    %v1117 = vmul.f32 %v1053, %v1053
    %v1118 = vmul.f32 %v1054, %v1054
    %v1119 = vmul.f32 %v1055, %v1055
    %v1120 = vmul.f32 %v1056, %v1056
    %v1121 = vmul.f32 %v1057, %v1057
    %v1122 = vmul.f32 %v1058, %v1058
    %v1123 = vmul.f32 %v1059, %v1059
    %v1124 = vmul.f32 %v1060, %v1060
    %v1125 = vmul.f32 %v1061, %v1061
    %v1126 = vmul.f32 %v1062, %v1062
    %v1127 = vmul.f32 %v1063, %v1063
    %v1128 = vmul.f32 %v1064, %v1064
    %v1129 = vmul.f32 %v1065, %v1065
    %v1130 = vmul.f32 %v1066, %v1066
    %v1131 = vmul.f32 %v1067, %v1067
    %v1132 = vmul.f32 %v1068, %v1068
    %v1133 = vmul.f32 %v1069, %v1069
    %v1134 = vmul.f32 %v1070, %v1070
    %v1135 = vmul.f32 %v1071, %v1071
    %v1136 = vmul.f32 %v1072, %v1072
    %v1137 = vmul.f32 %v1073, %v1073
    %v1138 = vmul.f32 %v1074, %v1074
    %v1139 = vmul.f32 %v1075, %v1075
    %v1140 = vmul.f32 %v1076, %v1076
    %v1141 = vmul.f32 %v1077, %v1077
    %v1142 = vmul.f32 %v1078, %v1078
    %v1143 = vmul.f32 %v1079, %v1079
    %v1144 = vmul.f32 %v1080, %v1080
    %v1145 = vmul.f32 %v1081, %v1081
    %v1146 = vmul.f32 %v1082, %v1082
    %v1147 = vmul.f32 %v1083, %v1083
    %v1148 = vmul.f32 %v1084, %v1084
    %v1149 = vmul.f32 %v1085, %v1085
    %v1150 = vmul.f32 %v1086, %v1086
    %v1151 = vmul.f32 %v1087, %v1087
    %v1152 = vmul.f32 %v1088, %v1088
    %v1153 = vmul.f32 %v1089, %v1089
    %v1154 = vmul.f32 %v1090, %v1090
    %v1155 = vmul.f32 %v1091, %v1091
    %v1156 = vmul.f32 %v1092, %v1092
    %v1157 = vmul.f32 %v1093, %v1093
    %v1158 = vmul.f32 %v1094, %v1094
    %v1159 = vmul.f32 %v1095, %v1095
    %v1160 = vmul.f32 %v1096, %v1096
    %v1161 = vadd.f32 %v1097, %v1098
    %1162 = vadd.xlane.f32.xlu0 %v1161
    %v1163 = vpop.xlane.xlu0 %1162
    %v1164 = vadd.f32 %v1099, %v1100
    %1165 = vadd.xlane.f32.xlu0 %v1164
    %v1166 = vpop.xlane.xlu0 %1165
    %v1167 = vadd.f32 %v1101, %v1102
    %1168 = vadd.xlane.f32.xlu0 %v1167
    %v1169 = vpop.xlane.xlu0 %1168
    %v1170 = vadd.f32 %v1103, %v1104
    %1171 = vadd.xlane.f32.xlu0 %v1170
    %v1172 = vpop.xlane.xlu0 %1171
    %v1173 = vadd.f32 %v1105, %v1106
    %1174 = vadd.xlane.f32.xlu0 %v1173
    %v1175 = vpop.xlane.xlu0 %1174
    %v1176 = vadd.f32 %v1107, %v1108
    %1177 = vadd.xlane.f32.xlu0 %v1176
    %v1178 = vpop.xlane.xlu0 %1177
    %v1179 = vadd.f32 %v1109, %v1110
    %1180 = vadd.xlane.f32.xlu0 %v1179
    %v1181 = vpop.xlane.xlu0 %1180
    %v1182 = vadd.f32 %v1111, %v1112
    %1183 = vadd.xlane.f32.xlu0 %v1182
    %v1184 = vpop.xlane.xlu0 %1183
    %v1185 = vadd.f32 %v1113, %v1114
    %1186 = vadd.xlane.f32.xlu0 %v1185
    %v1187 = vpop.xlane.xlu0 %1186
    %v1188 = vadd.f32 %v1115, %v1116
    %1189 = vadd.xlane.f32.xlu0 %v1188
    %v1190 = vpop.xlane.xlu0 %1189
    %v1191 = vadd.f32 %v1117, %v1118
    %1192 = vadd.xlane.f32.xlu0 %v1191
    %v1193 = vpop.xlane.xlu0 %1192
    %v1194 = vadd.f32 %v1119, %v1120
    %1195 = vadd.xlane.f32.xlu0 %v1194
    %v1196 = vpop.xlane.xlu0 %1195
    %v1197 = vadd.f32 %v1121, %v1122
    %1198 = vadd.xlane.f32.xlu0 %v1197
    %v1199 = vpop.xlane.xlu0 %1198
    %v1200 = vadd.f32 %v1123, %v1124
    %1201 = vadd.xlane.f32.xlu0 %v1200
    %v1202 = vpop.xlane.xlu0 %1201
    %v1203 = vadd.f32 %v1125, %v1126
    %1204 = vadd.xlane.f32.xlu0 %v1203
    %v1205 = vpop.xlane.xlu0 %1204
    %v1206 = vadd.f32 %v1127, %v1128
    %1207 = vadd.xlane.f32.xlu0 %v1206
    %v1208 = vpop.xlane.xlu0 %1207
    %v1209 = vadd.f32 %v1129, %v1130
    %1210 = vadd.xlane.f32.xlu0 %v1209
    %v1211 = vpop.xlane.xlu0 %1210
    %v1212 = vadd.f32 %v1131, %v1132
    %1213 = vadd.xlane.f32.xlu0 %v1212
    %v1214 = vpop.xlane.xlu0 %1213
    %v1215 = vadd.f32 %v1133, %v1134
    %1216 = vadd.xlane.f32.xlu0 %v1215
    %v1217 = vpop.xlane.xlu0 %1216
    %v1218 = vadd.f32 %v1135, %v1136
    %1219 = vadd.xlane.f32.xlu0 %v1218
    %v1220 = vpop.xlane.xlu0 %1219
    %v1221 = vadd.f32 %v1137, %v1138
    %1222 = vadd.xlane.f32.xlu0 %v1221
    %v1223 = vpop.xlane.xlu0 %1222
    %v1224 = vadd.f32 %v1139, %v1140
    %1225 = vadd.xlane.f32.xlu0 %v1224
    %v1226 = vpop.xlane.xlu0 %1225
    %v1227 = vadd.f32 %v1141, %v1142
    %1228 = vadd.xlane.f32.xlu0 %v1227
    %v1229 = vpop.xlane.xlu0 %1228
    %v1230 = vadd.f32 %v1143, %v1144
    %1231 = vadd.xlane.f32.xlu0 %v1230
    %v1232 = vpop.xlane.xlu0 %1231
    %v1233 = vadd.f32 %v1145, %v1146
    %1234 = vadd.xlane.f32.xlu0 %v1233
    %v1235 = vpop.xlane.xlu0 %1234
    %v1236 = vadd.f32 %v1147, %v1148
    %1237 = vadd.xlane.f32.xlu0 %v1236
    %v1238 = vpop.xlane.xlu0 %1237
    %v1239 = vadd.f32 %v1149, %v1150
    %1240 = vadd.xlane.f32.xlu0 %v1239
    %v1241 = vpop.xlane.xlu0 %1240
    %v1242 = vadd.f32 %v1151, %v1152
    %1243 = vadd.xlane.f32.xlu0 %v1242
    %v1244 = vpop.xlane.xlu0 %1243
    %v1245 = vadd.f32 %v1153, %v1154
    %1246 = vadd.xlane.f32.xlu0 %v1245
    %v1247 = vpop.xlane.xlu0 %1246
    %v1248 = vadd.f32 %v1155, %v1156
    %1249 = vadd.xlane.f32.xlu0 %v1248
    %v1250 = vpop.xlane.xlu0 %1249
    %v1251 = vadd.f32 %v1157, %v1158
    %1252 = vadd.xlane.f32.xlu0 %v1251
    %v1253 = vpop.xlane.xlu0 %1252
    %v1254 = vadd.f32 %v1159, %v1160
    %1255 = vadd.xlane.f32.xlu0 %v1254
    %v1256 = vpop.xlane.xlu0 %1255
    %v1257 = vadd.f32 %v1163, 1e-05
    %v1258 = vadd.f32 %v1166, 1e-05
    %v1259 = vadd.f32 %v1169, 1e-05
    %v1260 = vadd.f32 %v1172, 1e-05
    %v1261 = vadd.f32 %v1175, 1e-05
    %v1262 = vadd.f32 %v1178, 1e-05
    %v1263 = vadd.f32 %v1181, 1e-05
    %v1264 = vadd.f32 %v1184, 1e-05
    %v1265 = vadd.f32 %v1187, 1e-05
    %v1266 = vadd.f32 %v1190, 1e-05
    %v1267 = vadd.f32 %v1193, 1e-05
    %v1268 = vadd.f32 %v1196, 1e-05
    %v1269 = vadd.f32 %v1199, 1e-05
    %v1270 = vadd.f32 %v1202, 1e-05
    %v1271 = vadd.f32 %v1205, 1e-05
    %v1272 = vadd.f32 %v1208, 1e-05
    %v1273 = vadd.f32 %v1211, 1e-05
    %v1274 = vadd.f32 %v1214, 1e-05
    %v1275 = vadd.f32 %v1217, 1e-05
    %v1276 = vadd.f32 %v1220, 1e-05
    %v1277 = vadd.f32 %v1223, 1e-05
    %v1278 = vadd.f32 %v1226, 1e-05
    %v1279 = vadd.f32 %v1229, 1e-05
    %v1280 = vadd.f32 %v1232, 1e-05
    %v1281 = vadd.f32 %v1235, 1e-05
    %v1282 = vadd.f32 %v1238, 1e-05
    %v1283 = vadd.f32 %v1241, 1e-05
    %v1284 = vadd.f32 %v1244, 1e-05
    %v1285 = vadd.f32 %v1247, 1e-05
    %v1286 = vadd.f32 %v1250, 1e-05
    %v1287 = vadd.f32 %v1253, 1e-05
    %v1288 = vadd.f32 %v1256, 1e-05
    %v1289 = vrsqrt.pop %v1257
    %v1290 = vmul.f32 %v1289, %v1257
    %v1291 = vmul.f32 %v1290, %v1289
    %v1292 = vmul.f32 0.5, %v1291
    %v1293 = vsub.f32 1.5, %v1292
    %v1294 = vmul.f32 %v1289, %v1293
    %vm1295 = vweird.f32 %v1257
    %vm1296 = vweird.f32 %v1289
    %vm1297 = vmor %vm1295, %vm1296
    %v1298 = vsel %vm1297, %v1289, %v1294
    %v1299 = vrsqrt.pop %v1258
    %v1300 = vmul.f32 %v1299, %v1258
    %v1301 = vmul.f32 %v1300, %v1299
    %v1302 = vmul.f32 0.5, %v1301
    %v1303 = vsub.f32 1.5, %v1302
    %v1304 = vmul.f32 %v1299, %v1303
    %vm1305 = vweird.f32 %v1258
    %vm1306 = vweird.f32 %v1299
    %vm1307 = vmor %vm1305, %vm1306
    %v1308 = vsel %vm1307, %v1299, %v1304
    %v1309 = vrsqrt.pop %v1259
    %v1310 = vmul.f32 %v1309, %v1259
    %v1311 = vmul.f32 %v1310, %v1309
    %v1312 = vmul.f32 0.5, %v1311
    %v1313 = vsub.f32 1.5, %v1312
    %v1314 = vmul.f32 %v1309, %v1313
    %vm1315 = vweird.f32 %v1259
    %vm1316 = vweird.f32 %v1309
    %vm1317 = vmor %vm1315, %vm1316
    %v1318 = vsel %vm1317, %v1309, %v1314
    %v1319 = vrsqrt.pop %v1260
    %v1320 = vmul.f32 %v1319, %v1260
    %v1321 = vmul.f32 %v1320, %v1319
    %v1322 = vmul.f32 0.5, %v1321
    %v1323 = vsub.f32 1.5, %v1322
    %v1324 = vmul.f32 %v1319, %v1323
    %vm1325 = vweird.f32 %v1260
    %vm1326 = vweird.f32 %v1319
    %vm1327 = vmor %vm1325, %vm1326
    %v1328 = vsel %vm1327, %v1319, %v1324
    %v1329 = vrsqrt.pop %v1261
    %v1330 = vmul.f32 %v1329, %v1261
    %v1331 = vmul.f32 %v1330, %v1329
    %v1332 = vmul.f32 0.5, %v1331
    %v1333 = vsub.f32 1.5, %v1332
    %v1334 = vmul.f32 %v1329, %v1333
    %vm1335 = vweird.f32 %v1261
    %vm1336 = vweird.f32 %v1329
    %vm1337 = vmor %vm1335, %vm1336
    %v1338 = vsel %vm1337, %v1329, %v1334
    %v1339 = vrsqrt.pop %v1262
    %v1340 = vmul.f32 %v1339, %v1262
    %v1341 = vmul.f32 %v1340, %v1339
    %v1342 = vmul.f32 0.5, %v1341
    %v1343 = vsub.f32 1.5, %v1342
    %v1344 = vmul.f32 %v1339, %v1343
    %vm1345 = vweird.f32 %v1262
    %vm1346 = vweird.f32 %v1339
    %vm1347 = vmor %vm1345, %vm1346
    %v1348 = vsel %vm1347, %v1339, %v1344
    %v1349 = vrsqrt.pop %v1263
    %v1350 = vmul.f32 %v1349, %v1263
    %v1351 = vmul.f32 %v1350, %v1349
    %v1352 = vmul.f32 0.5, %v1351
    %v1353 = vsub.f32 1.5, %v1352
    %v1354 = vmul.f32 %v1349, %v1353
    %vm1355 = vweird.f32 %v1263
    %vm1356 = vweird.f32 %v1349
    %vm1357 = vmor %vm1355, %vm1356
    %v1358 = vsel %vm1357, %v1349, %v1354
    %v1359 = vrsqrt.pop %v1264
    %v1360 = vmul.f32 %v1359, %v1264
    %v1361 = vmul.f32 %v1360, %v1359
    %v1362 = vmul.f32 0.5, %v1361
    %v1363 = vsub.f32 1.5, %v1362
    %v1364 = vmul.f32 %v1359, %v1363
    %vm1365 = vweird.f32 %v1264
    %vm1366 = vweird.f32 %v1359
    %vm1367 = vmor %vm1365, %vm1366
    %v1368 = vsel %vm1367, %v1359, %v1364
    %v1369 = vrsqrt.pop %v1265
    %v1370 = vmul.f32 %v1369, %v1265
    %v1371 = vmul.f32 %v1370, %v1369
    %v1372 = vmul.f32 0.5, %v1371
    %v1373 = vsub.f32 1.5, %v1372
    %v1374 = vmul.f32 %v1369, %v1373
    %vm1375 = vweird.f32 %v1265
    %vm1376 = vweird.f32 %v1369
    %vm1377 = vmor %vm1375, %vm1376
    %v1378 = vsel %vm1377, %v1369, %v1374
    %v1379 = vrsqrt.pop %v1266
    %v1380 = vmul.f32 %v1379, %v1266
    %v1381 = vmul.f32 %v1380, %v1379
    %v1382 = vmul.f32 0.5, %v1381
    %v1383 = vsub.f32 1.5, %v1382
    %v1384 = vmul.f32 %v1379, %v1383
    %vm1385 = vweird.f32 %v1266
    %vm1386 = vweird.f32 %v1379
    %vm1387 = vmor %vm1385, %vm1386
    %v1388 = vsel %vm1387, %v1379, %v1384
    %v1389 = vrsqrt.pop %v1267
    %v1390 = vmul.f32 %v1389, %v1267
    %v1391 = vmul.f32 %v1390, %v1389
    %v1392 = vmul.f32 0.5, %v1391
    %v1393 = vsub.f32 1.5, %v1392
    %v1394 = vmul.f32 %v1389, %v1393
    %vm1395 = vweird.f32 %v1267
    %vm1396 = vweird.f32 %v1389
    %vm1397 = vmor %vm1395, %vm1396
    %v1398 = vsel %vm1397, %v1389, %v1394
    %v1399 = vrsqrt.pop %v1268
    %v1400 = vmul.f32 %v1399, %v1268
    %v1401 = vmul.f32 %v1400, %v1399
    %v1402 = vmul.f32 0.5, %v1401
    %v1403 = vsub.f32 1.5, %v1402
    %v1404 = vmul.f32 %v1399, %v1403
    %vm1405 = vweird.f32 %v1268
    %vm1406 = vweird.f32 %v1399
    %vm1407 = vmor %vm1405, %vm1406
    %v1408 = vsel %vm1407, %v1399, %v1404
    %v1409 = vrsqrt.pop %v1269
    %v1410 = vmul.f32 %v1409, %v1269
    %v1411 = vmul.f32 %v1410, %v1409
    %v1412 = vmul.f32 0.5, %v1411
    %v1413 = vsub.f32 1.5, %v1412
    %v1414 = vmul.f32 %v1409, %v1413
    %vm1415 = vweird.f32 %v1269
    %vm1416 = vweird.f32 %v1409
    %vm1417 = vmor %vm1415, %vm1416
    %v1418 = vsel %vm1417, %v1409, %v1414
    %v1419 = vrsqrt.pop %v1270
    %v1420 = vmul.f32 %v1419, %v1270
    %v1421 = vmul.f32 %v1420, %v1419
    %v1422 = vmul.f32 0.5, %v1421
    %v1423 = vsub.f32 1.5, %v1422
    %v1424 = vmul.f32 %v1419, %v1423
    %vm1425 = vweird.f32 %v1270
    %vm1426 = vweird.f32 %v1419
    %vm1427 = vmor %vm1425, %vm1426
    %v1428 = vsel %vm1427, %v1419, %v1424
    %v1429 = vrsqrt.pop %v1271
    %v1430 = vmul.f32 %v1429, %v1271
    %v1431 = vmul.f32 %v1430, %v1429
    %v1432 = vmul.f32 0.5, %v1431
    %v1433 = vsub.f32 1.5, %v1432
    %v1434 = vmul.f32 %v1429, %v1433
    %vm1435 = vweird.f32 %v1271
    %vm1436 = vweird.f32 %v1429
    %vm1437 = vmor %vm1435, %vm1436
    %v1438 = vsel %vm1437, %v1429, %v1434
    %v1439 = vrsqrt.pop %v1272
    %v1440 = vmul.f32 %v1439, %v1272
    %v1441 = vmul.f32 %v1440, %v1439
    %v1442 = vmul.f32 0.5, %v1441
    %v1443 = vsub.f32 1.5, %v1442
    %v1444 = vmul.f32 %v1439, %v1443
    %vm1445 = vweird.f32 %v1272
    %vm1446 = vweird.f32 %v1439
    %vm1447 = vmor %vm1445, %vm1446
    %v1448 = vsel %vm1447, %v1439, %v1444
    %v1449 = vrsqrt.pop %v1273
    %v1450 = vmul.f32 %v1449, %v1273
    %v1451 = vmul.f32 %v1450, %v1449
    %v1452 = vmul.f32 0.5, %v1451
    %v1453 = vsub.f32 1.5, %v1452
    %v1454 = vmul.f32 %v1449, %v1453
    %vm1455 = vweird.f32 %v1273
    %vm1456 = vweird.f32 %v1449
    %vm1457 = vmor %vm1455, %vm1456
    %v1458 = vsel %vm1457, %v1449, %v1454
    %v1459 = vrsqrt.pop %v1274
    %v1460 = vmul.f32 %v1459, %v1274
    %v1461 = vmul.f32 %v1460, %v1459
    %v1462 = vmul.f32 0.5, %v1461
    %v1463 = vsub.f32 1.5, %v1462
    %v1464 = vmul.f32 %v1459, %v1463
    %vm1465 = vweird.f32 %v1274
    %vm1466 = vweird.f32 %v1459
    %vm1467 = vmor %vm1465, %vm1466
    %v1468 = vsel %vm1467, %v1459, %v1464
    %v1469 = vrsqrt.pop %v1275
    %v1470 = vmul.f32 %v1469, %v1275
    %v1471 = vmul.f32 %v1470, %v1469
    %v1472 = vmul.f32 0.5, %v1471
    %v1473 = vsub.f32 1.5, %v1472
    %v1474 = vmul.f32 %v1469, %v1473
    %vm1475 = vweird.f32 %v1275
    %vm1476 = vweird.f32 %v1469
    %vm1477 = vmor %vm1475, %vm1476
    %v1478 = vsel %vm1477, %v1469, %v1474
    %v1479 = vrsqrt.pop %v1276
    %v1480 = vmul.f32 %v1479, %v1276
    %v1481 = vmul.f32 %v1480, %v1479
    %v1482 = vmul.f32 0.5, %v1481
    %v1483 = vsub.f32 1.5, %v1482
    %v1484 = vmul.f32 %v1479, %v1483
    %vm1485 = vweird.f32 %v1276
    %vm1486 = vweird.f32 %v1479
    %vm1487 = vmor %vm1485, %vm1486
    %v1488 = vsel %vm1487, %v1479, %v1484
    %v1489 = vrsqrt.pop %v1277
    %v1490 = vmul.f32 %v1489, %v1277
    %v1491 = vmul.f32 %v1490, %v1489
    %v1492 = vmul.f32 0.5, %v1491
    %v1493 = vsub.f32 1.5, %v1492
    %v1494 = vmul.f32 %v1489, %v1493
    %vm1495 = vweird.f32 %v1277
    %vm1496 = vweird.f32 %v1489
    %vm1497 = vmor %vm1495, %vm1496
    %v1498 = vsel %vm1497, %v1489, %v1494
    %v1499 = vrsqrt.pop %v1278
    %v1500 = vmul.f32 %v1499, %v1278
    %v1501 = vmul.f32 %v1500, %v1499
    %v1502 = vmul.f32 0.5, %v1501
    %v1503 = vsub.f32 1.5, %v1502
    %v1504 = vmul.f32 %v1499, %v1503
    %vm1505 = vweird.f32 %v1278
    %vm1506 = vweird.f32 %v1499
    %vm1507 = vmor %vm1505, %vm1506
    %v1508 = vsel %vm1507, %v1499, %v1504
    %v1509 = vrsqrt.pop %v1279
    %v1510 = vmul.f32 %v1509, %v1279
    %v1511 = vmul.f32 %v1510, %v1509
    %v1512 = vmul.f32 0.5, %v1511
    %v1513 = vsub.f32 1.5, %v1512
    %v1514 = vmul.f32 %v1509, %v1513
    %vm1515 = vweird.f32 %v1279
    %vm1516 = vweird.f32 %v1509
    %vm1517 = vmor %vm1515, %vm1516
    %v1518 = vsel %vm1517, %v1509, %v1514
    %v1519 = vrsqrt.pop %v1280
    %v1520 = vmul.f32 %v1519, %v1280
    %v1521 = vmul.f32 %v1520, %v1519
    %v1522 = vmul.f32 0.5, %v1521
    %v1523 = vsub.f32 1.5, %v1522
    %v1524 = vmul.f32 %v1519, %v1523
    %vm1525 = vweird.f32 %v1280
    %vm1526 = vweird.f32 %v1519
    %vm1527 = vmor %vm1525, %vm1526
    %v1528 = vsel %vm1527, %v1519, %v1524
    %v1529 = vrsqrt.pop %v1281
    %v1530 = vmul.f32 %v1529, %v1281
    %v1531 = vmul.f32 %v1530, %v1529
    %v1532 = vmul.f32 0.5, %v1531
    %v1533 = vsub.f32 1.5, %v1532
    %v1534 = vmul.f32 %v1529, %v1533
    %vm1535 = vweird.f32 %v1281
    %vm1536 = vweird.f32 %v1529
    %vm1537 = vmor %vm1535, %vm1536
    %v1538 = vsel %vm1537, %v1529, %v1534
    %v1539 = vrsqrt.pop %v1282
    %v1540 = vmul.f32 %v1539, %v1282
    %v1541 = vmul.f32 %v1540, %v1539
    %v1542 = vmul.f32 0.5, %v1541
    %v1543 = vsub.f32 1.5, %v1542
    %v1544 = vmul.f32 %v1539, %v1543
    %vm1545 = vweird.f32 %v1282
    %vm1546 = vweird.f32 %v1539
    %vm1547 = vmor %vm1545, %vm1546
    %v1548 = vsel %vm1547, %v1539, %v1544
    %v1549 = vrsqrt.pop %v1283
    %v1550 = vmul.f32 %v1549, %v1283
    %v1551 = vmul.f32 %v1550, %v1549
    %v1552 = vmul.f32 0.5, %v1551
    %v1553 = vsub.f32 1.5, %v1552
    %v1554 = vmul.f32 %v1549, %v1553
    %vm1555 = vweird.f32 %v1283
    %vm1556 = vweird.f32 %v1549
    %vm1557 = vmor %vm1555, %vm1556
    %v1558 = vsel %vm1557, %v1549, %v1554
    %v1559 = vrsqrt.pop %v1284
    %v1560 = vmul.f32 %v1559, %v1284
    %v1561 = vmul.f32 %v1560, %v1559
    %v1562 = vmul.f32 0.5, %v1561
    %v1563 = vsub.f32 1.5, %v1562
    %v1564 = vmul.f32 %v1559, %v1563
    %vm1565 = vweird.f32 %v1284
    %vm1566 = vweird.f32 %v1559
    %vm1567 = vmor %vm1565, %vm1566
    %v1568 = vsel %vm1567, %v1559, %v1564
    %v1569 = vrsqrt.pop %v1285
    %v1570 = vmul.f32 %v1569, %v1285
    %v1571 = vmul.f32 %v1570, %v1569
    %v1572 = vmul.f32 0.5, %v1571
    %v1573 = vsub.f32 1.5, %v1572
    %v1574 = vmul.f32 %v1569, %v1573
    %vm1575 = vweird.f32 %v1285
    %vm1576 = vweird.f32 %v1569
    %vm1577 = vmor %vm1575, %vm1576
    %v1578 = vsel %vm1577, %v1569, %v1574
    %v1579 = vrsqrt.pop %v1286
    %v1580 = vmul.f32 %v1579, %v1286
    %v1581 = vmul.f32 %v1580, %v1579
    %v1582 = vmul.f32 0.5, %v1581
    %v1583 = vsub.f32 1.5, %v1582
    %v1584 = vmul.f32 %v1579, %v1583
    %vm1585 = vweird.f32 %v1286
    %vm1586 = vweird.f32 %v1579
    %vm1587 = vmor %vm1585, %vm1586
    %v1588 = vsel %vm1587, %v1579, %v1584
    %v1589 = vrsqrt.pop %v1287
    %v1590 = vmul.f32 %v1589, %v1287
    %v1591 = vmul.f32 %v1590, %v1589
    %v1592 = vmul.f32 0.5, %v1591
    %v1593 = vsub.f32 1.5, %v1592
    %v1594 = vmul.f32 %v1589, %v1593
    %vm1595 = vweird.f32 %v1287
    %vm1596 = vweird.f32 %v1589
    %vm1597 = vmor %vm1595, %vm1596
    %v1598 = vsel %vm1597, %v1589, %v1594
    %v1599 = vrsqrt.pop %v1288
    %v1600 = vmul.f32 %v1599, %v1288
    %v1601 = vmul.f32 %v1600, %v1599
    %v1602 = vmul.f32 0.5, %v1601
    %v1603 = vsub.f32 1.5, %v1602
    %v1604 = vmul.f32 %v1599, %v1603
    %vm1605 = vweird.f32 %v1288
    %vm1606 = vweird.f32 %v1599
    %vm1607 = vmor %vm1605, %vm1606
    %v1608 = vsel %vm1607, %v1599, %v1604
    %v1609 = vmul.f32 %v1033, %v1298
    %v1610 = vmul.f32 %v1034, %v1298
    %v1611 = vmul.f32 %v1035, %v1308
    %v1612 = vmul.f32 %v1036, %v1308
    %v1613 = vmul.f32 %v1037, %v1318
    %v1614 = vmul.f32 %v1038, %v1318
    %v1615 = vmul.f32 %v1039, %v1328
    %v1616 = vmul.f32 %v1040, %v1328
    %v1617 = vmul.f32 %v1041, %v1338
    %v1618 = vmul.f32 %v1042, %v1338
    %v1619 = vmul.f32 %v1043, %v1348
    %v1620 = vmul.f32 %v1044, %v1348
    %v1621 = vmul.f32 %v1045, %v1358
    %v1622 = vmul.f32 %v1046, %v1358
    %v1623 = vmul.f32 %v1047, %v1368
    %v1624 = vmul.f32 %v1048, %v1368
    %v1625 = vmul.f32 %v1049, %v1378
    %v1626 = vmul.f32 %v1050, %v1378
    %v1627 = vmul.f32 %v1051, %v1388
    %v1628 = vmul.f32 %v1052, %v1388
    %v1629 = vmul.f32 %v1053, %v1398
    %v1630 = vmul.f32 %v1054, %v1398
    %v1631 = vmul.f32 %v1055, %v1408
    %v1632 = vmul.f32 %v1056, %v1408
    %v1633 = vmul.f32 %v1057, %v1418
    %v1634 = vmul.f32 %v1058, %v1418
    %v1635 = vmul.f32 %v1059, %v1428
    %v1636 = vmul.f32 %v1060, %v1428
    %v1637 = vmul.f32 %v1061, %v1438
    %v1638 = vmul.f32 %v1062, %v1438
    %v1639 = vmul.f32 %v1063, %v1448
    %v1640 = vmul.f32 %v1064, %v1448
    %v1641 = vmul.f32 %v1065, %v1458
    %v1642 = vmul.f32 %v1066, %v1458
    %v1643 = vmul.f32 %v1067, %v1468
    %v1644 = vmul.f32 %v1068, %v1468
    %v1645 = vmul.f32 %v1069, %v1478
    %v1646 = vmul.f32 %v1070, %v1478
    %v1647 = vmul.f32 %v1071, %v1488
    %v1648 = vmul.f32 %v1072, %v1488
    %v1649 = vmul.f32 %v1073, %v1498
    %v1650 = vmul.f32 %v1074, %v1498
    %v1651 = vmul.f32 %v1075, %v1508
    %v1652 = vmul.f32 %v1076, %v1508
    %v1653 = vmul.f32 %v1077, %v1518
    %v1654 = vmul.f32 %v1078, %v1518
    %v1655 = vmul.f32 %v1079, %v1528
    %v1656 = vmul.f32 %v1080, %v1528
    %v1657 = vmul.f32 %v1081, %v1538
    %v1658 = vmul.f32 %v1082, %v1538
    %v1659 = vmul.f32 %v1083, %v1548
    %v1660 = vmul.f32 %v1084, %v1548
    %v1661 = vmul.f32 %v1085, %v1558
    %v1662 = vmul.f32 %v1086, %v1558
    %v1663 = vmul.f32 %v1087, %v1568
    %v1664 = vmul.f32 %v1088, %v1568
    %v1665 = vmul.f32 %v1089, %v1578
    %v1666 = vmul.f32 %v1090, %v1578
    %v1667 = vmul.f32 %v1091, %v1588
    %v1668 = vmul.f32 %v1092, %v1588
    %v1669 = vmul.f32 %v1093, %v1598
    %v1670 = vmul.f32 %v1094, %v1598
    %v1671 = vmul.f32 %v1095, %v1608
    %v1672 = vmul.f32 %v1096, %v1608
    %1673 = vxpose.xlu0.b32.start [1/16] %v1609, 128
    %1674 = vxpose.xlu0.b32.cont [2/16] %v1611, 128
    %1675 = vxpose.xlu0.b32.cont [3/16] %v1613, 128
    %1676 = vxpose.xlu0.b32.cont [4/16] %v1615, 128
    %1677 = vxpose.xlu0.b32.cont [5/16] %v1617, 128
    %1678 = vxpose.xlu0.b32.cont [6/16] %v1619, 128
    %1679 = vxpose.xlu0.b32.cont [7/16] %v1621, 128
    %1680 = vxpose.xlu0.b32.cont [8/16] %v1623, 128
    %1681 = vxpose.xlu0.b32.cont [9/16] %v1625, 128
    %1682 = vxpose.xlu0.b32.cont [10/16] %v1627, 128
    %1683 = vxpose.xlu0.b32.cont [11/16] %v1629, 128
    %1684 = vxpose.xlu0.b32.cont [12/16] %v1631, 128
    %1685 = vxpose.xlu0.b32.cont [13/16] %v1633, 128
    %1686 = vxpose.xlu0.b32.cont [14/16] %v1635, 128
    %1687 = vxpose.xlu0.b32.cont [15/16] %v1637, 128
    %1688 = vxpose.xlu0.b32.end [16/16] %v1639, 128
    %v1689 = vpop.trf.xlu0
    %v1690 = vpop.trf.xlu0
    %v1691 = vpop.trf.xlu0
    %v1692 = vpop.trf.xlu0
    %v1693 = vpop.trf.xlu0
    %v1694 = vpop.trf.xlu0
    %v1695 = vpop.trf.xlu0
    %v1696 = vpop.trf.xlu0
    %v1697 = vpop.trf.xlu0
    %v1698 = vpop.trf.xlu0
    %v1699 = vpop.trf.xlu0
    %v1700 = vpop.trf.xlu0
    %v1701 = vpop.trf.xlu0
    %v1702 = vpop.trf.xlu0
    %v1703 = vpop.trf.xlu0
    %v1704 = vpop.trf.xlu0
    %1705 = vxpose.xlu0.b32.start [1/16] %v1610, 128
    %1706 = vxpose.xlu0.b32.cont [2/16] %v1612, 128
    %1707 = vxpose.xlu0.b32.cont [3/16] %v1614, 128
    %1708 = vxpose.xlu0.b32.cont [4/16] %v1616, 128
    %1709 = vxpose.xlu0.b32.cont [5/16] %v1618, 128
    %1710 = vxpose.xlu0.b32.cont [6/16] %v1620, 128
    %1711 = vxpose.xlu0.b32.cont [7/16] %v1622, 128
    %1712 = vxpose.xlu0.b32.cont [8/16] %v1624, 128
    %1713 = vxpose.xlu0.b32.cont [9/16] %v1626, 128
    %1714 = vxpose.xlu0.b32.cont [10/16] %v1628, 128
    %1715 = vxpose.xlu0.b32.cont [11/16] %v1630, 128
    %1716 = vxpose.xlu0.b32.cont [12/16] %v1632, 128
    %1717 = vxpose.xlu0.b32.cont [13/16] %v1634, 128
    %1718 = vxpose.xlu0.b32.cont [14/16] %v1636, 128
    %1719 = vxpose.xlu0.b32.cont [15/16] %v1638, 128
    %1720 = vxpose.xlu0.b32.end [16/16] %v1640, 128
    %v1721 = vpop.trf.xlu0
    %v1722 = vpop.trf.xlu0
    %v1723 = vpop.trf.xlu0
    %v1724 = vpop.trf.xlu0
    %v1725 = vpop.trf.xlu0
    %v1726 = vpop.trf.xlu0
    %v1727 = vpop.trf.xlu0
    %v1728 = vpop.trf.xlu0
    %v1729 = vpop.trf.xlu0
    %v1730 = vpop.trf.xlu0
    %v1731 = vpop.trf.xlu0
    %v1732 = vpop.trf.xlu0
    %v1733 = vpop.trf.xlu0
    %v1734 = vpop.trf.xlu0
    %v1735 = vpop.trf.xlu0
    %v1736 = vpop.trf.xlu0
    %1737 = vxpose.xlu0.b32.start [1/16] %v1641, 128
    %1738 = vxpose.xlu0.b32.cont [2/16] %v1643, 128
    %1739 = vxpose.xlu0.b32.cont [3/16] %v1645, 128
    %1740 = vxpose.xlu0.b32.cont [4/16] %v1647, 128
    %1741 = vxpose.xlu0.b32.cont [5/16] %v1649, 128
    %1742 = vxpose.xlu0.b32.cont [6/16] %v1651, 128
    %1743 = vxpose.xlu0.b32.cont [7/16] %v1653, 128
    %1744 = vxpose.xlu0.b32.cont [8/16] %v1655, 128
    %1745 = vxpose.xlu0.b32.cont [9/16] %v1657, 128
    %1746 = vxpose.xlu0.b32.cont [10/16] %v1659, 128
    %1747 = vxpose.xlu0.b32.cont [11/16] %v1661, 128
    %1748 = vxpose.xlu0.b32.cont [12/16] %v1663, 128
    %1749 = vxpose.xlu0.b32.cont [13/16] %v1665, 128
    %1750 = vxpose.xlu0.b32.cont [14/16] %v1667, 128
    %1751 = vxpose.xlu0.b32.cont [15/16] %v1669, 128
    %1752 = vxpose.xlu0.b32.end [16/16] %v1671, 128
    %v1753 = vpop.trf.xlu0
    %v1754 = vpop.trf.xlu0
    %v1755 = vpop.trf.xlu0
    %v1756 = vpop.trf.xlu0
    %v1757 = vpop.trf.xlu0
    %v1758 = vpop.trf.xlu0
    %v1759 = vpop.trf.xlu0
    %v1760 = vpop.trf.xlu0
    %v1761 = vpop.trf.xlu0
    %v1762 = vpop.trf.xlu0
    %v1763 = vpop.trf.xlu0
    %v1764 = vpop.trf.xlu0
    %v1765 = vpop.trf.xlu0
    %v1766 = vpop.trf.xlu0
    %v1767 = vpop.trf.xlu0
    %v1768 = vpop.trf.xlu0
    %1769 = vxpose.xlu0.b32.start [1/16] %v1642, 128
    %1770 = vxpose.xlu0.b32.cont [2/16] %v1644, 128
    %1771 = vxpose.xlu0.b32.cont [3/16] %v1646, 128
    %1772 = vxpose.xlu0.b32.cont [4/16] %v1648, 128
    %1773 = vxpose.xlu0.b32.cont [5/16] %v1650, 128
    %1774 = vxpose.xlu0.b32.cont [6/16] %v1652, 128
    %1775 = vxpose.xlu0.b32.cont [7/16] %v1654, 128
    %1776 = vxpose.xlu0.b32.cont [8/16] %v1656, 128
    %1777 = vxpose.xlu0.b32.cont [9/16] %v1658, 128
    %1778 = vxpose.xlu0.b32.cont [10/16] %v1660, 128
    %1779 = vxpose.xlu0.b32.cont [11/16] %v1662, 128
    %1780 = vxpose.xlu0.b32.cont [12/16] %v1664, 128
    %1781 = vxpose.xlu0.b32.cont [13/16] %v1666, 128
    %1782 = vxpose.xlu0.b32.cont [14/16] %v1668, 128
    %1783 = vxpose.xlu0.b32.cont [15/16] %v1670, 128
    %1784 = vxpose.xlu0.b32.end [16/16] %v1672, 128
    %v1785 = vpop.trf.xlu0
    %v1786 = vpop.trf.xlu0
    %v1787 = vpop.trf.xlu0
    %v1788 = vpop.trf.xlu0
    %v1789 = vpop.trf.xlu0
    %v1790 = vpop.trf.xlu0
    %v1791 = vpop.trf.xlu0
    %v1792 = vpop.trf.xlu0
    %v1793 = vpop.trf.xlu0
    %v1794 = vpop.trf.xlu0
    %v1795 = vpop.trf.xlu0
    %v1796 = vpop.trf.xlu0
    %v1797 = vpop.trf.xlu0
    %v1798 = vpop.trf.xlu0
    %v1799 = vpop.trf.xlu0
    %v1800 = vpop.trf.xlu0
    %1801 = vst [vmem:[%s5] sm:$0xff] %v1689
    %1802 = vst [vmem:[%s5 + $0x8] sm:$0xff] %v1753
    %1803 = vst [vmem:[%s5 + $0x10] sm:$0xff] %v1690
    %1804 = vst [vmem:[%s5 + $0x18] sm:$0xff] %v1754
    %1805 = vst [vmem:[%s5 + $0x20] sm:$0xff] %v1691
    %1806 = vst [vmem:[%s5 + $0x28] sm:$0xff] %v1755
    %1807 = vst [vmem:[%s5 + $0x30] sm:$0xff] %v1692
    %1808 = vst [vmem:[%s5 + $0x38] sm:$0xff] %v1756
    %1809 = vst [vmem:[%s5 + $0x40] sm:$0xff] %v1693
    %1810 = vst [vmem:[%s5 + $0x48] sm:$0xff] %v1757
    %1811 = vst [vmem:[%s5 + $0x50] sm:$0xff] %v1694
    %1812 = vst [vmem:[%s5 + $0x58] sm:$0xff] %v1758
    %1813 = vst [vmem:[%s5 + $0x60] sm:$0xff] %v1695
    %1814 = vst [vmem:[%s5 + $0x68] sm:$0xff] %v1759
    %1815 = vst [vmem:[%s5 + $0x70] sm:$0xff] %v1696
    %1816 = vst [vmem:[%s5 + $0x78] sm:$0xff] %v1760
    %1817 = vst [vmem:[%s5 + $0x80] sm:$0xff] %v1697
    %1818 = vst [vmem:[%s5 + $0x88] sm:$0xff] %v1761
    %1819 = vst [vmem:[%s5 + $0x90] sm:$0xff] %v1698
    %1820 = vst [vmem:[%s5 + $0x98] sm:$0xff] %v1762
    %1821 = vst [vmem:[%s5 + $0xa0] sm:$0xff] %v1699
    %1822 = vst [vmem:[%s5 + $0xa8] sm:$0xff] %v1763
    %1823 = vst [vmem:[%s5 + $0xb0] sm:$0xff] %v1700
    %1824 = vst [vmem:[%s5 + $0xb8] sm:$0xff] %v1764
    %1825 = vst [vmem:[%s5 + $0xc0] sm:$0xff] %v1701
    %1826 = vst [vmem:[%s5 + $0xc8] sm:$0xff] %v1765
    %1827 = vst [vmem:[%s5 + $0xd0] sm:$0xff] %v1702
    %1828 = vst [vmem:[%s5 + $0xd8] sm:$0xff] %v1766
    %1829 = vst [vmem:[%s5 + $0xe0] sm:$0xff] %v1703
    %1830 = vst [vmem:[%s5 + $0xe8] sm:$0xff] %v1767
    %1831 = vst [vmem:[%s5 + $0xf0] sm:$0xff] %v1704
    %1832 = vst [vmem:[%s5 + $0xf8] sm:$0xff] %v1768
    %1833 = vst [vmem:[%s5 + $0x100] sm:$0xff] %v1721
    %1834 = vst [vmem:[%s5 + $0x108] sm:$0xff] %v1785
    %1835 = vst [vmem:[%s5 + $0x110] sm:$0xff] %v1722
    %1836 = vst [vmem:[%s5 + $0x118] sm:$0xff] %v1786
    %1837 = vst [vmem:[%s5 + $0x120] sm:$0xff] %v1723
    %1838 = vst [vmem:[%s5 + $0x128] sm:$0xff] %v1787
    %1839 = vst [vmem:[%s5 + $0x130] sm:$0xff] %v1724
    %1840 = vst [vmem:[%s5 + $0x138] sm:$0xff] %v1788
    %1841 = vst [vmem:[%s5 + $0x140] sm:$0xff] %v1725
    %1842 = vst [vmem:[%s5 + $0x148] sm:$0xff] %v1789
    %1843 = vst [vmem:[%s5 + $0x150] sm:$0xff] %v1726
    %1844 = vst [vmem:[%s5 + $0x158] sm:$0xff] %v1790
    %1845 = vst [vmem:[%s5 + $0x160] sm:$0xff] %v1727
    %1846 = vst [vmem:[%s5 + $0x168] sm:$0xff] %v1791
    %1847 = vst [vmem:[%s5 + $0x170] sm:$0xff] %v1728
    %1848 = vst [vmem:[%s5 + $0x178] sm:$0xff] %v1792
    %1849 = vst [vmem:[%s5 + $0x180] sm:$0xff] %v1729
    %1850 = vst [vmem:[%s5 + $0x188] sm:$0xff] %v1793
    %1851 = vst [vmem:[%s5 + $0x190] sm:$0xff] %v1730
    %1852 = vst [vmem:[%s5 + $0x198] sm:$0xff] %v1794
    %1853 = vst [vmem:[%s5 + $0x1a0] sm:$0xff] %v1731
    %1854 = vst [vmem:[%s5 + $0x1a8] sm:$0xff] %v1795
    %1855 = vst [vmem:[%s5 + $0x1b0] sm:$0xff] %v1732
    %1856 = vst [vmem:[%s5 + $0x1b8] sm:$0xff] %v1796
    %1857 = vst [vmem:[%s5 + $0x1c0] sm:$0xff] %v1733
    %1858 = vst [vmem:[%s5 + $0x1c8] sm:$0xff] %v1797
    %1859 = vst [vmem:[%s5 + $0x1d0] sm:$0xff] %v1734
    %1860 = vst [vmem:[%s5 + $0x1d8] sm:$0xff] %v1798
    %1861 = vst [vmem:[%s5 + $0x1e0] sm:$0xff] %v1735
    %1862 = vst [vmem:[%s5 + $0x1e8] sm:$0xff] %v1799
    %1863 = vst [vmem:[%s5 + $0x1f0] sm:$0xff] %v1736
    %1864 = vst [vmem:[%s5 + $0x1f8] sm:$0xff] %v1800
    %v1865 = vld [vmem:[#allocation6] sm:$0xff]
    %v1866 = vld [vmem:[#allocation6 + $0x8] sm:$0xff]
    %v1867 = vld [vmem:[#allocation6 + $0x10] sm:$0xff]
    %v1868 = vld [vmem:[#allocation6 + $0x18] sm:$0xff]
    %v1869 = vld [vmem:[#allocation6 + $0x20] sm:$0xff]
    %v1870 = vld [vmem:[#allocation6 + $0x28] sm:$0xff]
    %v1871 = vld [vmem:[#allocation6 + $0x30] sm:$0xff]
    %v1872 = vld [vmem:[#allocation6 + $0x38] sm:$0xff]
    %v1873 = vld [vmem:[#allocation6 + $0x40] sm:$0xff]
    %v1874 = vld [vmem:[#allocation6 + $0x48] sm:$0xff]
    %v1875 = vld [vmem:[#allocation6 + $0x50] sm:$0xff]
    %v1876 = vld [vmem:[#allocation6 + $0x58] sm:$0xff]
    %v1877 = vld [vmem:[#allocation6 + $0x60] sm:$0xff]
    %v1878 = vld [vmem:[#allocation6 + $0x68] sm:$0xff]
    %v1879 = vld [vmem:[#allocation6 + $0x70] sm:$0xff]
    %v1880 = vld [vmem:[#allocation6 + $0x78] sm:$0xff]
    %v1881 = vld [vmem:[#allocation6 + $0x80] sm:$0xff]
    %v1882 = vld [vmem:[#allocation6 + $0x88] sm:$0xff]
    %v1883 = vld [vmem:[#allocation6 + $0x90] sm:$0xff]
    %v1884 = vld [vmem:[#allocation6 + $0x98] sm:$0xff]
    %v1885 = vld [vmem:[#allocation6 + $0xa0] sm:$0xff]
    %v1886 = vld [vmem:[#allocation6 + $0xa8] sm:$0xff]
    %v1887 = vld [vmem:[#allocation6 + $0xb0] sm:$0xff]
    %v1888 = vld [vmem:[#allocation6 + $0xb8] sm:$0xff]
    %v1889 = vld [vmem:[#allocation6 + $0xc0] sm:$0xff]
    %v1890 = vld [vmem:[#allocation6 + $0xc8] sm:$0xff]
    %v1891 = vld [vmem:[#allocation6 + $0xd0] sm:$0xff]
    %v1892 = vld [vmem:[#allocation6 + $0xd8] sm:$0xff]
    %v1893 = vld [vmem:[#allocation6 + $0xe0] sm:$0xff]
    %v1894 = vld [vmem:[#allocation6 + $0xe8] sm:$0xff]
    %v1895 = vld [vmem:[#allocation6 + $0xf0] sm:$0xff]
    %v1896 = vld [vmem:[#allocation6 + $0xf8] sm:$0xff]
    %v1897 = vmul.f32 %v1865, %v133
    %v1898 = vmul.f32 %v1866, %v134
    %v1899 = vmul.f32 %v1867, %v133
    %v1900 = vmul.f32 %v1868, %v134
    %v1901 = vmul.f32 %v1869, %v133
    %v1902 = vmul.f32 %v1870, %v134
    %v1903 = vmul.f32 %v1871, %v133
    %v1904 = vmul.f32 %v1872, %v134
    %v1905 = vmul.f32 %v1873, %v133
    %v1906 = vmul.f32 %v1874, %v134
    %v1907 = vmul.f32 %v1875, %v133
    %v1908 = vmul.f32 %v1876, %v134
    %v1909 = vmul.f32 %v1877, %v133
    %v1910 = vmul.f32 %v1878, %v134
    %v1911 = vmul.f32 %v1879, %v133
    %v1912 = vmul.f32 %v1880, %v134
    %v1913 = vmul.f32 %v1881, %v133
    %v1914 = vmul.f32 %v1882, %v134
    %v1915 = vmul.f32 %v1883, %v133
    %v1916 = vmul.f32 %v1884, %v134
    %v1917 = vmul.f32 %v1885, %v133
    %v1918 = vmul.f32 %v1886, %v134
    %v1919 = vmul.f32 %v1887, %v133
    %v1920 = vmul.f32 %v1888, %v134
    %v1921 = vmul.f32 %v1889, %v133
    %v1922 = vmul.f32 %v1890, %v134
    %v1923 = vmul.f32 %v1891, %v133
    %v1924 = vmul.f32 %v1892, %v134
    %v1925 = vmul.f32 %v1893, %v133
    %v1926 = vmul.f32 %v1894, %v134
    %v1927 = vmul.f32 %v1895, %v133
    %v1928 = vmul.f32 %v1896, %v134
    %v1929 = vmul.f32 %v1897, %v1897
    %v1930 = vmul.f32 %v1898, %v1898
    %v1931 = vmul.f32 %v1899, %v1899
    %v1932 = vmul.f32 %v1900, %v1900
    %v1933 = vmul.f32 %v1901, %v1901
    %v1934 = vmul.f32 %v1902, %v1902
    %v1935 = vmul.f32 %v1903, %v1903
    %v1936 = vmul.f32 %v1904, %v1904
    %v1937 = vmul.f32 %v1905, %v1905
    %v1938 = vmul.f32 %v1906, %v1906
    %v1939 = vmul.f32 %v1907, %v1907
    %v1940 = vmul.f32 %v1908, %v1908
    %v1941 = vmul.f32 %v1909, %v1909
    %v1942 = vmul.f32 %v1910, %v1910
    %v1943 = vmul.f32 %v1911, %v1911
    %v1944 = vmul.f32 %v1912, %v1912
    %v1945 = vmul.f32 %v1913, %v1913
    %v1946 = vmul.f32 %v1914, %v1914
    %v1947 = vmul.f32 %v1915, %v1915
    %v1948 = vmul.f32 %v1916, %v1916
    %v1949 = vmul.f32 %v1917, %v1917
    %v1950 = vmul.f32 %v1918, %v1918
    %v1951 = vmul.f32 %v1919, %v1919
    %v1952 = vmul.f32 %v1920, %v1920
    %v1953 = vmul.f32 %v1921, %v1921
    %v1954 = vmul.f32 %v1922, %v1922
    %v1955 = vmul.f32 %v1923, %v1923
    %v1956 = vmul.f32 %v1924, %v1924
    %v1957 = vmul.f32 %v1925, %v1925
    %v1958 = vmul.f32 %v1926, %v1926
    %v1959 = vmul.f32 %v1927, %v1927
    %v1960 = vmul.f32 %v1928, %v1928
    %v1961 = vadd.f32 %v1929, %v1930
    %1962 = vadd.xlane.f32.xlu0 %v1961
    %v1963 = vpop.xlane.xlu0 %1962
    %v1964 = vadd.f32 %v1931, %v1932
    %1965 = vadd.xlane.f32.xlu0 %v1964
    %v1966 = vpop.xlane.xlu0 %1965
    %v1967 = vadd.f32 %v1933, %v1934
    %1968 = vadd.xlane.f32.xlu0 %v1967
    %v1969 = vpop.xlane.xlu0 %1968
    %v1970 = vadd.f32 %v1935, %v1936
    %1971 = vadd.xlane.f32.xlu0 %v1970
    %v1972 = vpop.xlane.xlu0 %1971
    %v1973 = vadd.f32 %v1937, %v1938
    %1974 = vadd.xlane.f32.xlu0 %v1973
    %v1975 = vpop.xlane.xlu0 %1974
    %v1976 = vadd.f32 %v1939, %v1940
    %1977 = vadd.xlane.f32.xlu0 %v1976
    %v1978 = vpop.xlane.xlu0 %1977
    %v1979 = vadd.f32 %v1941, %v1942
    %1980 = vadd.xlane.f32.xlu0 %v1979
    %v1981 = vpop.xlane.xlu0 %1980
    %v1982 = vadd.f32 %v1943, %v1944
    %1983 = vadd.xlane.f32.xlu0 %v1982
    %v1984 = vpop.xlane.xlu0 %1983
    %v1985 = vadd.f32 %v1945, %v1946
    %1986 = vadd.xlane.f32.xlu0 %v1985
    %v1987 = vpop.xlane.xlu0 %1986
    %v1988 = vadd.f32 %v1947, %v1948
    %1989 = vadd.xlane.f32.xlu0 %v1988
    %v1990 = vpop.xlane.xlu0 %1989
    %v1991 = vadd.f32 %v1949, %v1950
    %1992 = vadd.xlane.f32.xlu0 %v1991
    %v1993 = vpop.xlane.xlu0 %1992
    %v1994 = vadd.f32 %v1951, %v1952
    %1995 = vadd.xlane.f32.xlu0 %v1994
    %v1996 = vpop.xlane.xlu0 %1995
    %v1997 = vadd.f32 %v1953, %v1954
    %1998 = vadd.xlane.f32.xlu0 %v1997
    %v1999 = vpop.xlane.xlu0 %1998
    %v2000 = vadd.f32 %v1955, %v1956
    %2001 = vadd.xlane.f32.xlu0 %v2000
    %v2002 = vpop.xlane.xlu0 %2001
    %v2003 = vadd.f32 %v1957, %v1958
    %2004 = vadd.xlane.f32.xlu0 %v2003
    %v2005 = vpop.xlane.xlu0 %2004
    %v2006 = vadd.f32 %v1959, %v1960
    %2007 = vadd.xlane.f32.xlu0 %v2006
    %v2008 = vpop.xlane.xlu0 %2007
    %v2009 = vadd.f32 %v1963, 1e-05
    %v2010 = vadd.f32 %v1966, 1e-05
    %v2011 = vadd.f32 %v1969, 1e-05
    %v2012 = vadd.f32 %v1972, 1e-05
    %v2013 = vadd.f32 %v1975, 1e-05
    %v2014 = vadd.f32 %v1978, 1e-05
    %v2015 = vadd.f32 %v1981, 1e-05
    %v2016 = vadd.f32 %v1984, 1e-05
    %v2017 = vadd.f32 %v1987, 1e-05
    %v2018 = vadd.f32 %v1990, 1e-05
    %v2019 = vadd.f32 %v1993, 1e-05
    %v2020 = vadd.f32 %v1996, 1e-05
    %v2021 = vadd.f32 %v1999, 1e-05
    %v2022 = vadd.f32 %v2002, 1e-05
    %v2023 = vadd.f32 %v2005, 1e-05
    %v2024 = vadd.f32 %v2008, 1e-05
    %v2025 = vrsqrt.pop %v2009
    %v2026 = vmul.f32 %v2025, %v2009
    %v2027 = vmul.f32 %v2026, %v2025
    %v2028 = vmul.f32 0.5, %v2027
    %v2029 = vsub.f32 1.5, %v2028
    %v2030 = vmul.f32 %v2025, %v2029
    %vm2031 = vweird.f32 %v2009
    %vm2032 = vweird.f32 %v2025
    %vm2033 = vmor %vm2031, %vm2032
    %v2034 = vsel %vm2033, %v2025, %v2030
    %v2035 = vrsqrt.pop %v2010
    %v2036 = vmul.f32 %v2035, %v2010
    %v2037 = vmul.f32 %v2036, %v2035
    %v2038 = vmul.f32 0.5, %v2037
    %v2039 = vsub.f32 1.5, %v2038
    %v2040 = vmul.f32 %v2035, %v2039
    %vm2041 = vweird.f32 %v2010
    %vm2042 = vweird.f32 %v2035
    %vm2043 = vmor %vm2041, %vm2042
    %v2044 = vsel %vm2043, %v2035, %v2040
    %v2045 = vrsqrt.pop %v2011
    %v2046 = vmul.f32 %v2045, %v2011
    %v2047 = vmul.f32 %v2046, %v2045
    %v2048 = vmul.f32 0.5, %v2047
    %v2049 = vsub.f32 1.5, %v2048
    %v2050 = vmul.f32 %v2045, %v2049
    %vm2051 = vweird.f32 %v2011
    %vm2052 = vweird.f32 %v2045
    %vm2053 = vmor %vm2051, %vm2052
    %v2054 = vsel %vm2053, %v2045, %v2050
    %v2055 = vrsqrt.pop %v2012
    %v2056 = vmul.f32 %v2055, %v2012
    %v2057 = vmul.f32 %v2056, %v2055
    %v2058 = vmul.f32 0.5, %v2057
    %v2059 = vsub.f32 1.5, %v2058
    %v2060 = vmul.f32 %v2055, %v2059
    %vm2061 = vweird.f32 %v2012
    %vm2062 = vweird.f32 %v2055
    %vm2063 = vmor %vm2061, %vm2062
    %v2064 = vsel %vm2063, %v2055, %v2060
    %v2065 = vrsqrt.pop %v2013
    %v2066 = vmul.f32 %v2065, %v2013
    %v2067 = vmul.f32 %v2066, %v2065
    %v2068 = vmul.f32 0.5, %v2067
    %v2069 = vsub.f32 1.5, %v2068
    %v2070 = vmul.f32 %v2065, %v2069
    %vm2071 = vweird.f32 %v2013
    %vm2072 = vweird.f32 %v2065
    %vm2073 = vmor %vm2071, %vm2072
    %v2074 = vsel %vm2073, %v2065, %v2070
    %v2075 = vrsqrt.pop %v2014
    %v2076 = vmul.f32 %v2075, %v2014
    %v2077 = vmul.f32 %v2076, %v2075
    %v2078 = vmul.f32 0.5, %v2077
    %v2079 = vsub.f32 1.5, %v2078
    %v2080 = vmul.f32 %v2075, %v2079
    %vm2081 = vweird.f32 %v2014
    %vm2082 = vweird.f32 %v2075
    %vm2083 = vmor %vm2081, %vm2082
    %v2084 = vsel %vm2083, %v2075, %v2080
    %v2085 = vrsqrt.pop %v2015
    %v2086 = vmul.f32 %v2085, %v2015
    %v2087 = vmul.f32 %v2086, %v2085
    %v2088 = vmul.f32 0.5, %v2087
    %v2089 = vsub.f32 1.5, %v2088
    %v2090 = vmul.f32 %v2085, %v2089
    %vm2091 = vweird.f32 %v2015
    %vm2092 = vweird.f32 %v2085
    %vm2093 = vmor %vm2091, %vm2092
    %v2094 = vsel %vm2093, %v2085, %v2090
    %v2095 = vrsqrt.pop %v2016
    %v2096 = vmul.f32 %v2095, %v2016
    %v2097 = vmul.f32 %v2096, %v2095
    %v2098 = vmul.f32 0.5, %v2097
    %v2099 = vsub.f32 1.5, %v2098
    %v2100 = vmul.f32 %v2095, %v2099
    %vm2101 = vweird.f32 %v2016
    %vm2102 = vweird.f32 %v2095
    %vm2103 = vmor %vm2101, %vm2102
    %v2104 = vsel %vm2103, %v2095, %v2100
    %v2105 = vrsqrt.pop %v2017
    %v2106 = vmul.f32 %v2105, %v2017
    %v2107 = vmul.f32 %v2106, %v2105
    %v2108 = vmul.f32 0.5, %v2107
    %v2109 = vsub.f32 1.5, %v2108
    %v2110 = vmul.f32 %v2105, %v2109
    %vm2111 = vweird.f32 %v2017
    %vm2112 = vweird.f32 %v2105
    %vm2113 = vmor %vm2111, %vm2112
    %v2114 = vsel %vm2113, %v2105, %v2110
    %v2115 = vrsqrt.pop %v2018
    %v2116 = vmul.f32 %v2115, %v2018
    %v2117 = vmul.f32 %v2116, %v2115
    %v2118 = vmul.f32 0.5, %v2117
    %v2119 = vsub.f32 1.5, %v2118
    %v2120 = vmul.f32 %v2115, %v2119
    %vm2121 = vweird.f32 %v2018
    %vm2122 = vweird.f32 %v2115
    %vm2123 = vmor %vm2121, %vm2122
    %v2124 = vsel %vm2123, %v2115, %v2120
    %v2125 = vrsqrt.pop %v2019
    %v2126 = vmul.f32 %v2125, %v2019
    %v2127 = vmul.f32 %v2126, %v2125
    %v2128 = vmul.f32 0.5, %v2127
    %v2129 = vsub.f32 1.5, %v2128
    %v2130 = vmul.f32 %v2125, %v2129
    %vm2131 = vweird.f32 %v2019
    %vm2132 = vweird.f32 %v2125
    %vm2133 = vmor %vm2131, %vm2132
    %v2134 = vsel %vm2133, %v2125, %v2130
    %v2135 = vrsqrt.pop %v2020
    %v2136 = vmul.f32 %v2135, %v2020
    %v2137 = vmul.f32 %v2136, %v2135
    %v2138 = vmul.f32 0.5, %v2137
    %v2139 = vsub.f32 1.5, %v2138
    %v2140 = vmul.f32 %v2135, %v2139
    %vm2141 = vweird.f32 %v2020
    %vm2142 = vweird.f32 %v2135
    %vm2143 = vmor %vm2141, %vm2142
    %v2144 = vsel %vm2143, %v2135, %v2140
    %v2145 = vrsqrt.pop %v2021
    %v2146 = vmul.f32 %v2145, %v2021
    %v2147 = vmul.f32 %v2146, %v2145
    %v2148 = vmul.f32 0.5, %v2147
    %v2149 = vsub.f32 1.5, %v2148
    %v2150 = vmul.f32 %v2145, %v2149
    %vm2151 = vweird.f32 %v2021
    %vm2152 = vweird.f32 %v2145
    %vm2153 = vmor %vm2151, %vm2152
    %v2154 = vsel %vm2153, %v2145, %v2150
    %v2155 = vrsqrt.pop %v2022
    %v2156 = vmul.f32 %v2155, %v2022
    %v2157 = vmul.f32 %v2156, %v2155
    %v2158 = vmul.f32 0.5, %v2157
    %v2159 = vsub.f32 1.5, %v2158
    %v2160 = vmul.f32 %v2155, %v2159
    %vm2161 = vweird.f32 %v2022
    %vm2162 = vweird.f32 %v2155
    %vm2163 = vmor %vm2161, %vm2162
    %v2164 = vsel %vm2163, %v2155, %v2160
    %v2165 = vrsqrt.pop %v2023
    %v2166 = vmul.f32 %v2165, %v2023
    %v2167 = vmul.f32 %v2166, %v2165
    %v2168 = vmul.f32 0.5, %v2167
    %v2169 = vsub.f32 1.5, %v2168
    %v2170 = vmul.f32 %v2165, %v2169
    %vm2171 = vweird.f32 %v2023
    %vm2172 = vweird.f32 %v2165
    %vm2173 = vmor %vm2171, %vm2172
    %v2174 = vsel %vm2173, %v2165, %v2170
    %v2175 = vrsqrt.pop %v2024
    %v2176 = vmul.f32 %v2175, %v2024
    %v2177 = vmul.f32 %v2176, %v2175
    %v2178 = vmul.f32 0.5, %v2177
    %v2179 = vsub.f32 1.5, %v2178
    %v2180 = vmul.f32 %v2175, %v2179
    %vm2181 = vweird.f32 %v2024
    %vm2182 = vweird.f32 %v2175
    %vm2183 = vmor %vm2181, %vm2182
    %v2184 = vsel %vm2183, %v2175, %v2180
    %v2185 = vmul.f32 %v1897, %v2034
    %v2186 = vmul.f32 %v1898, %v2034
    %v2187 = vmul.f32 %v1899, %v2044
    %v2188 = vmul.f32 %v1900, %v2044
    %v2189 = vmul.f32 %v1901, %v2054
    %v2190 = vmul.f32 %v1902, %v2054
    %v2191 = vmul.f32 %v1903, %v2064
    %v2192 = vmul.f32 %v1904, %v2064
    %v2193 = vmul.f32 %v1905, %v2074
    %v2194 = vmul.f32 %v1906, %v2074
    %v2195 = vmul.f32 %v1907, %v2084
    %v2196 = vmul.f32 %v1908, %v2084
    %v2197 = vmul.f32 %v1909, %v2094
    %v2198 = vmul.f32 %v1910, %v2094
    %v2199 = vmul.f32 %v1911, %v2104
    %v2200 = vmul.f32 %v1912, %v2104
    %v2201 = vmul.f32 %v1913, %v2114
    %v2202 = vmul.f32 %v1914, %v2114
    %v2203 = vmul.f32 %v1915, %v2124
    %v2204 = vmul.f32 %v1916, %v2124
    %v2205 = vmul.f32 %v1917, %v2134
    %v2206 = vmul.f32 %v1918, %v2134
    %v2207 = vmul.f32 %v1919, %v2144
    %v2208 = vmul.f32 %v1920, %v2144
    %v2209 = vmul.f32 %v1921, %v2154
    %v2210 = vmul.f32 %v1922, %v2154
    %v2211 = vmul.f32 %v1923, %v2164
    %v2212 = vmul.f32 %v1924, %v2164
    %v2213 = vmul.f32 %v1925, %v2174
    %v2214 = vmul.f32 %v1926, %v2174
    %v2215 = vmul.f32 %v1927, %v2184
    %v2216 = vmul.f32 %v1928, %v2184
    %2217 = vxpose.xlu0.b32.start [1/16] %v2185, 128
    %2218 = vxpose.xlu0.b32.cont [2/16] %v2187, 128
    %2219 = vxpose.xlu0.b32.cont [3/16] %v2189, 128
    %2220 = vxpose.xlu0.b32.cont [4/16] %v2191, 128
    %2221 = vxpose.xlu0.b32.cont [5/16] %v2193, 128
    %2222 = vxpose.xlu0.b32.cont [6/16] %v2195, 128
    %2223 = vxpose.xlu0.b32.cont [7/16] %v2197, 128
    %2224 = vxpose.xlu0.b32.cont [8/16] %v2199, 128
    %2225 = vxpose.xlu0.b32.cont [9/16] %v2201, 128
    %2226 = vxpose.xlu0.b32.cont [10/16] %v2203, 128
    %2227 = vxpose.xlu0.b32.cont [11/16] %v2205, 128
    %2228 = vxpose.xlu0.b32.cont [12/16] %v2207, 128
    %2229 = vxpose.xlu0.b32.cont [13/16] %v2209, 128
    %2230 = vxpose.xlu0.b32.cont [14/16] %v2211, 128
    %2231 = vxpose.xlu0.b32.cont [15/16] %v2213, 128
    %2232 = vxpose.xlu0.b32.end [16/16] %v2215, 128
    %v2233 = vpop.trf.xlu0
    %v2234 = vpop.trf.xlu0
    %v2235 = vpop.trf.xlu0
    %v2236 = vpop.trf.xlu0
    %v2237 = vpop.trf.xlu0
    %v2238 = vpop.trf.xlu0
    %v2239 = vpop.trf.xlu0
    %v2240 = vpop.trf.xlu0
    %v2241 = vpop.trf.xlu0
    %v2242 = vpop.trf.xlu0
    %v2243 = vpop.trf.xlu0
    %v2244 = vpop.trf.xlu0
    %v2245 = vpop.trf.xlu0
    %v2246 = vpop.trf.xlu0
    %v2247 = vpop.trf.xlu0
    %v2248 = vpop.trf.xlu0
    %2249 = vxpose.xlu0.b32.start [1/16] %v2186, 128
    %2250 = vxpose.xlu0.b32.cont [2/16] %v2188, 128
    %2251 = vxpose.xlu0.b32.cont [3/16] %v2190, 128
    %2252 = vxpose.xlu0.b32.cont [4/16] %v2192, 128
    %2253 = vxpose.xlu0.b32.cont [5/16] %v2194, 128
    %2254 = vxpose.xlu0.b32.cont [6/16] %v2196, 128
    %2255 = vxpose.xlu0.b32.cont [7/16] %v2198, 128
    %2256 = vxpose.xlu0.b32.cont [8/16] %v2200, 128
    %2257 = vxpose.xlu0.b32.cont [9/16] %v2202, 128
    %2258 = vxpose.xlu0.b32.cont [10/16] %v2204, 128
    %2259 = vxpose.xlu0.b32.cont [11/16] %v2206, 128
    %2260 = vxpose.xlu0.b32.cont [12/16] %v2208, 128
    %2261 = vxpose.xlu0.b32.cont [13/16] %v2210, 128
    %2262 = vxpose.xlu0.b32.cont [14/16] %v2212, 128
    %2263 = vxpose.xlu0.b32.cont [15/16] %v2214, 128
    %2264 = vxpose.xlu0.b32.end [16/16] %v2216, 128
    %v2265 = vpop.trf.xlu0
    %v2266 = vpop.trf.xlu0
    %v2267 = vpop.trf.xlu0
    %v2268 = vpop.trf.xlu0
    %v2269 = vpop.trf.xlu0
    %v2270 = vpop.trf.xlu0
    %v2271 = vpop.trf.xlu0
    %v2272 = vpop.trf.xlu0
    %v2273 = vpop.trf.xlu0
    %v2274 = vpop.trf.xlu0
    %v2275 = vpop.trf.xlu0
    %v2276 = vpop.trf.xlu0
    %v2277 = vpop.trf.xlu0
    %v2278 = vpop.trf.xlu0
    %v2279 = vpop.trf.xlu0
    %v2280 = vpop.trf.xlu0
    %2281 = vst [vmem:[%s6] sm:$0xff] %v2233
    %2282 = vst [vmem:[%s6 + $0x8] sm:$0xff] %v2234
    %2283 = vst [vmem:[%s6 + $0x10] sm:$0xff] %v2235
    %2284 = vst [vmem:[%s6 + $0x18] sm:$0xff] %v2236
    %2285 = vst [vmem:[%s6 + $0x20] sm:$0xff] %v2237
    %2286 = vst [vmem:[%s6 + $0x28] sm:$0xff] %v2238
    %2287 = vst [vmem:[%s6 + $0x30] sm:$0xff] %v2239
    %2288 = vst [vmem:[%s6 + $0x38] sm:$0xff] %v2240
    %2289 = vst [vmem:[%s6 + $0x40] sm:$0xff] %v2241
    %2290 = vst [vmem:[%s6 + $0x48] sm:$0xff] %v2242
    %2291 = vst [vmem:[%s6 + $0x50] sm:$0xff] %v2243
    %2292 = vst [vmem:[%s6 + $0x58] sm:$0xff] %v2244
    %2293 = vst [vmem:[%s6 + $0x60] sm:$0xff] %v2245
    %2294 = vst [vmem:[%s6 + $0x68] sm:$0xff] %v2246
    %2295 = vst [vmem:[%s6 + $0x70] sm:$0xff] %v2247
    %2296 = vst [vmem:[%s6 + $0x78] sm:$0xff] %v2248
    %2297 = vst [vmem:[%s6 + $0x80] sm:$0xff] %v2265
    %2298 = vst [vmem:[%s6 + $0x88] sm:$0xff] %v2266
    %2299 = vst [vmem:[%s6 + $0x90] sm:$0xff] %v2267
    %2300 = vst [vmem:[%s6 + $0x98] sm:$0xff] %v2268
    %2301 = vst [vmem:[%s6 + $0xa0] sm:$0xff] %v2269
    %2302 = vst [vmem:[%s6 + $0xa8] sm:$0xff] %v2270
    %2303 = vst [vmem:[%s6 + $0xb0] sm:$0xff] %v2271
    %2304 = vst [vmem:[%s6 + $0xb8] sm:$0xff] %v2272
    %2305 = vst [vmem:[%s6 + $0xc0] sm:$0xff] %v2273
    %2306 = vst [vmem:[%s6 + $0xc8] sm:$0xff] %v2274
    %2307 = vst [vmem:[%s6 + $0xd0] sm:$0xff] %v2275
    %2308 = vst [vmem:[%s6 + $0xd8] sm:$0xff] %v2276
    %2309 = vst [vmem:[%s6 + $0xe0] sm:$0xff] %v2277
    %2310 = vst [vmem:[%s6 + $0xe8] sm:$0xff] %v2278
    %2311 = vst [vmem:[%s6 + $0xf0] sm:$0xff] %v2279
    %2312 = vst [vmem:[%s6 + $0xf8] sm:$0xff] %v2280
    // Predicated region
    $region30: #{_lambda_.2} parent=1 // pred_check
      _
    $region31: #{_lambda_.2} parent=1 // pred_check_branch
      %2314 = sbr.rel (0) target = $region33
    $region32: #{_lambda_.2} parent=1 // pred_region
      _
    $region33: #{_lambda_.2} parent=1 // pred_fallthru
      _
    // Predicated region
    $region34: #{_lambda_.2} parent=1 // pred_check
      _
    $region35: #{_lambda_.2} parent=1 // pred_check_branch
      %2316 = sbr.rel (0) target = $region37
    $region36: #{_lambda_.2} parent=1 // pred_region
      _
    $region37: #{_lambda_.2} parent=1 // pred_fallthru
      _
    // Predicated region
    $region38: #{_lambda_.2} parent=1 // pred_check
      _
    $region39: #{_lambda_.2} parent=1 // pred_check_branch
      %2318 = sbr.rel (0) target = $region41
    $region40: #{_lambda_.2} parent=1 // pred_region
      _
    $region41: #{_lambda_.2} parent=1 // pred_fallthru
      _
    // Predicated region
    $region42: #{_lambda_.2} parent=1 // pred_check
      _
    $region43: #{_lambda_.2} parent=1 // pred_check_branch
      %2320 = sbr.rel (0) target = $region45
    $region44: #{_lambda_.2} parent=1 // pred_region
      _
    $region45: #{_lambda_.2} parent=1 // pred_fallthru
      _
    // Predicated region
    $region46: #{_lambda_.2} parent=1 // pred_check
      _
    $region47: #{_lambda_.2} parent=1 // pred_check_branch
      %2322 = sbr.rel (0) target = $region49
    $region48: #{_lambda_.2} parent=1 // pred_region
      _
    $region49: #{_lambda_.2} parent=1 // pred_fallthru
      _
    // Predicated region
    $region50: #{_lambda_.2} parent=1 // pred_check
      _
    $region51: #{_lambda_.2} parent=1 // pred_check_branch
      %2324 = sbr.rel (0) target = $region53
    $region52: #{_lambda_.2} parent=1 // pred_region
      _
    $region53: #{_lambda_.2} parent=1 // pred_fallthru
      _
    %2325 = vsyncpa [#allocation3], 1
    %2326 = vsyncpa [#allocation5], 1

</llo_original>
